<compile_context>
chip_gen: v6e
topology: v6e:2x2x1
jax: 0.10.0
libtpu: 0.0.40
codegen_flags: <defaults>
</compile_context>

<pallas_src>
import jax
import jax.numpy as jnp
from jax import lax
from jax.experimental import pallas as pl
from jax.experimental.pallas import tpu as pltpu

N_EMBD = 384
HIDDEN = 4 * N_EMBD  # 1536
DROPOUT = 0.2        # unused at eval time


def _round_up(x, m):
    return (x + m - 1) // m * m


def _choose_tile(M, tm_target):
    """Pick the effective row tile.

    - Small M (<=256): one tile, rounded up to the 8-row sublane multiple, so
      decode-sized calls don't burn 16x padded FLOPs.
    - Large M: multiple-of-256 tile, capped by tm_target, and capped so the
      grid has >=2 steps (lets the parallel row axis use both v7x TensorCores).
    """
    if M <= 256:
        return _round_up(M, 8)
    tm_target = max(256, _round_up(tm_target, 256))
    tm = min(tm_target, _round_up(M, 256))
    half = max(256, _round_up(pl.cdiv(M, 2), 256))
    return min(tm, half)


def _make_ffn_kernel(tm, slab):
    """Fused FFN kernel over a (tm, C) row tile, processed in `slab`-row chunks."""
    n_slabs = tm // slab

    def _slab_compute(x_slab_f32, w1, b1, w2, b2):
        x_bf = x_slab_f32.astype(jnp.bfloat16)              # in-kernel cast (VPU)
        h = jnp.dot(x_bf, w1, preferred_element_type=jnp.float32)
        h = jnp.maximum(h + b1, 0.0).astype(jnp.bfloat16)    # bias + ReLU epilogue
        y = jnp.dot(h, w2, preferred_element_type=jnp.float32)
        return y + b2

    def kernel(x_ref, w1_ref, b1_ref, w2_ref, b2_ref, o_ref):
        # x_ref: (tm, C) f32   w1_ref: (C, 4C) bf16   b1_ref: (1, 4C) f32
        # w2_ref: (4C, C) bf16 b2_ref: (1, C)  f32    o_ref: (tm, C)  f32
        if n_slabs == 1:
            y = _slab_compute(x_ref[...], w1_ref[...], b1_ref[...],
                              w2_ref[...], b2_ref[...])
            o_ref[...] = y.astype(o_ref.dtype)
        else:
            def body(s, carry):
                i = pl.multiple_of(s * slab, slab)
                y = _slab_compute(x_ref[pl.ds(i, slab), :], w1_ref[...],
                                  b1_ref[...], w2_ref[...], b2_ref[...])
                o_ref[pl.ds(i, slab), :] = y.astype(o_ref.dtype)
                return carry
            # Unrolled so the LLO scheduler can overlap matmul1 of slab s+1
            # with matmul2 + VPU epilogue of slab s.
            lax.fori_loop(0, n_slabs, body, 0, unroll=True)

    return kernel


def prepare_params(w1, b1, w2, b2):
    """One-time dtype conversion to the kernel's preferred formats."""
    return (w1.astype(jnp.bfloat16), b1.astype(jnp.float32),
            w2.astype(jnp.bfloat16), b2.astype(jnp.float32))


def feed_forward(x, w1, b1, w2, b2, *, tm=512):
    """x: (B, T, C) float32.  Returns (B, T, C) float32 (eval-mode FFN)."""
    B, T, C = x.shape
    assert C == w1.shape[0]
    H = w1.shape[1]
    M = B * T

    tm_eff = _choose_tile(M, tm)
    n_tiles = pl.cdiv(M, tm_eff)
    Mp = n_tiles * tm_eff

    x2d = x.reshape(M, C).astype(jnp.float32)
    if Mp != M:
        # Rows are independent; padded rows are sliced off below.
        x2d = jnp.pad(x2d, ((0, Mp - M), (0, 0)))

    # Weights ideally arrive already bf16 (via prepare_params); only cast if
    # handed f32, so repeated calls pay no per-call HBM cast pass.
    w1_bf = w1 if w1.dtype == jnp.bfloat16 else w1.astype(jnp.bfloat16)
    w2_bf = w2 if w2.dtype == jnp.bfloat16 else w2.astype(jnp.bfloat16)
    b1_2d = b1.reshape(1, H).astype(jnp.float32)
    b2_2d = b2.reshape(1, C).astype(jnp.float32)

    slab = 256 if (tm_eff > 256 and tm_eff % 256 == 0) else tm_eff
    kernel = _make_ffn_kernel(tm_eff, slab)

    out = pl.pallas_call(
        kernel,
        out_shape=jax.ShapeDtypeStruct((Mp, C), jnp.float32),
        grid_spec=pltpu.PrefetchScalarGridSpec(
            num_scalar_prefetch=0,
            grid=(n_tiles,),
            in_specs=[
                pl.BlockSpec((tm_eff, C), lambda i: (i, 0)),  # x rows (pipelined)
                pl.BlockSpec((C, H), lambda i: (0, 0)),       # W1 (resident)
                pl.BlockSpec((1, H), lambda i: (0, 0)),       # b1 (resident)
                pl.BlockSpec((H, C), lambda i: (0, 0)),       # W2 (resident)
                pl.BlockSpec((1, C), lambda i: (0, 0)),       # b2 (resident)
            ],
            out_specs=pl.BlockSpec((tm_eff, C), lambda i: (i, 0)),
        ),
        compiler_params=pltpu.CompilerParams(
            dimension_semantics=("parallel",),   # row grid shards across v7x TCs
            vmem_limit_bytes=24 << 20,           # working set ~10-13 MiB
        ),
    )(x2d, w1_bf, b1_2d, w2_bf, b2_2d)

    if Mp != M:
        out = out[:M]
    return out.reshape(B, T, C)


def init_params(key, n_embd=N_EMBD):
    """Deterministic PyTorch-style (uniform +-1/sqrt(fan_in)) init, in f32."""
    k1, k2, k3, k4 = jax.random.split(key, 4)
    hidden = 4 * n_embd
    bound1 = 1.0 / jnp.sqrt(n_embd)
    bound2 = 1.0 / jnp.sqrt(hidden)
    # Stored transposed relative to PyTorch: (in_features, out_features).
    w1 = jax.random.uniform(k1, (n_embd, hidden), jnp.float32, -bound1, bound1)
    b1 = jax.random.uniform(k2, (hidden,), jnp.float32, -bound1, bound1)
    w2 = jax.random.uniform(k3, (hidden, n_embd), jnp.float32, -bound2, bound2)
    b2 = jax.random.uniform(k4, (n_embd,), jnp.float32, -bound2, bound2)
    return w1, b1, w2, b2


def _bf16_reference(x2d, w1, b1, w2, b2):
    """Replicates the kernel's bf16-input / f32-accumulate numerics in JAX."""
    f32 = jnp.float32
    xb = x2d.astype(jnp.bfloat16).astype(f32)
    w1b = w1.astype(jnp.bfloat16).astype(f32)
    w2b = w2.astype(jnp.bfloat16).astype(f32)
    h = jnp.maximum(xb @ w1b + b1, 0.0)
    h = h.astype(jnp.bfloat16).astype(f32)
    return h @ w2b + b2


if __name__ == "__main__":
    key = jax.random.PRNGKey(0)
    k_x, k_p = jax.random.split(key)

    B, T = 2, 8
    x = jax.random.normal(k_x, (B, T, N_EMBD), jnp.float32)
    w1, b1, w2, b2 = init_params(k_p)

    # One-time weight conversion (kept out of the per-call path).
    w1_p, b1_p, w2_p, b2_p = prepare_params(w1, b1, w2, b2)

    y = feed_forward(x, w1_p, b1_p, w2_p, b2_p)
    jax.block_until_ready(y)
    assert y.shape == (B, T, N_EMBD)

    x2d = x.reshape(-1, N_EMBD)

    # Tight check against a reference that mirrors the kernel's bf16 numerics.
    ref_bf16 = _bf16_reference(x2d, w1, b1, w2, b2).reshape(B, T, N_EMBD)
    assert jnp.allclose(y, ref_bf16, atol=1e-2, rtol=1e-2), \
        float(jnp.max(jnp.abs(y - ref_bf16)))

    # Loose sanity check against the plain f32 eval-mode FeedForward.
    ref_f32 = (jnp.maximum(x2d @ w1 + b1, 0.0) @ w2 + b2).reshape(B, T, N_EMBD)
    assert jnp.allclose(y, ref_f32, atol=1e-1, rtol=1e-1), \
        float(jnp.max(jnp.abs(y - ref_f32)))

    print("KERNEL_OK")
</pallas_src>

<mosaic_0001>
module attributes {stable_mosaic.version = 11 : i64} {
  func.func @kernel(%arg0: i32, %arg1: memref<16x384xf32, #tpu.memory_space<vmem>>, %arg2: memref<384x1536xbf16, #tpu.memory_space<vmem>>, %arg3: memref<1x1536xf32, #tpu.memory_space<vmem>>, %arg4: memref<1536x384xbf16, #tpu.memory_space<vmem>>, %arg5: memref<1x384xf32, #tpu.memory_space<vmem>>, %arg6: memref<16x384xf32, #tpu.memory_space<vmem>>) attributes {dimension_semantics = [#tpu.dimension_semantics<parallel>], iteration_bounds = array<i64: 1>, scalar_prefetch = 0 : i64, scratch_operands = 0 : i64, tpu.core_type = #tpu.core_type<tc>, window_params = [{transform_indices = @transform_0, window_bounds = array<i64: 16, 384>}, {pipeline_mode = #tpu.pipeline_mode<synchronous>, transform_indices = @transform_1, window_bounds = array<i64: 384, 1536>}, {pipeline_mode = #tpu.pipeline_mode<synchronous>, transform_indices = @transform_2, window_bounds = array<i64: 1, 1536>}, {pipeline_mode = #tpu.pipeline_mode<synchronous>, transform_indices = @transform_3, window_bounds = array<i64: 1536, 384>}, {pipeline_mode = #tpu.pipeline_mode<synchronous>, transform_indices = @transform_4, window_bounds = array<i64: 1, 384>}, {transform_indices = @transform_5, window_bounds = array<i64: 16, 384>}]} {
    %c0 = arith.constant 0 : index
    %c0_0 = arith.constant 0 : index
    %0 = vector.load %arg1[%c0, %c0_0] : memref<16x384xf32, #tpu.memory_space<vmem>>, vector<16x384xf32>
    %c0_1 = arith.constant 0 : index
    %c0_2 = arith.constant 0 : index
    %1 = vector.load %arg2[%c0_1, %c0_2] : memref<384x1536xbf16, #tpu.memory_space<vmem>>, vector<384x1536xbf16>
    %c0_3 = arith.constant 0 : index
    %c0_4 = arith.constant 0 : index
    %2 = vector.load %arg3[%c0_3, %c0_4] : memref<1x1536xf32, #tpu.memory_space<vmem>>, vector<1x1536xf32>
    %c0_5 = arith.constant 0 : index
    %c0_6 = arith.constant 0 : index
    %3 = vector.load %arg4[%c0_5, %c0_6] : memref<1536x384xbf16, #tpu.memory_space<vmem>>, vector<1536x384xbf16>
    %c0_7 = arith.constant 0 : index
    %c0_8 = arith.constant 0 : index
    %4 = vector.load %arg5[%c0_7, %c0_8] : memref<1x384xf32, #tpu.memory_space<vmem>>, vector<1x384xf32>
    %5 = arith.truncf %0 : vector<16x384xf32> to vector<16x384xbf16>
    %cst = arith.constant dense<0.000000e+00> : vector<16x1536xf32>
    %6 = tpu.matmul %5, %1, %cst {dimension_numbers = #tpu.dot_dimension_numbers<[1], [0], [0], [1], [0, 0, 1, 1], [], []>} : vector<16x384xbf16>, vector<384x1536xbf16>, vector<16x1536xf32> -> vector<16x1536xf32>
    %7 = vector.broadcast %2 : vector<1x1536xf32> to vector<16x1536xf32>
    %8 = arith.addf %6, %7 : vector<16x1536xf32>
    %cst_9 = arith.constant 0.000000e+00 : f32
    %9 = vector.broadcast %cst_9 : f32 to vector<16x1536xf32>
    %10 = arith.maximumf %8, %9 : vector<16x1536xf32>
    %11 = arith.truncf %10 : vector<16x1536xf32> to vector<16x1536xbf16>
    %cst_10 = arith.constant dense<0.000000e+00> : vector<16x384xf32>
    %12 = tpu.matmul %11, %3, %cst_10 {dimension_numbers = #tpu.dot_dimension_numbers<[1], [0], [0], [1], [0, 0, 1, 1], [], []>} : vector<16x1536xbf16>, vector<1536x384xbf16>, vector<16x384xf32> -> vector<16x384xf32>
    %13 = vector.broadcast %4 : vector<1x384xf32> to vector<16x384xf32>
    %14 = arith.addf %12, %13 : vector<16x384xf32>
    %c0_11 = arith.constant 0 : index
    %c0_12 = arith.constant 0 : index
    %15 = vector.load %arg6[%c0_11, %c0_12] : memref<16x384xf32, #tpu.memory_space<vmem>>, vector<16x384xf32>
    tpu.vector_store %arg6[%c0_11, %c0_12], %14 {strides = array<i32>} : memref<16x384xf32, #tpu.memory_space<vmem>>, vector<16x384xf32>,
    return
  }
  func.func @transform_0(%arg0: i32) -> (i32, i32) {
    %c0_i32 = arith.constant 0 : i32
    %c0_i32_0 = arith.constant 0 : i32
    return %arg0, %c0_i32 : i32, i32
  }
  func.func @transform_1(%arg0: i32) -> (i32, i32) {
    %c0_i32 = arith.constant 0 : i32
    %c0_i32_0 = arith.constant 0 : i32
    %c0_i32_1 = arith.constant 0 : i32
    return %c0_i32, %c0_i32_0 : i32, i32
  }
  func.func @transform_2(%arg0: i32) -> (i32, i32) {
    %c0_i32 = arith.constant 0 : i32
    %c0_i32_0 = arith.constant 0 : i32
    %c0_i32_1 = arith.constant 0 : i32
    return %c0_i32, %c0_i32_0 : i32, i32
  }
  func.func @transform_3(%arg0: i32) -> (i32, i32) {
    %c0_i32 = arith.constant 0 : i32
    %c0_i32_0 = arith.constant 0 : i32
    %c0_i32_1 = arith.constant 0 : i32
    return %c0_i32, %c0_i32_0 : i32, i32
  }
  func.func @transform_4(%arg0: i32) -> (i32, i32) {
    %c0_i32 = arith.constant 0 : i32
    %c0_i32_0 = arith.constant 0 : i32
    %c0_i32_1 = arith.constant 0 : i32
    return %c0_i32, %c0_i32_0 : i32, i32
  }
  func.func @transform_5(%arg0: i32) -> (i32, i32) {
    %c0_i32 = arith.constant 0 : i32
    %c0_i32_0 = arith.constant 0 : i32
    return %arg0, %c0_i32 : i32, i32
  }
}

</mosaic_0001>

<llo_original>
// kernel: tpu_custom_call.1
$region0: #{tpu_custom_call.1}
  #allocation0 [shape = 'u32[]', space=smem, size = 0x4, offset = 0x4, fixed_abs, tag = 'smem constant byte address 0x4 - core index']
  #allocation1 [shape = 'u32[144,128]{1,0:T(1,128)}', space=vmem, size = 0x12000, scoped, tag = 'internal scratch']
  %s0 = inlined_call_operand.hbm [shape: f32[16,384], index: 0, kind: input, shape index: {}]
  %s1 = inlined_call_operand.hbm [shape: bf16[384,1536], index: 1, kind: input, shape index: {}]
  %s2 = inlined_call_operand.hbm [shape: f32[1,1536], index: 2, kind: input, shape index: {}]
  %s3 = inlined_call_operand.hbm [shape: bf16[1536,384], index: 3, kind: input, shape index: {}]
  %s4 = inlined_call_operand.hbm [shape: f32[1,384], index: 4, kind: input, shape index: {}]
  %s5 = inlined_call_operand.hbm [shape: f32[16,384], index: 5, kind: output, shape index: {}]
  %s6 = sld [smem:[#allocation0]]
  $region50: #{tpu_custom_call.1} parent=0
    _
  %s8 = ssub.s32 1, %s6
  %s9 = scalar_select 0, %s8, %s6
  $region1: #{tpu_custom_call.1} parent=0
    #allocation2 [shape = 'u8[24576]{0}', space=vmem, size = 0x6000, scoped, tag = 'input window, operand 0, single buffered']
    #allocation3 [shape = 's32[1]{0}', space=sflag, size = 0x4, scoped, tag = 'scoped memory for tpu_custom_call.1']
    #allocation4 [shape = 's32[1]{0}', space=sflag, size = 0x4, scoped, tag = 'scoped memory for tpu_custom_call.1']
    #allocation5 [shape = 'u8[1179648]{0}', space=vmem, size = 0x120000, scoped, tag = 'input window, operand 1, single buffered']
    #allocation6 [shape = 's32[1]{0}', space=sflag, size = 0x4, scoped, tag = 'scoped memory for tpu_custom_call.1']
    #allocation7 [shape = 'u8[6144]{0}', space=vmem, size = 0x1800, scoped, tag = 'input window, operand 2, single buffered']
    #allocation8 [shape = 'u8[1179648]{0}', space=vmem, size = 0x120000, scoped, tag = 'input window, operand 3, single buffered']
    #allocation9 [shape = 's32[1]{0}', space=sflag, size = 0x4, scoped, tag = 'scoped memory for tpu_custom_call.1']
    #allocation10 [shape = 'u8[1536]{0}', space=vmem, size = 0x800, scoped, tag = 'input window, operand 4, single buffered']
    #allocation11 [shape = 'u8[24576]{0}', space=vmem, size = 0x6000, scoped, tag = 'output window, operand 0, single buffered']
    %10 = vsyncpa [#allocation3], 0
    %11 = vsyncpa [#allocation6], 0
    %12 = vsyncpa [#allocation9], 0
    %13 = vsyncpa [#allocation4], 0
    // Predicated region
    $region2: #{tpu_custom_call.1} parent=1 // pred_check
      _
    $region3: #{tpu_custom_call.1} parent=1 // pred_check_branch
      %15 = sbr.rel (0) target = $region5
    $region4: #{tpu_custom_call.1} parent=1 // pred_region
      %s17 = ssub.s32 768, 768
      %18 = vsyncadd [#allocation3], %s17
      %s19 = sshll.u32 [#allocation2], 4
      %s20 = int_to_ptr.vmem [resolvable:$true] %s19
      %25 = dma.hbm_to_vmem [thread:$0]  %s0, 768, %s20, [#allocation3], 384, 384, 24
    $region5: #{tpu_custom_call.1} parent=1 // pred_fallthru
      _
    // Predicated region
    $region6: #{tpu_custom_call.1} parent=1 // pred_check
      _
    $region7: #{tpu_custom_call.1} parent=1 // pred_check_branch
      %27 = sbr.rel (0) target = $region9
    $region8: #{tpu_custom_call.1} parent=1 // pred_region
      %s29 = ssub.s32 36864, 36864
      %30 = vsyncadd [#allocation6], %s29
      %s31 = sshll.u32 [#allocation5], 4
      %s32 = int_to_ptr.vmem [resolvable:$true] %s31
      %37 = dma.hbm_to_vmem [thread:$0]  %s1, 36864, %s32, [#allocation6], 768, 768, 48
    $region9: #{tpu_custom_call.1} parent=1 // pred_fallthru
      _
    // Predicated region
    $region10: #{tpu_custom_call.1} parent=1 // pred_check
      _
    $region11: #{tpu_custom_call.1} parent=1 // pred_check_branch
      %39 = sbr.rel (0) target = $region13
    $region12: #{tpu_custom_call.1} parent=1 // pred_region
      %s41 = ssub.s32 192, 192
      %42 = vsyncadd [#allocation6], %s41
      %s44 = sshll.u32 [#allocation7], 4
      %s45 = int_to_ptr.vmem [resolvable:$true] %s44
      %47 = dma.hbm_to_vmem [thread:$0]  %s2, 192, %s45, [#allocation6]
    $region13: #{tpu_custom_call.1} parent=1 // pred_fallthru
      _
    // Predicated region
    $region14: #{tpu_custom_call.1} parent=1 // pred_check
      _
    $region15: #{tpu_custom_call.1} parent=1 // pred_check_branch
      %49 = sbr.rel (0) target = $region17
    $region16: #{tpu_custom_call.1} parent=1 // pred_region
      %s51 = ssub.s32 36864, 36864
      %52 = vsyncadd [#allocation9], %s51
      %s53 = sshll.u32 [#allocation8], 4
      %s54 = int_to_ptr.vmem [resolvable:$true] %s53
      %59 = dma.hbm_to_vmem [thread:$0]  %s3, 36864, %s54, [#allocation9], 192, 192, 12
    $region17: #{tpu_custom_call.1} parent=1 // pred_fallthru
      _
    // Predicated region
    $region18: #{tpu_custom_call.1} parent=1 // pred_check
      _
    $region19: #{tpu_custom_call.1} parent=1 // pred_check_branch
      %61 = sbr.rel (0) target = $region21
    $region20: #{tpu_custom_call.1} parent=1 // pred_region
      %s63 = ssub.s32 48, 48
      %64 = vsyncadd [#allocation9], %s63
      %s66 = sshll.u32 [#allocation10], 4
      %s67 = int_to_ptr.vmem [resolvable:$true] %s66
      %69 = dma.hbm_to_vmem [thread:$0]  %s4, 48, %s67, [#allocation9]
    $region21: #{tpu_custom_call.1} parent=1 // pred_fallthru
      _
    // Predicated region
    $region22: #{tpu_custom_call.1} parent=1 // pred_check
      _
    $region23: #{tpu_custom_call.1} parent=1 // pred_check_branch
      %71 = sbr.rel (0) target = $region25
    $region24: #{tpu_custom_call.1} parent=1 // pred_region
      %72 = dma.done [#allocation3], 768
    $region25: #{tpu_custom_call.1} parent=1 // pred_fallthru
      _
    // Predicated region
    $region26: #{tpu_custom_call.1} parent=1 // pred_check
      _
    $region27: #{tpu_custom_call.1} parent=1 // pred_check_branch
      %74 = sbr.rel (0) target = $region29
    $region28: #{tpu_custom_call.1} parent=1 // pred_region
      %75 = dma.done [#allocation6], 36864
    $region29: #{tpu_custom_call.1} parent=1 // pred_fallthru
      _
    // Predicated region
    $region30: #{tpu_custom_call.1} parent=1 // pred_check
      _
    $region31: #{tpu_custom_call.1} parent=1 // pred_check_branch
      %77 = sbr.rel (0) target = $region33
    $region32: #{tpu_custom_call.1} parent=1 // pred_region
      %78 = dma.done [#allocation6], 192
    $region33: #{tpu_custom_call.1} parent=1 // pred_fallthru
      _
    // Predicated region
    $region34: #{tpu_custom_call.1} parent=1 // pred_check
      _
    $region35: #{tpu_custom_call.1} parent=1 // pred_check_branch
      %80 = sbr.rel (0) target = $region37
    $region36: #{tpu_custom_call.1} parent=1 // pred_region
      %81 = dma.done [#allocation9], 36864
    $region37: #{tpu_custom_call.1} parent=1 // pred_fallthru
      _
    // Predicated region
    $region38: #{tpu_custom_call.1} parent=1 // pred_check
      _
    $region39: #{tpu_custom_call.1} parent=1 // pred_check_branch
      %83 = sbr.rel (0) target = $region41
    $region40: #{tpu_custom_call.1} parent=1 // pred_region
      %84 = dma.done [#allocation9], 48
    $region41: #{tpu_custom_call.1} parent=1 // pred_fallthru
      _
    %v86 = vld [vmem:[#allocation2] sm:$0xff]
    %v87 = vld [vmem:[#allocation2 + $0x8] sm:$0xff]
    %v88 = vld [vmem:[#allocation2 + $0x10] sm:$0xff]
    %v89 = vld [vmem:[#allocation2 + $0x18] sm:$0xff]
    %v90 = vld [vmem:[#allocation2 + $0x20] sm:$0xff]
    %v91 = vld [vmem:[#allocation2 + $0x28] sm:$0xff]
    %v92 = vld [vmem:[#allocation5] sm:$0xff]
    %v93 = vld [vmem:[#allocation5 + $0x8] sm:$0xff]
    %v94 = vld [vmem:[#allocation5 + $0x10] sm:$0xff]
    %v95 = vld [vmem:[#allocation5 + $0x18] sm:$0xff]
    %v96 = vld [vmem:[#allocation5 + $0x20] sm:$0xff]
    %v97 = vld [vmem:[#allocation5 + $0x28] sm:$0xff]
    %v98 = vld [vmem:[#allocation5 + $0x30] sm:$0xff]
    %v99 = vld [vmem:[#allocation5 + $0x38] sm:$0xff]
    %v100 = vld [vmem:[#allocation5 + $0x40] sm:$0xff]
    %v101 = vld [vmem:[#allocation5 + $0x48] sm:$0xff]
    %v102 = vld [vmem:[#allocation5 + $0x50] sm:$0xff]
    %v103 = vld [vmem:[#allocation5 + $0x58] sm:$0xff]
    %v104 = vld [vmem:[#allocation5 + $0x60] sm:$0xff]
    %v105 = vld [vmem:[#allocation5 + $0x68] sm:$0xff]
    %v106 = vld [vmem:[#allocation5 + $0x70] sm:$0xff]
    %v107 = vld [vmem:[#allocation5 + $0x78] sm:$0xff]
    %v108 = vld [vmem:[#allocation5 + $0x80] sm:$0xff]
    %v109 = vld [vmem:[#allocation5 + $0x88] sm:$0xff]
    %v110 = vld [vmem:[#allocation5 + $0x90] sm:$0xff]
    %v111 = vld [vmem:[#allocation5 + $0x98] sm:$0xff]
    %v112 = vld [vmem:[#allocation5 + $0xa0] sm:$0xff]
    %v113 = vld [vmem:[#allocation5 + $0xa8] sm:$0xff]
    %v114 = vld [vmem:[#allocation5 + $0xb0] sm:$0xff]
    %v115 = vld [vmem:[#allocation5 + $0xb8] sm:$0xff]
    %v116 = vld [vmem:[#allocation5 + $0xc0] sm:$0xff]
    %v117 = vld [vmem:[#allocation5 + $0xc8] sm:$0xff]
    %v118 = vld [vmem:[#allocation5 + $0xd0] sm:$0xff]
    %v119 = vld [vmem:[#allocation5 + $0xd8] sm:$0xff]
    %v120 = vld [vmem:[#allocation5 + $0xe0] sm:$0xff]
    %v121 = vld [vmem:[#allocation5 + $0xe8] sm:$0xff]
    %v122 = vld [vmem:[#allocation5 + $0xf0] sm:$0xff]
    %v123 = vld [vmem:[#allocation5 + $0xf8] sm:$0xff]
    %v124 = vld [vmem:[#allocation5 + $0x100] sm:$0xff]
    %v125 = vld [vmem:[#allocation5 + $0x108] sm:$0xff]
    %v126 = vld [vmem:[#allocation5 + $0x110] sm:$0xff]
    %v127 = vld [vmem:[#allocation5 + $0x118] sm:$0xff]
    %v128 = vld [vmem:[#allocation5 + $0x120] sm:$0xff]
    %v129 = vld [vmem:[#allocation5 + $0x128] sm:$0xff]
    %v130 = vld [vmem:[#allocation5 + $0x130] sm:$0xff]
    %v131 = vld [vmem:[#allocation5 + $0x138] sm:$0xff]
    %v132 = vld [vmem:[#allocation5 + $0x140] sm:$0xff]
    %v133 = vld [vmem:[#allocation5 + $0x148] sm:$0xff]
    %v134 = vld [vmem:[#allocation5 + $0x150] sm:$0xff]
    %v135 = vld [vmem:[#allocation5 + $0x158] sm:$0xff]
    %v136 = vld [vmem:[#allocation5 + $0x160] sm:$0xff]
    %v137 = vld [vmem:[#allocation5 + $0x168] sm:$0xff]
    %v138 = vld [vmem:[#allocation5 + $0x170] sm:$0xff]
    %v139 = vld [vmem:[#allocation5 + $0x178] sm:$0xff]
    %v140 = vld [vmem:[#allocation5 + $0x180] sm:$0xff]
    %v141 = vld [vmem:[#allocation5 + $0x188] sm:$0xff]
    %v142 = vld [vmem:[#allocation5 + $0x190] sm:$0xff]
    %v143 = vld [vmem:[#allocation5 + $0x198] sm:$0xff]
    %v144 = vld [vmem:[#allocation5 + $0x1a0] sm:$0xff]
    %v145 = vld [vmem:[#allocation5 + $0x1a8] sm:$0xff]
    %v146 = vld [vmem:[#allocation5 + $0x1b0] sm:$0xff]
    %v147 = vld [vmem:[#allocation5 + $0x1b8] sm:$0xff]
    %v148 = vld [vmem:[#allocation5 + $0x1c0] sm:$0xff]
    %v149 = vld [vmem:[#allocation5 + $0x1c8] sm:$0xff]
    %v150 = vld [vmem:[#allocation5 + $0x1d0] sm:$0xff]
    %v151 = vld [vmem:[#allocation5 + $0x1d8] sm:$0xff]
    %v152 = vld [vmem:[#allocation5 + $0x1e0] sm:$0xff]
    %v153 = vld [vmem:[#allocation5 + $0x1e8] sm:$0xff]
    %v154 = vld [vmem:[#allocation5 + $0x1f0] sm:$0xff]
    %v155 = vld [vmem:[#allocation5 + $0x1f8] sm:$0xff]
    %v156 = vld [vmem:[#allocation5 + $0x200] sm:$0xff]
    %v157 = vld [vmem:[#allocation5 + $0x208] sm:$0xff]
    %v158 = vld [vmem:[#allocation5 + $0x210] sm:$0xff]
    %v159 = vld [vmem:[#allocation5 + $0x218] sm:$0xff]
    %v160 = vld [vmem:[#allocation5 + $0x220] sm:$0xff]
    %v161 = vld [vmem:[#allocation5 + $0x228] sm:$0xff]
    %v162 = vld [vmem:[#allocation5 + $0x230] sm:$0xff]
    %v163 = vld [vmem:[#allocation5 + $0x238] sm:$0xff]
    %v164 = vld [vmem:[#allocation5 + $0x240] sm:$0xff]
    %v165 = vld [vmem:[#allocation5 + $0x248] sm:$0xff]
    %v166 = vld [vmem:[#allocation5 + $0x250] sm:$0xff]
    %v167 = vld [vmem:[#allocation5 + $0x258] sm:$0xff]
    %v168 = vld [vmem:[#allocation5 + $0x260] sm:$0xff]
    %v169 = vld [vmem:[#allocation5 + $0x268] sm:$0xff]
    %v170 = vld [vmem:[#allocation5 + $0x270] sm:$0xff]
    %v171 = vld [vmem:[#allocation5 + $0x278] sm:$0xff]
    %v172 = vld [vmem:[#allocation5 + $0x280] sm:$0xff]
    %v173 = vld [vmem:[#allocation5 + $0x288] sm:$0xff]
    %v174 = vld [vmem:[#allocation5 + $0x290] sm:$0xff]
    %v175 = vld [vmem:[#allocation5 + $0x298] sm:$0xff]
    %v176 = vld [vmem:[#allocation5 + $0x2a0] sm:$0xff]
    %v177 = vld [vmem:[#allocation5 + $0x2a8] sm:$0xff]
    %v178 = vld [vmem:[#allocation5 + $0x2b0] sm:$0xff]
    %v179 = vld [vmem:[#allocation5 + $0x2b8] sm:$0xff]
    %v180 = vld [vmem:[#allocation5 + $0x2c0] sm:$0xff]
    %v181 = vld [vmem:[#allocation5 + $0x2c8] sm:$0xff]
    %v182 = vld [vmem:[#allocation5 + $0x2d0] sm:$0xff]
    %v183 = vld [vmem:[#allocation5 + $0x2d8] sm:$0xff]
    %v184 = vld [vmem:[#allocation5 + $0x2e0] sm:$0xff]
    %v185 = vld [vmem:[#allocation5 + $0x2e8] sm:$0xff]
    %v186 = vld [vmem:[#allocation5 + $0x2f0] sm:$0xff]
    %v187 = vld [vmem:[#allocation5 + $0x2f8] sm:$0xff]
    %v188 = vld [vmem:[#allocation5 + $0x300] sm:$0xff]
    %v189 = vld [vmem:[#allocation5 + $0x308] sm:$0xff]
    %v190 = vld [vmem:[#allocation5 + $0x310] sm:$0xff]
    %v191 = vld [vmem:[#allocation5 + $0x318] sm:$0xff]
    %v192 = vld [vmem:[#allocation5 + $0x320] sm:$0xff]
    %v193 = vld [vmem:[#allocation5 + $0x328] sm:$0xff]
    %v194 = vld [vmem:[#allocation5 + $0x330] sm:$0xff]
    %v195 = vld [vmem:[#allocation5 + $0x338] sm:$0xff]
    %v196 = vld [vmem:[#allocation5 + $0x340] sm:$0xff]
    %v197 = vld [vmem:[#allocation5 + $0x348] sm:$0xff]
    %v198 = vld [vmem:[#allocation5 + $0x350] sm:$0xff]
    %v199 = vld [vmem:[#allocation5 + $0x358] sm:$0xff]
    %v200 = vld [vmem:[#allocation5 + $0x360] sm:$0xff]
    %v201 = vld [vmem:[#allocation5 + $0x368] sm:$0xff]
    %v202 = vld [vmem:[#allocation5 + $0x370] sm:$0xff]
    %v203 = vld [vmem:[#allocation5 + $0x378] sm:$0xff]
    %v204 = vld [vmem:[#allocation5 + $0x380] sm:$0xff]
    %v205 = vld [vmem:[#allocation5 + $0x388] sm:$0xff]
    %v206 = vld [vmem:[#allocation5 + $0x390] sm:$0xff]
    %v207 = vld [vmem:[#allocation5 + $0x398] sm:$0xff]
    %v208 = vld [vmem:[#allocation5 + $0x3a0] sm:$0xff]
    %v209 = vld [vmem:[#allocation5 + $0x3a8] sm:$0xff]
    %v210 = vld [vmem:[#allocation5 + $0x3b0] sm:$0xff]
    %v211 = vld [vmem:[#allocation5 + $0x3b8] sm:$0xff]
    %v212 = vld [vmem:[#allocation5 + $0x3c0] sm:$0xff]
    %v213 = vld [vmem:[#allocation5 + $0x3c8] sm:$0xff]
    %v214 = vld [vmem:[#allocation5 + $0x3d0] sm:$0xff]
    %v215 = vld [vmem:[#allocation5 + $0x3d8] sm:$0xff]
    %v216 = vld [vmem:[#allocation5 + $0x3e0] sm:$0xff]
    %v217 = vld [vmem:[#allocation5 + $0x3e8] sm:$0xff]
    %v218 = vld [vmem:[#allocation5 + $0x3f0] sm:$0xff]
    %v219 = vld [vmem:[#allocation5 + $0x3f8] sm:$0xff]
    %v220 = vld [vmem:[#allocation5 + $0x400] sm:$0xff]
    %v221 = vld [vmem:[#allocation5 + $0x408] sm:$0xff]
    %v222 = vld [vmem:[#allocation5 + $0x410] sm:$0xff]
    %v223 = vld [vmem:[#allocation5 + $0x418] sm:$0xff]
    %v224 = vld [vmem:[#allocation5 + $0x420] sm:$0xff]
    %v225 = vld [vmem:[#allocation5 + $0x428] sm:$0xff]
    %v226 = vld [vmem:[#allocation5 + $0x430] sm:$0xff]
    %v227 = vld [vmem:[#allocation5 + $0x438] sm:$0xff]
    %v228 = vld [vmem:[#allocation5 + $0x440] sm:$0xff]
    %v229 = vld [vmem:[#allocation5 + $0x448] sm:$0xff]
    %v230 = vld [vmem:[#allocation5 + $0x450] sm:$0xff]
    %v231 = vld [vmem:[#allocation5 + $0x458] sm:$0xff]
    %v232 = vld [vmem:[#allocation5 + $0x460] sm:$0xff]
    %v233 = vld [vmem:[#allocation5 + $0x468] sm:$0xff]
    %v234 = vld [vmem:[#allocation5 + $0x470] sm:$0xff]
    %v235 = vld [vmem:[#allocation5 + $0x478] sm:$0xff]
    %v236 = vld [vmem:[#allocation5 + $0x480] sm:$0xff]
    %v237 = vld [vmem:[#allocation5 + $0x488] sm:$0xff]
    %v238 = vld [vmem:[#allocation5 + $0x490] sm:$0xff]
    %v239 = vld [vmem:[#allocation5 + $0x498] sm:$0xff]
    %v240 = vld [vmem:[#allocation5 + $0x4a0] sm:$0xff]
    %v241 = vld [vmem:[#allocation5 + $0x4a8] sm:$0xff]
    %v242 = vld [vmem:[#allocation5 + $0x4b0] sm:$0xff]
    %v243 = vld [vmem:[#allocation5 + $0x4b8] sm:$0xff]
    %v244 = vld [vmem:[#allocation5 + $0x4c0] sm:$0xff]
    %v245 = vld [vmem:[#allocation5 + $0x4c8] sm:$0xff]
    %v246 = vld [vmem:[#allocation5 + $0x4d0] sm:$0xff]
    %v247 = vld [vmem:[#allocation5 + $0x4d8] sm:$0xff]
    %v248 = vld [vmem:[#allocation5 + $0x4e0] sm:$0xff]
    %v249 = vld [vmem:[#allocation5 + $0x4e8] sm:$0xff]
    %v250 = vld [vmem:[#allocation5 + $0x4f0] sm:$0xff]
    %v251 = vld [vmem:[#allocation5 + $0x4f8] sm:$0xff]
    %v252 = vld [vmem:[#allocation5 + $0x500] sm:$0xff]
    %v253 = vld [vmem:[#allocation5 + $0x508] sm:$0xff]
    %v254 = vld [vmem:[#allocation5 + $0x510] sm:$0xff]
    %v255 = vld [vmem:[#allocation5 + $0x518] sm:$0xff]
    %v256 = vld [vmem:[#allocation5 + $0x520] sm:$0xff]
    %v257 = vld [vmem:[#allocation5 + $0x528] sm:$0xff]
    %v258 = vld [vmem:[#allocation5 + $0x530] sm:$0xff]
    %v259 = vld [vmem:[#allocation5 + $0x538] sm:$0xff]
    %v260 = vld [vmem:[#allocation5 + $0x540] sm:$0xff]
    %v261 = vld [vmem:[#allocation5 + $0x548] sm:$0xff]
    %v262 = vld [vmem:[#allocation5 + $0x550] sm:$0xff]
    %v263 = vld [vmem:[#allocation5 + $0x558] sm:$0xff]
    %v264 = vld [vmem:[#allocation5 + $0x560] sm:$0xff]
    %v265 = vld [vmem:[#allocation5 + $0x568] sm:$0xff]
    %v266 = vld [vmem:[#allocation5 + $0x570] sm:$0xff]
    %v267 = vld [vmem:[#allocation5 + $0x578] sm:$0xff]
    %v268 = vld [vmem:[#allocation5 + $0x580] sm:$0xff]
    %v269 = vld [vmem:[#allocation5 + $0x588] sm:$0xff]
    %v270 = vld [vmem:[#allocation5 + $0x590] sm:$0xff]
    %v271 = vld [vmem:[#allocation5 + $0x598] sm:$0xff]
    %v272 = vld [vmem:[#allocation5 + $0x5a0] sm:$0xff]
    %v273 = vld [vmem:[#allocation5 + $0x5a8] sm:$0xff]
    %v274 = vld [vmem:[#allocation5 + $0x5b0] sm:$0xff]
    %v275 = vld [vmem:[#allocation5 + $0x5b8] sm:$0xff]
    %v276 = vld [vmem:[#allocation5 + $0x5c0] sm:$0xff]
    %v277 = vld [vmem:[#allocation5 + $0x5c8] sm:$0xff]
    %v278 = vld [vmem:[#allocation5 + $0x5d0] sm:$0xff]
    %v279 = vld [vmem:[#allocation5 + $0x5d8] sm:$0xff]
    %v280 = vld [vmem:[#allocation5 + $0x5e0] sm:$0xff]
    %v281 = vld [vmem:[#allocation5 + $0x5e8] sm:$0xff]
    %v282 = vld [vmem:[#allocation5 + $0x5f0] sm:$0xff]
    %v283 = vld [vmem:[#allocation5 + $0x5f8] sm:$0xff]
    %v284 = vld [vmem:[#allocation5 + $0x600] sm:$0xff]
    %v285 = vld [vmem:[#allocation5 + $0x608] sm:$0xff]
    %v286 = vld [vmem:[#allocation5 + $0x610] sm:$0xff]
    %v287 = vld [vmem:[#allocation5 + $0x618] sm:$0xff]
    %v288 = vld [vmem:[#allocation5 + $0x620] sm:$0xff]
    %v289 = vld [vmem:[#allocation5 + $0x628] sm:$0xff]
    %v290 = vld [vmem:[#allocation5 + $0x630] sm:$0xff]
    %v291 = vld [vmem:[#allocation5 + $0x638] sm:$0xff]
    %v292 = vld [vmem:[#allocation5 + $0x640] sm:$0xff]
    %v293 = vld [vmem:[#allocation5 + $0x648] sm:$0xff]
    %v294 = vld [vmem:[#allocation5 + $0x650] sm:$0xff]
    %v295 = vld [vmem:[#allocation5 + $0x658] sm:$0xff]
    %v296 = vld [vmem:[#allocation5 + $0x660] sm:$0xff]
    %v297 = vld [vmem:[#allocation5 + $0x668] sm:$0xff]
    %v298 = vld [vmem:[#allocation5 + $0x670] sm:$0xff]
    %v299 = vld [vmem:[#allocation5 + $0x678] sm:$0xff]
    %v300 = vld [vmem:[#allocation5 + $0x680] sm:$0xff]
    %v301 = vld [vmem:[#allocation5 + $0x688] sm:$0xff]
    %v302 = vld [vmem:[#allocation5 + $0x690] sm:$0xff]
    %v303 = vld [vmem:[#allocation5 + $0x698] sm:$0xff]
    %v304 = vld [vmem:[#allocation5 + $0x6a0] sm:$0xff]
    %v305 = vld [vmem:[#allocation5 + $0x6a8] sm:$0xff]
    %v306 = vld [vmem:[#allocation5 + $0x6b0] sm:$0xff]
    %v307 = vld [vmem:[#allocation5 + $0x6b8] sm:$0xff]
    %v308 = vld [vmem:[#allocation5 + $0x6c0] sm:$0xff]
    %v309 = vld [vmem:[#allocation5 + $0x6c8] sm:$0xff]
    %v310 = vld [vmem:[#allocation5 + $0x6d0] sm:$0xff]
    %v311 = vld [vmem:[#allocation5 + $0x6d8] sm:$0xff]
    %v312 = vld [vmem:[#allocation5 + $0x6e0] sm:$0xff]
    %v313 = vld [vmem:[#allocation5 + $0x6e8] sm:$0xff]
    %v314 = vld [vmem:[#allocation5 + $0x6f0] sm:$0xff]
    %v315 = vld [vmem:[#allocation5 + $0x6f8] sm:$0xff]
    %v316 = vld [vmem:[#allocation5 + $0x700] sm:$0xff]
    %v317 = vld [vmem:[#allocation5 + $0x708] sm:$0xff]
    %v318 = vld [vmem:[#allocation5 + $0x710] sm:$0xff]
    %v319 = vld [vmem:[#allocation5 + $0x718] sm:$0xff]
    %v320 = vld [vmem:[#allocation5 + $0x720] sm:$0xff]
    %v321 = vld [vmem:[#allocation5 + $0x728] sm:$0xff]
    %v322 = vld [vmem:[#allocation5 + $0x730] sm:$0xff]
    %v323 = vld [vmem:[#allocation5 + $0x738] sm:$0xff]
    %v324 = vld [vmem:[#allocation5 + $0x740] sm:$0xff]
    %v325 = vld [vmem:[#allocation5 + $0x748] sm:$0xff]
    %v326 = vld [vmem:[#allocation5 + $0x750] sm:$0xff]
    %v327 = vld [vmem:[#allocation5 + $0x758] sm:$0xff]
    %v328 = vld [vmem:[#allocation5 + $0x760] sm:$0xff]
    %v329 = vld [vmem:[#allocation5 + $0x768] sm:$0xff]
    %v330 = vld [vmem:[#allocation5 + $0x770] sm:$0xff]
    %v331 = vld [vmem:[#allocation5 + $0x778] sm:$0xff]
    %v332 = vld [vmem:[#allocation5 + $0x780] sm:$0xff]
    %v333 = vld [vmem:[#allocation5 + $0x788] sm:$0xff]
    %v334 = vld [vmem:[#allocation5 + $0x790] sm:$0xff]
    %v335 = vld [vmem:[#allocation5 + $0x798] sm:$0xff]
    %v336 = vld [vmem:[#allocation5 + $0x7a0] sm:$0xff]
    %v337 = vld [vmem:[#allocation5 + $0x7a8] sm:$0xff]
    %v338 = vld [vmem:[#allocation5 + $0x7b0] sm:$0xff]
    %v339 = vld [vmem:[#allocation5 + $0x7b8] sm:$0xff]
    %v340 = vld [vmem:[#allocation5 + $0x7c0] sm:$0xff]
    %v341 = vld [vmem:[#allocation5 + $0x7c8] sm:$0xff]
    %v342 = vld [vmem:[#allocation5 + $0x7d0] sm:$0xff]
    %v343 = vld [vmem:[#allocation5 + $0x7d8] sm:$0xff]
    %v344 = vld [vmem:[#allocation5 + $0x7e0] sm:$0xff]
    %v345 = vld [vmem:[#allocation5 + $0x7e8] sm:$0xff]
    %v346 = vld [vmem:[#allocation5 + $0x7f0] sm:$0xff]
    %v347 = vld [vmem:[#allocation5 + $0x7f8] sm:$0xff]
    %v348 = vld [vmem:[#allocation5 + $0x800] sm:$0xff]
    %v349 = vld [vmem:[#allocation5 + $0x808] sm:$0xff]
    %v350 = vld [vmem:[#allocation5 + $0x810] sm:$0xff]
    %v351 = vld [vmem:[#allocation5 + $0x818] sm:$0xff]
    %v352 = vld [vmem:[#allocation5 + $0x820] sm:$0xff]
    %v353 = vld [vmem:[#allocation5 + $0x828] sm:$0xff]
    %v354 = vld [vmem:[#allocation5 + $0x830] sm:$0xff]
    %v355 = vld [vmem:[#allocation5 + $0x838] sm:$0xff]
    %v356 = vld [vmem:[#allocation5 + $0x840] sm:$0xff]
    %v357 = vld [vmem:[#allocation5 + $0x848] sm:$0xff]
    %v358 = vld [vmem:[#allocation5 + $0x850] sm:$0xff]
    %v359 = vld [vmem:[#allocation5 + $0x858] sm:$0xff]
    %v360 = vld [vmem:[#allocation5 + $0x860] sm:$0xff]
    %v361 = vld [vmem:[#allocation5 + $0x868] sm:$0xff]
    %v362 = vld [vmem:[#allocation5 + $0x870] sm:$0xff]
    %v363 = vld [vmem:[#allocation5 + $0x878] sm:$0xff]
    %v364 = vld [vmem:[#allocation5 + $0x880] sm:$0xff]
    %v365 = vld [vmem:[#allocation5 + $0x888] sm:$0xff]
    %v366 = vld [vmem:[#allocation5 + $0x890] sm:$0xff]
    %v367 = vld [vmem:[#allocation5 + $0x898] sm:$0xff]
    %v368 = vld [vmem:[#allocation5 + $0x8a0] sm:$0xff]
    %v369 = vld [vmem:[#allocation5 + $0x8a8] sm:$0xff]
    %v370 = vld [vmem:[#allocation5 + $0x8b0] sm:$0xff]
    %v371 = vld [vmem:[#allocation5 + $0x8b8] sm:$0xff]
    %v372 = vld [vmem:[#allocation5 + $0x8c0] sm:$0xff]
    %v373 = vld [vmem:[#allocation5 + $0x8c8] sm:$0xff]
    %v374 = vld [vmem:[#allocation5 + $0x8d0] sm:$0xff]
    %v375 = vld [vmem:[#allocation5 + $0x8d8] sm:$0xff]
    %v376 = vld [vmem:[#allocation5 + $0x8e0] sm:$0xff]
    %v377 = vld [vmem:[#allocation5 + $0x8e8] sm:$0xff]
    %v378 = vld [vmem:[#allocation5 + $0x8f0] sm:$0xff]
    %v379 = vld [vmem:[#allocation5 + $0x8f8] sm:$0xff]
    %v380 = vld [vmem:[#allocation7] sm:$0xff]
    %v381 = vld [vmem:[#allocation7 + $0x8] sm:$0xf]
    %v382 = vld [vmem:[#allocation8] sm:$0xff]
    %v383 = vld [vmem:[#allocation8 + $0x8] sm:$0xf]
    %v384 = vld [vmem:[#allocation8 + $0xc] sm:$0xff]
    %v385 = vld [vmem:[#allocation8 + $0x14] sm:$0xf]
    %v386 = vld [vmem:[#allocation8 + $0x18] sm:$0xff]
    %v387 = vld [vmem:[#allocation8 + $0x20] sm:$0xf]
    %v388 = vld [vmem:[#allocation8 + $0x24] sm:$0xff]
    %v389 = vld [vmem:[#allocation8 + $0x2c] sm:$0xf]
    %v390 = vld [vmem:[#allocation8 + $0x30] sm:$0xff]
    %v391 = vld [vmem:[#allocation8 + $0x38] sm:$0xf]
    %v392 = vld [vmem:[#allocation8 + $0x3c] sm:$0xff]
    %v393 = vld [vmem:[#allocation8 + $0x44] sm:$0xf]
    %v394 = vld [vmem:[#allocation8 + $0x48] sm:$0xff]
    %v395 = vld [vmem:[#allocation8 + $0x50] sm:$0xf]
    %v396 = vld [vmem:[#allocation8 + $0x54] sm:$0xff]
    %v397 = vld [vmem:[#allocation8 + $0x5c] sm:$0xf]
    %v398 = vld [vmem:[#allocation8 + $0x60] sm:$0xff]
    %v399 = vld [vmem:[#allocation8 + $0x68] sm:$0xf]
    %v400 = vld [vmem:[#allocation8 + $0x6c] sm:$0xff]
    %v401 = vld [vmem:[#allocation8 + $0x74] sm:$0xf]
    %v402 = vld [vmem:[#allocation8 + $0x78] sm:$0xff]
    %v403 = vld [vmem:[#allocation8 + $0x80] sm:$0xf]
    %v404 = vld [vmem:[#allocation8 + $0x84] sm:$0xff]
    %v405 = vld [vmem:[#allocation8 + $0x8c] sm:$0xf]
    %v406 = vld [vmem:[#allocation8 + $0x90] sm:$0xff]
    %v407 = vld [vmem:[#allocation8 + $0x98] sm:$0xf]
    %v408 = vld [vmem:[#allocation8 + $0x9c] sm:$0xff]
    %v409 = vld [vmem:[#allocation8 + $0xa4] sm:$0xf]
    %v410 = vld [vmem:[#allocation8 + $0xa8] sm:$0xff]
    %v411 = vld [vmem:[#allocation8 + $0xb0] sm:$0xf]
    %v412 = vld [vmem:[#allocation8 + $0xb4] sm:$0xff]
    %v413 = vld [vmem:[#allocation8 + $0xbc] sm:$0xf]
    %v414 = vld [vmem:[#allocation8 + $0xc0] sm:$0xff]
    %v415 = vld [vmem:[#allocation8 + $0xc8] sm:$0xf]
    %v416 = vld [vmem:[#allocation8 + $0xcc] sm:$0xff]
    %v417 = vld [vmem:[#allocation8 + $0xd4] sm:$0xf]
    %v418 = vld [vmem:[#allocation8 + $0xd8] sm:$0xff]
    %v419 = vld [vmem:[#allocation8 + $0xe0] sm:$0xf]
    %v420 = vld [vmem:[#allocation8 + $0xe4] sm:$0xff]
    %v421 = vld [vmem:[#allocation8 + $0xec] sm:$0xf]
    %v422 = vld [vmem:[#allocation8 + $0xf0] sm:$0xff]
    %v423 = vld [vmem:[#allocation8 + $0xf8] sm:$0xf]
    %v424 = vld [vmem:[#allocation8 + $0xfc] sm:$0xff]
    %v425 = vld [vmem:[#allocation8 + $0x104] sm:$0xf]
    %v426 = vld [vmem:[#allocation8 + $0x108] sm:$0xff]
    %v427 = vld [vmem:[#allocation8 + $0x110] sm:$0xf]
    %v428 = vld [vmem:[#allocation8 + $0x114] sm:$0xff]
    %v429 = vld [vmem:[#allocation8 + $0x11c] sm:$0xf]
    %v430 = vld [vmem:[#allocation8 + $0x120] sm:$0xff]
    %v431 = vld [vmem:[#allocation8 + $0x128] sm:$0xf]
    %v432 = vld [vmem:[#allocation8 + $0x12c] sm:$0xff]
    %v433 = vld [vmem:[#allocation8 + $0x134] sm:$0xf]
    %v434 = vld [vmem:[#allocation8 + $0x138] sm:$0xff]
    %v435 = vld [vmem:[#allocation8 + $0x140] sm:$0xf]
    %v436 = vld [vmem:[#allocation8 + $0x144] sm:$0xff]
    %v437 = vld [vmem:[#allocation8 + $0x14c] sm:$0xf]
    %v438 = vld [vmem:[#allocation8 + $0x150] sm:$0xff]
    %v439 = vld [vmem:[#allocation8 + $0x158] sm:$0xf]
    %v440 = vld [vmem:[#allocation8 + $0x15c] sm:$0xff]
    %v441 = vld [vmem:[#allocation8 + $0x164] sm:$0xf]
    %v442 = vld [vmem:[#allocation8 + $0x168] sm:$0xff]
    %v443 = vld [vmem:[#allocation8 + $0x170] sm:$0xf]
    %v444 = vld [vmem:[#allocation8 + $0x174] sm:$0xff]
    %v445 = vld [vmem:[#allocation8 + $0x17c] sm:$0xf]
    %v446 = vld [vmem:[#allocation8 + $0x180] sm:$0xff]
    %v447 = vld [vmem:[#allocation8 + $0x188] sm:$0xf]
    %v448 = vld [vmem:[#allocation8 + $0x18c] sm:$0xff]
    %v449 = vld [vmem:[#allocation8 + $0x194] sm:$0xf]
    %v450 = vld [vmem:[#allocation8 + $0x198] sm:$0xff]
    %v451 = vld [vmem:[#allocation8 + $0x1a0] sm:$0xf]
    %v452 = vld [vmem:[#allocation8 + $0x1a4] sm:$0xff]
    %v453 = vld [vmem:[#allocation8 + $0x1ac] sm:$0xf]
    %v454 = vld [vmem:[#allocation8 + $0x1b0] sm:$0xff]
    %v455 = vld [vmem:[#allocation8 + $0x1b8] sm:$0xf]
    %v456 = vld [vmem:[#allocation8 + $0x1bc] sm:$0xff]
    %v457 = vld [vmem:[#allocation8 + $0x1c4] sm:$0xf]
    %v458 = vld [vmem:[#allocation8 + $0x1c8] sm:$0xff]
    %v459 = vld [vmem:[#allocation8 + $0x1d0] sm:$0xf]
    %v460 = vld [vmem:[#allocation8 + $0x1d4] sm:$0xff]
    %v461 = vld [vmem:[#allocation8 + $0x1dc] sm:$0xf]
    %v462 = vld [vmem:[#allocation8 + $0x1e0] sm:$0xff]
    %v463 = vld [vmem:[#allocation8 + $0x1e8] sm:$0xf]
    %v464 = vld [vmem:[#allocation8 + $0x1ec] sm:$0xff]
    %v465 = vld [vmem:[#allocation8 + $0x1f4] sm:$0xf]
    %v466 = vld [vmem:[#allocation8 + $0x1f8] sm:$0xff]
    %v467 = vld [vmem:[#allocation8 + $0x200] sm:$0xf]
    %v468 = vld [vmem:[#allocation8 + $0x204] sm:$0xff]
    %v469 = vld [vmem:[#allocation8 + $0x20c] sm:$0xf]
    %v470 = vld [vmem:[#allocation8 + $0x210] sm:$0xff]
    %v471 = vld [vmem:[#allocation8 + $0x218] sm:$0xf]
    %v472 = vld [vmem:[#allocation8 + $0x21c] sm:$0xff]
    %v473 = vld [vmem:[#allocation8 + $0x224] sm:$0xf]
    %v474 = vld [vmem:[#allocation8 + $0x228] sm:$0xff]
    %v475 = vld [vmem:[#allocation8 + $0x230] sm:$0xf]
    %v476 = vld [vmem:[#allocation8 + $0x234] sm:$0xff]
    %v477 = vld [vmem:[#allocation8 + $0x23c] sm:$0xf]
    %v478 = vld [vmem:[#allocation8 + $0x240] sm:$0xff]
    %v479 = vld [vmem:[#allocation8 + $0x248] sm:$0xf]
    %v480 = vld [vmem:[#allocation8 + $0x24c] sm:$0xff]
    %v481 = vld [vmem:[#allocation8 + $0x254] sm:$0xf]
    %v482 = vld [vmem:[#allocation8 + $0x258] sm:$0xff]
    %v483 = vld [vmem:[#allocation8 + $0x260] sm:$0xf]
    %v484 = vld [vmem:[#allocation8 + $0x264] sm:$0xff]
    %v485 = vld [vmem:[#allocation8 + $0x26c] sm:$0xf]
    %v486 = vld [vmem:[#allocation8 + $0x270] sm:$0xff]
    %v487 = vld [vmem:[#allocation8 + $0x278] sm:$0xf]
    %v488 = vld [vmem:[#allocation8 + $0x27c] sm:$0xff]
    %v489 = vld [vmem:[#allocation8 + $0x284] sm:$0xf]
    %v490 = vld [vmem:[#allocation8 + $0x288] sm:$0xff]
    %v491 = vld [vmem:[#allocation8 + $0x290] sm:$0xf]
    %v492 = vld [vmem:[#allocation8 + $0x294] sm:$0xff]
    %v493 = vld [vmem:[#allocation8 + $0x29c] sm:$0xf]
    %v494 = vld [vmem:[#allocation8 + $0x2a0] sm:$0xff]
    %v495 = vld [vmem:[#allocation8 + $0x2a8] sm:$0xf]
    %v496 = vld [vmem:[#allocation8 + $0x2ac] sm:$0xff]
    %v497 = vld [vmem:[#allocation8 + $0x2b4] sm:$0xf]
    %v498 = vld [vmem:[#allocation8 + $0x2b8] sm:$0xff]
    %v499 = vld [vmem:[#allocation8 + $0x2c0] sm:$0xf]
    %v500 = vld [vmem:[#allocation8 + $0x2c4] sm:$0xff]
    %v501 = vld [vmem:[#allocation8 + $0x2cc] sm:$0xf]
    %v502 = vld [vmem:[#allocation8 + $0x2d0] sm:$0xff]
    %v503 = vld [vmem:[#allocation8 + $0x2d8] sm:$0xf]
    %v504 = vld [vmem:[#allocation8 + $0x2dc] sm:$0xff]
    %v505 = vld [vmem:[#allocation8 + $0x2e4] sm:$0xf]
    %v506 = vld [vmem:[#allocation8 + $0x2e8] sm:$0xff]
    %v507 = vld [vmem:[#allocation8 + $0x2f0] sm:$0xf]
    %v508 = vld [vmem:[#allocation8 + $0x2f4] sm:$0xff]
    %v509 = vld [vmem:[#allocation8 + $0x2fc] sm:$0xf]
    %v510 = vld [vmem:[#allocation8 + $0x300] sm:$0xff]
    %v511 = vld [vmem:[#allocation8 + $0x308] sm:$0xf]
    %v512 = vld [vmem:[#allocation8 + $0x30c] sm:$0xff]
    %v513 = vld [vmem:[#allocation8 + $0x314] sm:$0xf]
    %v514 = vld [vmem:[#allocation8 + $0x318] sm:$0xff]
    %v515 = vld [vmem:[#allocation8 + $0x320] sm:$0xf]
    %v516 = vld [vmem:[#allocation8 + $0x324] sm:$0xff]
    %v517 = vld [vmem:[#allocation8 + $0x32c] sm:$0xf]
    %v518 = vld [vmem:[#allocation8 + $0x330] sm:$0xff]
    %v519 = vld [vmem:[#allocation8 + $0x338] sm:$0xf]
    %v520 = vld [vmem:[#allocation8 + $0x33c] sm:$0xff]
    %v521 = vld [vmem:[#allocation8 + $0x344] sm:$0xf]
    %v522 = vld [vmem:[#allocation8 + $0x348] sm:$0xff]
    %v523 = vld [vmem:[#allocation8 + $0x350] sm:$0xf]
    %v524 = vld [vmem:[#allocation8 + $0x354] sm:$0xff]
    %v525 = vld [vmem:[#allocation8 + $0x35c] sm:$0xf]
    %v526 = vld [vmem:[#allocation8 + $0x360] sm:$0xff]
    %v527 = vld [vmem:[#allocation8 + $0x368] sm:$0xf]
    %v528 = vld [vmem:[#allocation8 + $0x36c] sm:$0xff]
    %v529 = vld [vmem:[#allocation8 + $0x374] sm:$0xf]
    %v530 = vld [vmem:[#allocation8 + $0x378] sm:$0xff]
    %v531 = vld [vmem:[#allocation8 + $0x380] sm:$0xf]
    %v532 = vld [vmem:[#allocation8 + $0x384] sm:$0xff]
    %v533 = vld [vmem:[#allocation8 + $0x38c] sm:$0xf]
    %v534 = vld [vmem:[#allocation8 + $0x390] sm:$0xff]
    %v535 = vld [vmem:[#allocation8 + $0x398] sm:$0xf]
    %v536 = vld [vmem:[#allocation8 + $0x39c] sm:$0xff]
    %v537 = vld [vmem:[#allocation8 + $0x3a4] sm:$0xf]
    %v538 = vld [vmem:[#allocation8 + $0x3a8] sm:$0xff]
    %v539 = vld [vmem:[#allocation8 + $0x3b0] sm:$0xf]
    %v540 = vld [vmem:[#allocation8 + $0x3b4] sm:$0xff]
    %v541 = vld [vmem:[#allocation8 + $0x3bc] sm:$0xf]
    %v542 = vld [vmem:[#allocation8 + $0x3c0] sm:$0xff]
    %v543 = vld [vmem:[#allocation8 + $0x3c8] sm:$0xf]
    %v544 = vld [vmem:[#allocation8 + $0x3cc] sm:$0xff]
    %v545 = vld [vmem:[#allocation8 + $0x3d4] sm:$0xf]
    %v546 = vld [vmem:[#allocation8 + $0x3d8] sm:$0xff]
    %v547 = vld [vmem:[#allocation8 + $0x3e0] sm:$0xf]
    %v548 = vld [vmem:[#allocation8 + $0x3e4] sm:$0xff]
    %v549 = vld [vmem:[#allocation8 + $0x3ec] sm:$0xf]
    %v550 = vld [vmem:[#allocation8 + $0x3f0] sm:$0xff]
    %v551 = vld [vmem:[#allocation8 + $0x3f8] sm:$0xf]
    %v552 = vld [vmem:[#allocation8 + $0x3fc] sm:$0xff]
    %v553 = vld [vmem:[#allocation8 + $0x404] sm:$0xf]
    %v554 = vld [vmem:[#allocation8 + $0x408] sm:$0xff]
    %v555 = vld [vmem:[#allocation8 + $0x410] sm:$0xf]
    %v556 = vld [vmem:[#allocation8 + $0x414] sm:$0xff]
    %v557 = vld [vmem:[#allocation8 + $0x41c] sm:$0xf]
    %v558 = vld [vmem:[#allocation8 + $0x420] sm:$0xff]
    %v559 = vld [vmem:[#allocation8 + $0x428] sm:$0xf]
    %v560 = vld [vmem:[#allocation8 + $0x42c] sm:$0xff]
    %v561 = vld [vmem:[#allocation8 + $0x434] sm:$0xf]
    %v562 = vld [vmem:[#allocation8 + $0x438] sm:$0xff]
    %v563 = vld [vmem:[#allocation8 + $0x440] sm:$0xf]
    %v564 = vld [vmem:[#allocation8 + $0x444] sm:$0xff]
    %v565 = vld [vmem:[#allocation8 + $0x44c] sm:$0xf]
    %v566 = vld [vmem:[#allocation8 + $0x450] sm:$0xff]
    %v567 = vld [vmem:[#allocation8 + $0x458] sm:$0xf]
    %v568 = vld [vmem:[#allocation8 + $0x45c] sm:$0xff]
    %v569 = vld [vmem:[#allocation8 + $0x464] sm:$0xf]
    %v570 = vld [vmem:[#allocation8 + $0x468] sm:$0xff]
    %v571 = vld [vmem:[#allocation8 + $0x470] sm:$0xf]
    %v572 = vld [vmem:[#allocation8 + $0x474] sm:$0xff]
    %v573 = vld [vmem:[#allocation8 + $0x47c] sm:$0xf]
    %v574 = vld [vmem:[#allocation8 + $0x480] sm:$0xff]
    %v575 = vld [vmem:[#allocation8 + $0x488] sm:$0xf]
    %v576 = vld [vmem:[#allocation8 + $0x48c] sm:$0xff]
    %v577 = vld [vmem:[#allocation8 + $0x494] sm:$0xf]
    %v578 = vld [vmem:[#allocation8 + $0x498] sm:$0xff]
    %v579 = vld [vmem:[#allocation8 + $0x4a0] sm:$0xf]
    %v580 = vld [vmem:[#allocation8 + $0x4a4] sm:$0xff]
    %v581 = vld [vmem:[#allocation8 + $0x4ac] sm:$0xf]
    %v582 = vld [vmem:[#allocation8 + $0x4b0] sm:$0xff]
    %v583 = vld [vmem:[#allocation8 + $0x4b8] sm:$0xf]
    %v584 = vld [vmem:[#allocation8 + $0x4bc] sm:$0xff]
    %v585 = vld [vmem:[#allocation8 + $0x4c4] sm:$0xf]
    %v586 = vld [vmem:[#allocation8 + $0x4c8] sm:$0xff]
    %v587 = vld [vmem:[#allocation8 + $0x4d0] sm:$0xf]
    %v588 = vld [vmem:[#allocation8 + $0x4d4] sm:$0xff]
    %v589 = vld [vmem:[#allocation8 + $0x4dc] sm:$0xf]
    %v590 = vld [vmem:[#allocation8 + $0x4e0] sm:$0xff]
    %v591 = vld [vmem:[#allocation8 + $0x4e8] sm:$0xf]
    %v592 = vld [vmem:[#allocation8 + $0x4ec] sm:$0xff]
    %v593 = vld [vmem:[#allocation8 + $0x4f4] sm:$0xf]
    %v594 = vld [vmem:[#allocation8 + $0x4f8] sm:$0xff]
    %v595 = vld [vmem:[#allocation8 + $0x500] sm:$0xf]
    %v596 = vld [vmem:[#allocation8 + $0x504] sm:$0xff]
    %v597 = vld [vmem:[#allocation8 + $0x50c] sm:$0xf]
    %v598 = vld [vmem:[#allocation8 + $0x510] sm:$0xff]
    %v599 = vld [vmem:[#allocation8 + $0x518] sm:$0xf]
    %v600 = vld [vmem:[#allocation8 + $0x51c] sm:$0xff]
    %v601 = vld [vmem:[#allocation8 + $0x524] sm:$0xf]
    %v602 = vld [vmem:[#allocation8 + $0x528] sm:$0xff]
    %v603 = vld [vmem:[#allocation8 + $0x530] sm:$0xf]
    %v604 = vld [vmem:[#allocation8 + $0x534] sm:$0xff]
    %v605 = vld [vmem:[#allocation8 + $0x53c] sm:$0xf]
    %v606 = vld [vmem:[#allocation8 + $0x540] sm:$0xff]
    %v607 = vld [vmem:[#allocation8 + $0x548] sm:$0xf]
    %v608 = vld [vmem:[#allocation8 + $0x54c] sm:$0xff]
    %v609 = vld [vmem:[#allocation8 + $0x554] sm:$0xf]
    %v610 = vld [vmem:[#allocation8 + $0x558] sm:$0xff]
    %v611 = vld [vmem:[#allocation8 + $0x560] sm:$0xf]
    %v612 = vld [vmem:[#allocation8 + $0x564] sm:$0xff]
    %v613 = vld [vmem:[#allocation8 + $0x56c] sm:$0xf]
    %v614 = vld [vmem:[#allocation8 + $0x570] sm:$0xff]
    %v615 = vld [vmem:[#allocation8 + $0x578] sm:$0xf]
    %v616 = vld [vmem:[#allocation8 + $0x57c] sm:$0xff]
    %v617 = vld [vmem:[#allocation8 + $0x584] sm:$0xf]
    %v618 = vld [vmem:[#allocation8 + $0x588] sm:$0xff]
    %v619 = vld [vmem:[#allocation8 + $0x590] sm:$0xf]
    %v620 = vld [vmem:[#allocation8 + $0x594] sm:$0xff]
    %v621 = vld [vmem:[#allocation8 + $0x59c] sm:$0xf]
    %v622 = vld [vmem:[#allocation8 + $0x5a0] sm:$0xff]
    %v623 = vld [vmem:[#allocation8 + $0x5a8] sm:$0xf]
    %v624 = vld [vmem:[#allocation8 + $0x5ac] sm:$0xff]
    %v625 = vld [vmem:[#allocation8 + $0x5b4] sm:$0xf]
    %v626 = vld [vmem:[#allocation8 + $0x5b8] sm:$0xff]
    %v627 = vld [vmem:[#allocation8 + $0x5c0] sm:$0xf]
    %v628 = vld [vmem:[#allocation8 + $0x5c4] sm:$0xff]
    %v629 = vld [vmem:[#allocation8 + $0x5cc] sm:$0xf]
    %v630 = vld [vmem:[#allocation8 + $0x5d0] sm:$0xff]
    %v631 = vld [vmem:[#allocation8 + $0x5d8] sm:$0xf]
    %v632 = vld [vmem:[#allocation8 + $0x5dc] sm:$0xff]
    %v633 = vld [vmem:[#allocation8 + $0x5e4] sm:$0xf]
    %v634 = vld [vmem:[#allocation8 + $0x5e8] sm:$0xff]
    %v635 = vld [vmem:[#allocation8 + $0x5f0] sm:$0xf]
    %v636 = vld [vmem:[#allocation8 + $0x5f4] sm:$0xff]
    %v637 = vld [vmem:[#allocation8 + $0x5fc] sm:$0xf]
    %v638 = vld [vmem:[#allocation8 + $0x600] sm:$0xff]
    %v639 = vld [vmem:[#allocation8 + $0x608] sm:$0xf]
    %v640 = vld [vmem:[#allocation8 + $0x60c] sm:$0xff]
    %v641 = vld [vmem:[#allocation8 + $0x614] sm:$0xf]
    %v642 = vld [vmem:[#allocation8 + $0x618] sm:$0xff]
    %v643 = vld [vmem:[#allocation8 + $0x620] sm:$0xf]
    %v644 = vld [vmem:[#allocation8 + $0x624] sm:$0xff]
    %v645 = vld [vmem:[#allocation8 + $0x62c] sm:$0xf]
    %v646 = vld [vmem:[#allocation8 + $0x630] sm:$0xff]
    %v647 = vld [vmem:[#allocation8 + $0x638] sm:$0xf]
    %v648 = vld [vmem:[#allocation8 + $0x63c] sm:$0xff]
    %v649 = vld [vmem:[#allocation8 + $0x644] sm:$0xf]
    %v650 = vld [vmem:[#allocation8 + $0x648] sm:$0xff]
    %v651 = vld [vmem:[#allocation8 + $0x650] sm:$0xf]
    %v652 = vld [vmem:[#allocation8 + $0x654] sm:$0xff]
    %v653 = vld [vmem:[#allocation8 + $0x65c] sm:$0xf]
    %v654 = vld [vmem:[#allocation8 + $0x660] sm:$0xff]
    %v655 = vld [vmem:[#allocation8 + $0x668] sm:$0xf]
    %v656 = vld [vmem:[#allocation8 + $0x66c] sm:$0xff]
    %v657 = vld [vmem:[#allocation8 + $0x674] sm:$0xf]
    %v658 = vld [vmem:[#allocation8 + $0x678] sm:$0xff]
    %v659 = vld [vmem:[#allocation8 + $0x680] sm:$0xf]
    %v660 = vld [vmem:[#allocation8 + $0x684] sm:$0xff]
    %v661 = vld [vmem:[#allocation8 + $0x68c] sm:$0xf]
    %v662 = vld [vmem:[#allocation8 + $0x690] sm:$0xff]
    %v663 = vld [vmem:[#allocation8 + $0x698] sm:$0xf]
    %v664 = vld [vmem:[#allocation8 + $0x69c] sm:$0xff]
    %v665 = vld [vmem:[#allocation8 + $0x6a4] sm:$0xf]
    %v666 = vld [vmem:[#allocation8 + $0x6a8] sm:$0xff]
    %v667 = vld [vmem:[#allocation8 + $0x6b0] sm:$0xf]
    %v668 = vld [vmem:[#allocation8 + $0x6b4] sm:$0xff]
    %v669 = vld [vmem:[#allocation8 + $0x6bc] sm:$0xf]
    %v670 = vld [vmem:[#allocation8 + $0x6c0] sm:$0xff]
    %v671 = vld [vmem:[#allocation8 + $0x6c8] sm:$0xf]
    %v672 = vld [vmem:[#allocation8 + $0x6cc] sm:$0xff]
    %v673 = vld [vmem:[#allocation8 + $0x6d4] sm:$0xf]
    %v674 = vld [vmem:[#allocation8 + $0x6d8] sm:$0xff]
    %v675 = vld [vmem:[#allocation8 + $0x6e0] sm:$0xf]
    %v676 = vld [vmem:[#allocation8 + $0x6e4] sm:$0xff]
    %v677 = vld [vmem:[#allocation8 + $0x6ec] sm:$0xf]
    %v678 = vld [vmem:[#allocation8 + $0x6f0] sm:$0xff]
    %v679 = vld [vmem:[#allocation8 + $0x6f8] sm:$0xf]
    %v680 = vld [vmem:[#allocation8 + $0x6fc] sm:$0xff]
    %v681 = vld [vmem:[#allocation8 + $0x704] sm:$0xf]
    %v682 = vld [vmem:[#allocation8 + $0x708] sm:$0xff]
    %v683 = vld [vmem:[#allocation8 + $0x710] sm:$0xf]
    %v684 = vld [vmem:[#allocation8 + $0x714] sm:$0xff]
    %v685 = vld [vmem:[#allocation8 + $0x71c] sm:$0xf]
    %v686 = vld [vmem:[#allocation8 + $0x720] sm:$0xff]
    %v687 = vld [vmem:[#allocation8 + $0x728] sm:$0xf]
    %v688 = vld [vmem:[#allocation8 + $0x72c] sm:$0xff]
    %v689 = vld [vmem:[#allocation8 + $0x734] sm:$0xf]
    %v690 = vld [vmem:[#allocation8 + $0x738] sm:$0xff]
    %v691 = vld [vmem:[#allocation8 + $0x740] sm:$0xf]
    %v692 = vld [vmem:[#allocation8 + $0x744] sm:$0xff]
    %v693 = vld [vmem:[#allocation8 + $0x74c] sm:$0xf]
    %v694 = vld [vmem:[#allocation8 + $0x750] sm:$0xff]
    %v695 = vld [vmem:[#allocation8 + $0x758] sm:$0xf]
    %v696 = vld [vmem:[#allocation8 + $0x75c] sm:$0xff]
    %v697 = vld [vmem:[#allocation8 + $0x764] sm:$0xf]
    %v698 = vld [vmem:[#allocation8 + $0x768] sm:$0xff]
    %v699 = vld [vmem:[#allocation8 + $0x770] sm:$0xf]
    %v700 = vld [vmem:[#allocation8 + $0x774] sm:$0xff]
    %v701 = vld [vmem:[#allocation8 + $0x77c] sm:$0xf]
    %v702 = vld [vmem:[#allocation8 + $0x780] sm:$0xff]
    %v703 = vld [vmem:[#allocation8 + $0x788] sm:$0xf]
    %v704 = vld [vmem:[#allocation8 + $0x78c] sm:$0xff]
    %v705 = vld [vmem:[#allocation8 + $0x794] sm:$0xf]
    %v706 = vld [vmem:[#allocation8 + $0x798] sm:$0xff]
    %v707 = vld [vmem:[#allocation8 + $0x7a0] sm:$0xf]
    %v708 = vld [vmem:[#allocation8 + $0x7a4] sm:$0xff]
    %v709 = vld [vmem:[#allocation8 + $0x7ac] sm:$0xf]
    %v710 = vld [vmem:[#allocation8 + $0x7b0] sm:$0xff]
    %v711 = vld [vmem:[#allocation8 + $0x7b8] sm:$0xf]
    %v712 = vld [vmem:[#allocation8 + $0x7bc] sm:$0xff]
    %v713 = vld [vmem:[#allocation8 + $0x7c4] sm:$0xf]
    %v714 = vld [vmem:[#allocation8 + $0x7c8] sm:$0xff]
    %v715 = vld [vmem:[#allocation8 + $0x7d0] sm:$0xf]
    %v716 = vld [vmem:[#allocation8 + $0x7d4] sm:$0xff]
    %v717 = vld [vmem:[#allocation8 + $0x7dc] sm:$0xf]
    %v718 = vld [vmem:[#allocation8 + $0x7e0] sm:$0xff]
    %v719 = vld [vmem:[#allocation8 + $0x7e8] sm:$0xf]
    %v720 = vld [vmem:[#allocation8 + $0x7ec] sm:$0xff]
    %v721 = vld [vmem:[#allocation8 + $0x7f4] sm:$0xf]
    %v722 = vld [vmem:[#allocation8 + $0x7f8] sm:$0xff]
    %v723 = vld [vmem:[#allocation8 + $0x800] sm:$0xf]
    %v724 = vld [vmem:[#allocation8 + $0x804] sm:$0xff]
    %v725 = vld [vmem:[#allocation8 + $0x80c] sm:$0xf]
    %v726 = vld [vmem:[#allocation8 + $0x810] sm:$0xff]
    %v727 = vld [vmem:[#allocation8 + $0x818] sm:$0xf]
    %v728 = vld [vmem:[#allocation8 + $0x81c] sm:$0xff]
    %v729 = vld [vmem:[#allocation8 + $0x824] sm:$0xf]
    %v730 = vld [vmem:[#allocation8 + $0x828] sm:$0xff]
    %v731 = vld [vmem:[#allocation8 + $0x830] sm:$0xf]
    %v732 = vld [vmem:[#allocation8 + $0x834] sm:$0xff]
    %v733 = vld [vmem:[#allocation8 + $0x83c] sm:$0xf]
    %v734 = vld [vmem:[#allocation8 + $0x840] sm:$0xff]
    %v735 = vld [vmem:[#allocation8 + $0x848] sm:$0xf]
    %v736 = vld [vmem:[#allocation8 + $0x84c] sm:$0xff]
    %v737 = vld [vmem:[#allocation8 + $0x854] sm:$0xf]
    %v738 = vld [vmem:[#allocation8 + $0x858] sm:$0xff]
    %v739 = vld [vmem:[#allocation8 + $0x860] sm:$0xf]
    %v740 = vld [vmem:[#allocation8 + $0x864] sm:$0xff]
    %v741 = vld [vmem:[#allocation8 + $0x86c] sm:$0xf]
    %v742 = vld [vmem:[#allocation8 + $0x870] sm:$0xff]
    %v743 = vld [vmem:[#allocation8 + $0x878] sm:$0xf]
    %v744 = vld [vmem:[#allocation8 + $0x87c] sm:$0xff]
    %v745 = vld [vmem:[#allocation8 + $0x884] sm:$0xf]
    %v746 = vld [vmem:[#allocation8 + $0x888] sm:$0xff]
    %v747 = vld [vmem:[#allocation8 + $0x890] sm:$0xf]
    %v748 = vld [vmem:[#allocation8 + $0x894] sm:$0xff]
    %v749 = vld [vmem:[#allocation8 + $0x89c] sm:$0xf]
    %v750 = vld [vmem:[#allocation8 + $0x8a0] sm:$0xff]
    %v751 = vld [vmem:[#allocation8 + $0x8a8] sm:$0xf]
    %v752 = vld [vmem:[#allocation8 + $0x8ac] sm:$0xff]
    %v753 = vld [vmem:[#allocation8 + $0x8b4] sm:$0xf]
    %v754 = vld [vmem:[#allocation8 + $0x8b8] sm:$0xff]
    %v755 = vld [vmem:[#allocation8 + $0x8c0] sm:$0xf]
    %v756 = vld [vmem:[#allocation8 + $0x8c4] sm:$0xff]
    %v757 = vld [vmem:[#allocation8 + $0x8cc] sm:$0xf]
    %v758 = vld [vmem:[#allocation8 + $0x8d0] sm:$0xff]
    %v759 = vld [vmem:[#allocation8 + $0x8d8] sm:$0xf]
    %v760 = vld [vmem:[#allocation8 + $0x8dc] sm:$0xff]
    %v761 = vld [vmem:[#allocation8 + $0x8e4] sm:$0xf]
    %v762 = vld [vmem:[#allocation8 + $0x8e8] sm:$0xff]
    %v763 = vld [vmem:[#allocation8 + $0x8f0] sm:$0xf]
    %v764 = vld [vmem:[#allocation8 + $0x8f4] sm:$0xff]
    %v765 = vld [vmem:[#allocation8 + $0x8fc] sm:$0xf]
    %v766 = vld [vmem:[#allocation10] sm:$0x7]
    %v767 = vpack.c.bf16 %v89, %v86
    %v768 = vpack.c.bf16 %v90, %v87
    %v769 = vpack.c.bf16 %v91, %v88
    %v772 = vlaneseq
    %v773 = vshrl.u32 %v772, 7
    %v774 = vsub.s32 0, %v773
    %v775 = vrot.slane %v380, %v774
    %v776 = vlaneseq
    %v777 = vshrl.u32 %v776, 7
    %v778 = vsub.s32 1, %v777
    %v779 = vrot.slane %v380, %v778
    %v780 = vlaneseq
    %v781 = vshrl.u32 %v780, 7
    %v782 = vsub.s32 2, %v781
    %v783 = vrot.slane %v380, %v782
    %v784 = vlaneseq
    %v785 = vshrl.u32 %v784, 7
    %v786 = vsub.s32 3, %v785
    %v787 = vrot.slane %v380, %v786
    %v788 = vlaneseq
    %v789 = vshrl.u32 %v788, 7
    %v790 = vsub.s32 4, %v789
    %v791 = vrot.slane %v380, %v790
    %v792 = vlaneseq
    %v793 = vshrl.u32 %v792, 7
    %v794 = vsub.s32 5, %v793
    %v795 = vrot.slane %v380, %v794
    %v796 = vlaneseq
    %v797 = vshrl.u32 %v796, 7
    %v798 = vsub.s32 6, %v797
    %v799 = vrot.slane %v380, %v798
    %v800 = vlaneseq
    %v801 = vshrl.u32 %v800, 7
    %v802 = vsub.s32 7, %v801
    %v803 = vrot.slane %v380, %v802
    %v804 = vlaneseq
    %v805 = vshrl.u32 %v804, 7
    %v806 = vsub.s32 0, %v805
    %v807 = vrot.slane %v381, %v806
    %v808 = vlaneseq
    %v809 = vshrl.u32 %v808, 7
    %v810 = vsub.s32 1, %v809
    %v811 = vrot.slane %v381, %v810
    %v812 = vlaneseq
    %v813 = vshrl.u32 %v812, 7
    %v814 = vsub.s32 2, %v813
    %v815 = vrot.slane %v381, %v814
    %v816 = vlaneseq
    %v817 = vshrl.u32 %v816, 7
    %v818 = vsub.s32 3, %v817
    %v819 = vrot.slane %v381, %v818
    %v1120 = vunpack.c.l.b16 %v92
    %v1121 = vunpack.c.h.b16 %v92
    %v1122 = vunpack.c.l.b16 %v93
    %v1123 = vunpack.c.h.b16 %v93
    %v1124 = vunpack.c.l.b16 %v94
    %v1125 = vunpack.c.h.b16 %v94
    %v1126 = vunpack.c.l.b16 %v95
    %v1127 = vunpack.c.h.b16 %v95
    %v1128 = vunpack.c.l.b16 %v96
    %v1129 = vunpack.c.h.b16 %v96
    %v1130 = vunpack.c.l.b16 %v97
    %v1131 = vunpack.c.h.b16 %v97
    %v1132 = vunpack.c.l.b16 %v98
    %v1133 = vunpack.c.h.b16 %v98
    %v1134 = vunpack.c.l.b16 %v99
    %v1135 = vunpack.c.h.b16 %v99
    %v1136 = vunpack.c.l.b16 %v100
    %v1137 = vunpack.c.h.b16 %v100
    %v1138 = vunpack.c.l.b16 %v101
    %v1139 = vunpack.c.h.b16 %v101
    %v1140 = vunpack.c.l.b16 %v102
    %v1141 = vunpack.c.h.b16 %v102
    %v1142 = vunpack.c.l.b16 %v103
    %v1143 = vunpack.c.h.b16 %v103
    %v1144 = vunpack.c.l.b16 %v104
    %v1145 = vunpack.c.h.b16 %v104
    %v1146 = vunpack.c.l.b16 %v105
    %v1147 = vunpack.c.h.b16 %v105
    %v1148 = vunpack.c.l.b16 %v106
    %v1149 = vunpack.c.h.b16 %v106
    %v1150 = vunpack.c.l.b16 %v107
    %v1151 = vunpack.c.h.b16 %v107
    %v1152 = vunpack.c.l.b16 %v108
    %v1153 = vunpack.c.h.b16 %v108
    %v1154 = vunpack.c.l.b16 %v109
    %v1155 = vunpack.c.h.b16 %v109
    %v1156 = vunpack.c.l.b16 %v110
    %v1157 = vunpack.c.h.b16 %v110
    %v1158 = vunpack.c.l.b16 %v111
    %v1159 = vunpack.c.h.b16 %v111
    %v1160 = vunpack.c.l.b16 %v112
    %v1161 = vunpack.c.h.b16 %v112
    %v1162 = vunpack.c.l.b16 %v113
    %v1163 = vunpack.c.h.b16 %v113
    %v1164 = vunpack.c.l.b16 %v114
    %v1165 = vunpack.c.h.b16 %v114
    %v1166 = vunpack.c.l.b16 %v115
    %v1167 = vunpack.c.h.b16 %v115
    %v1168 = vunpack.c.l.b16 %v116
    %v1169 = vunpack.c.h.b16 %v116
    %v1170 = vunpack.c.l.b16 %v117
    %v1171 = vunpack.c.h.b16 %v117
    %v1172 = vunpack.c.l.b16 %v118
    %v1173 = vunpack.c.h.b16 %v118
    %v1174 = vunpack.c.l.b16 %v119
    %v1175 = vunpack.c.h.b16 %v119
    %v1176 = vunpack.c.l.b16 %v120
    %v1177 = vunpack.c.h.b16 %v120
    %v1178 = vunpack.c.l.b16 %v121
    %v1179 = vunpack.c.h.b16 %v121
    %v1180 = vunpack.c.l.b16 %v122
    %v1181 = vunpack.c.h.b16 %v122
    %v1182 = vunpack.c.l.b16 %v123
    %v1183 = vunpack.c.h.b16 %v123
    %v1184 = vunpack.c.l.b16 %v124
    %v1185 = vunpack.c.h.b16 %v124
    %v1186 = vunpack.c.l.b16 %v125
    %v1187 = vunpack.c.h.b16 %v125
    %v1188 = vunpack.c.l.b16 %v126
    %v1189 = vunpack.c.h.b16 %v126
    %v1190 = vunpack.c.l.b16 %v127
    %v1191 = vunpack.c.h.b16 %v127
    %v1192 = vunpack.c.l.b16 %v128
    %v1193 = vunpack.c.h.b16 %v128
    %v1194 = vunpack.c.l.b16 %v129
    %v1195 = vunpack.c.h.b16 %v129
    %v1196 = vunpack.c.l.b16 %v130
    %v1197 = vunpack.c.h.b16 %v130
    %v1198 = vunpack.c.l.b16 %v131
    %v1199 = vunpack.c.h.b16 %v131
    %v1200 = vunpack.c.l.b16 %v132
    %v1201 = vunpack.c.h.b16 %v132
    %v1202 = vunpack.c.l.b16 %v133
    %v1203 = vunpack.c.h.b16 %v133
    %v1204 = vunpack.c.l.b16 %v134
    %v1205 = vunpack.c.h.b16 %v134
    %v1206 = vunpack.c.l.b16 %v135
    %v1207 = vunpack.c.h.b16 %v135
    %v1208 = vunpack.c.l.b16 %v136
    %v1209 = vunpack.c.h.b16 %v136
    %v1210 = vunpack.c.l.b16 %v137
    %v1211 = vunpack.c.h.b16 %v137
    %v1212 = vunpack.c.l.b16 %v138
    %v1213 = vunpack.c.h.b16 %v138
    %v1214 = vunpack.c.l.b16 %v139
    %v1215 = vunpack.c.h.b16 %v139
    %v1216 = vunpack.c.l.b16 %v140
    %v1217 = vunpack.c.h.b16 %v140
    %v1218 = vunpack.c.l.b16 %v141
    %v1219 = vunpack.c.h.b16 %v141
    %v1220 = vunpack.c.l.b16 %v142
    %v1221 = vunpack.c.h.b16 %v142
    %v1222 = vunpack.c.l.b16 %v143
    %v1223 = vunpack.c.h.b16 %v143
    %v1224 = vunpack.c.l.b16 %v144
    %v1225 = vunpack.c.h.b16 %v144
    %v1226 = vunpack.c.l.b16 %v145
    %v1227 = vunpack.c.h.b16 %v145
    %v1228 = vunpack.c.l.b16 %v146
    %v1229 = vunpack.c.h.b16 %v146
    %v1230 = vunpack.c.l.b16 %v147
    %v1231 = vunpack.c.h.b16 %v147
    %v1232 = vunpack.c.l.b16 %v148
    %v1233 = vunpack.c.h.b16 %v148
    %v1234 = vunpack.c.l.b16 %v149
    %v1235 = vunpack.c.h.b16 %v149
    %v1236 = vunpack.c.l.b16 %v150
    %v1237 = vunpack.c.h.b16 %v150
    %v1238 = vunpack.c.l.b16 %v151
    %v1239 = vunpack.c.h.b16 %v151
    %v1240 = vunpack.c.l.b16 %v152
    %v1241 = vunpack.c.h.b16 %v152
    %v1242 = vunpack.c.l.b16 %v153
    %v1243 = vunpack.c.h.b16 %v153
    %v1244 = vunpack.c.l.b16 %v154
    %v1245 = vunpack.c.h.b16 %v154
    %v1246 = vunpack.c.l.b16 %v155
    %v1247 = vunpack.c.h.b16 %v155
    %v1248 = vunpack.c.l.b16 %v156
    %v1249 = vunpack.c.h.b16 %v156
    %v1250 = vunpack.c.l.b16 %v157
    %v1251 = vunpack.c.h.b16 %v157
    %v1252 = vunpack.c.l.b16 %v158
    %v1253 = vunpack.c.h.b16 %v158
    %v1254 = vunpack.c.l.b16 %v159
    %v1255 = vunpack.c.h.b16 %v159
    %v1256 = vunpack.c.l.b16 %v160
    %v1257 = vunpack.c.h.b16 %v160
    %v1258 = vunpack.c.l.b16 %v161
    %v1259 = vunpack.c.h.b16 %v161
    %v1260 = vunpack.c.l.b16 %v162
    %v1261 = vunpack.c.h.b16 %v162
    %v1262 = vunpack.c.l.b16 %v163
    %v1263 = vunpack.c.h.b16 %v163
    %v1264 = vunpack.c.l.b16 %v164
    %v1265 = vunpack.c.h.b16 %v164
    %v1266 = vunpack.c.l.b16 %v165
    %v1267 = vunpack.c.h.b16 %v165
    %v1268 = vunpack.c.l.b16 %v166
    %v1269 = vunpack.c.h.b16 %v166
    %v1270 = vunpack.c.l.b16 %v167
    %v1271 = vunpack.c.h.b16 %v167
    %v1272 = vunpack.c.l.b16 %v168
    %v1273 = vunpack.c.h.b16 %v168
    %v1274 = vunpack.c.l.b16 %v169
    %v1275 = vunpack.c.h.b16 %v169
    %v1276 = vunpack.c.l.b16 %v170
    %v1277 = vunpack.c.h.b16 %v170
    %v1278 = vunpack.c.l.b16 %v171
    %v1279 = vunpack.c.h.b16 %v171
    %v1280 = vunpack.c.l.b16 %v172
    %v1281 = vunpack.c.h.b16 %v172
    %v1282 = vunpack.c.l.b16 %v173
    %v1283 = vunpack.c.h.b16 %v173
    %v1284 = vunpack.c.l.b16 %v174
    %v1285 = vunpack.c.h.b16 %v174
    %v1286 = vunpack.c.l.b16 %v175
    %v1287 = vunpack.c.h.b16 %v175
    %v1288 = vunpack.c.l.b16 %v176
    %v1289 = vunpack.c.h.b16 %v176
    %v1290 = vunpack.c.l.b16 %v177
    %v1291 = vunpack.c.h.b16 %v177
    %v1292 = vunpack.c.l.b16 %v178
    %v1293 = vunpack.c.h.b16 %v178
    %v1294 = vunpack.c.l.b16 %v179
    %v1295 = vunpack.c.h.b16 %v179
    %v1296 = vunpack.c.l.b16 %v180
    %v1297 = vunpack.c.h.b16 %v180
    %v1298 = vunpack.c.l.b16 %v181
    %v1299 = vunpack.c.h.b16 %v181
    %v1300 = vunpack.c.l.b16 %v182
    %v1301 = vunpack.c.h.b16 %v182
    %v1302 = vunpack.c.l.b16 %v183
    %v1303 = vunpack.c.h.b16 %v183
    %v1304 = vunpack.c.l.b16 %v184
    %v1305 = vunpack.c.h.b16 %v184
    %v1306 = vunpack.c.l.b16 %v185
    %v1307 = vunpack.c.h.b16 %v185
    %v1308 = vunpack.c.l.b16 %v186
    %v1309 = vunpack.c.h.b16 %v186
    %v1310 = vunpack.c.l.b16 %v187
    %v1311 = vunpack.c.h.b16 %v187
    %v1312 = vunpack.c.l.b16 %v188
    %v1313 = vunpack.c.h.b16 %v188
    %v1314 = vunpack.c.l.b16 %v189
    %v1315 = vunpack.c.h.b16 %v189
    %v1316 = vunpack.c.l.b16 %v190
    %v1317 = vunpack.c.h.b16 %v190
    %v1318 = vunpack.c.l.b16 %v191
    %v1319 = vunpack.c.h.b16 %v191
    %v1320 = vunpack.c.l.b16 %v192
    %v1321 = vunpack.c.h.b16 %v192
    %v1322 = vunpack.c.l.b16 %v193
    %v1323 = vunpack.c.h.b16 %v193
    %v1324 = vunpack.c.l.b16 %v194
    %v1325 = vunpack.c.h.b16 %v194
    %v1326 = vunpack.c.l.b16 %v195
    %v1327 = vunpack.c.h.b16 %v195
    %v1328 = vunpack.c.l.b16 %v196
    %v1329 = vunpack.c.h.b16 %v196
    %v1330 = vunpack.c.l.b16 %v197
    %v1331 = vunpack.c.h.b16 %v197
    %v1332 = vunpack.c.l.b16 %v198
    %v1333 = vunpack.c.h.b16 %v198
    %v1334 = vunpack.c.l.b16 %v199
    %v1335 = vunpack.c.h.b16 %v199
    %v1336 = vunpack.c.l.b16 %v200
    %v1337 = vunpack.c.h.b16 %v200
    %v1338 = vunpack.c.l.b16 %v201
    %v1339 = vunpack.c.h.b16 %v201
    %v1340 = vunpack.c.l.b16 %v202
    %v1341 = vunpack.c.h.b16 %v202
    %v1342 = vunpack.c.l.b16 %v203
    %v1343 = vunpack.c.h.b16 %v203
    %v1344 = vunpack.c.l.b16 %v204
    %v1345 = vunpack.c.h.b16 %v204
    %v1346 = vunpack.c.l.b16 %v205
    %v1347 = vunpack.c.h.b16 %v205
    %v1348 = vunpack.c.l.b16 %v206
    %v1349 = vunpack.c.h.b16 %v206
    %v1350 = vunpack.c.l.b16 %v207
    %v1351 = vunpack.c.h.b16 %v207
    %v1352 = vunpack.c.l.b16 %v208
    %v1353 = vunpack.c.h.b16 %v208
    %v1354 = vunpack.c.l.b16 %v209
    %v1355 = vunpack.c.h.b16 %v209
    %v1356 = vunpack.c.l.b16 %v210
    %v1357 = vunpack.c.h.b16 %v210
    %v1358 = vunpack.c.l.b16 %v211
    %v1359 = vunpack.c.h.b16 %v211
    %v1360 = vunpack.c.l.b16 %v212
    %v1361 = vunpack.c.h.b16 %v212
    %v1362 = vunpack.c.l.b16 %v213
    %v1363 = vunpack.c.h.b16 %v213
    %v1364 = vunpack.c.l.b16 %v214
    %v1365 = vunpack.c.h.b16 %v214
    %v1366 = vunpack.c.l.b16 %v215
    %v1367 = vunpack.c.h.b16 %v215
    %v1368 = vunpack.c.l.b16 %v216
    %v1369 = vunpack.c.h.b16 %v216
    %v1370 = vunpack.c.l.b16 %v217
    %v1371 = vunpack.c.h.b16 %v217
    %v1372 = vunpack.c.l.b16 %v218
    %v1373 = vunpack.c.h.b16 %v218
    %v1374 = vunpack.c.l.b16 %v219
    %v1375 = vunpack.c.h.b16 %v219
    %v1376 = vunpack.c.l.b16 %v220
    %v1377 = vunpack.c.h.b16 %v220
    %v1378 = vunpack.c.l.b16 %v221
    %v1379 = vunpack.c.h.b16 %v221
    %v1380 = vunpack.c.l.b16 %v222
    %v1381 = vunpack.c.h.b16 %v222
    %v1382 = vunpack.c.l.b16 %v223
    %v1383 = vunpack.c.h.b16 %v223
    %v1384 = vunpack.c.l.b16 %v224
    %v1385 = vunpack.c.h.b16 %v224
    %v1386 = vunpack.c.l.b16 %v225
    %v1387 = vunpack.c.h.b16 %v225
    %v1388 = vunpack.c.l.b16 %v226
    %v1389 = vunpack.c.h.b16 %v226
    %v1390 = vunpack.c.l.b16 %v227
    %v1391 = vunpack.c.h.b16 %v227
    %v1392 = vunpack.c.l.b16 %v228
    %v1393 = vunpack.c.h.b16 %v228
    %v1394 = vunpack.c.l.b16 %v229
    %v1395 = vunpack.c.h.b16 %v229
    %v1396 = vunpack.c.l.b16 %v230
    %v1397 = vunpack.c.h.b16 %v230
    %v1398 = vunpack.c.l.b16 %v231
    %v1399 = vunpack.c.h.b16 %v231
    %v1400 = vunpack.c.l.b16 %v232
    %v1401 = vunpack.c.h.b16 %v232
    %v1402 = vunpack.c.l.b16 %v233
    %v1403 = vunpack.c.h.b16 %v233
    %v1404 = vunpack.c.l.b16 %v234
    %v1405 = vunpack.c.h.b16 %v234
    %v1406 = vunpack.c.l.b16 %v235
    %v1407 = vunpack.c.h.b16 %v235
    %v1408 = vunpack.c.l.b16 %v236
    %v1409 = vunpack.c.h.b16 %v236
    %v1410 = vunpack.c.l.b16 %v237
    %v1411 = vunpack.c.h.b16 %v237
    %v1412 = vunpack.c.l.b16 %v238
    %v1413 = vunpack.c.h.b16 %v238
    %v1414 = vunpack.c.l.b16 %v239
    %v1415 = vunpack.c.h.b16 %v239
    %v1416 = vunpack.c.l.b16 %v240
    %v1417 = vunpack.c.h.b16 %v240
    %v1418 = vunpack.c.l.b16 %v241
    %v1419 = vunpack.c.h.b16 %v241
    %v1420 = vunpack.c.l.b16 %v242
    %v1421 = vunpack.c.h.b16 %v242
    %v1422 = vunpack.c.l.b16 %v243
    %v1423 = vunpack.c.h.b16 %v243
    %v1424 = vunpack.c.l.b16 %v244
    %v1425 = vunpack.c.h.b16 %v244
    %v1426 = vunpack.c.l.b16 %v245
    %v1427 = vunpack.c.h.b16 %v245
    %v1428 = vunpack.c.l.b16 %v246
    %v1429 = vunpack.c.h.b16 %v246
    %v1430 = vunpack.c.l.b16 %v247
    %v1431 = vunpack.c.h.b16 %v247
    %v1432 = vunpack.c.l.b16 %v248
    %v1433 = vunpack.c.h.b16 %v248
    %v1434 = vunpack.c.l.b16 %v249
    %v1435 = vunpack.c.h.b16 %v249
    %v1436 = vunpack.c.l.b16 %v250
    %v1437 = vunpack.c.h.b16 %v250
    %v1438 = vunpack.c.l.b16 %v251
    %v1439 = vunpack.c.h.b16 %v251
    %v1440 = vunpack.c.l.b16 %v252
    %v1441 = vunpack.c.h.b16 %v252
    %v1442 = vunpack.c.l.b16 %v253
    %v1443 = vunpack.c.h.b16 %v253
    %v1444 = vunpack.c.l.b16 %v254
    %v1445 = vunpack.c.h.b16 %v254
    %v1446 = vunpack.c.l.b16 %v255
    %v1447 = vunpack.c.h.b16 %v255
    %v1448 = vunpack.c.l.b16 %v256
    %v1449 = vunpack.c.h.b16 %v256
    %v1450 = vunpack.c.l.b16 %v257
    %v1451 = vunpack.c.h.b16 %v257
    %v1452 = vunpack.c.l.b16 %v258
    %v1453 = vunpack.c.h.b16 %v258
    %v1454 = vunpack.c.l.b16 %v259
    %v1455 = vunpack.c.h.b16 %v259
    %v1456 = vunpack.c.l.b16 %v260
    %v1457 = vunpack.c.h.b16 %v260
    %v1458 = vunpack.c.l.b16 %v261
    %v1459 = vunpack.c.h.b16 %v261
    %v1460 = vunpack.c.l.b16 %v262
    %v1461 = vunpack.c.h.b16 %v262
    %v1462 = vunpack.c.l.b16 %v263
    %v1463 = vunpack.c.h.b16 %v263
    %v1464 = vunpack.c.l.b16 %v264
    %v1465 = vunpack.c.h.b16 %v264
    %v1466 = vunpack.c.l.b16 %v265
    %v1467 = vunpack.c.h.b16 %v265
    %v1468 = vunpack.c.l.b16 %v266
    %v1469 = vunpack.c.h.b16 %v266
    %v1470 = vunpack.c.l.b16 %v267
    %v1471 = vunpack.c.h.b16 %v267
    %v1472 = vunpack.c.l.b16 %v268
    %v1473 = vunpack.c.h.b16 %v268
    %v1474 = vunpack.c.l.b16 %v269
    %v1475 = vunpack.c.h.b16 %v269
    %v1476 = vunpack.c.l.b16 %v270
    %v1477 = vunpack.c.h.b16 %v270
    %v1478 = vunpack.c.l.b16 %v271
    %v1479 = vunpack.c.h.b16 %v271
    %v1480 = vunpack.c.l.b16 %v272
    %v1481 = vunpack.c.h.b16 %v272
    %v1482 = vunpack.c.l.b16 %v273
    %v1483 = vunpack.c.h.b16 %v273
    %v1484 = vunpack.c.l.b16 %v274
    %v1485 = vunpack.c.h.b16 %v274
    %v1486 = vunpack.c.l.b16 %v275
    %v1487 = vunpack.c.h.b16 %v275
    %v1488 = vunpack.c.l.b16 %v276
    %v1489 = vunpack.c.h.b16 %v276
    %v1490 = vunpack.c.l.b16 %v277
    %v1491 = vunpack.c.h.b16 %v277
    %v1492 = vunpack.c.l.b16 %v278
    %v1493 = vunpack.c.h.b16 %v278
    %v1494 = vunpack.c.l.b16 %v279
    %v1495 = vunpack.c.h.b16 %v279
    %v1496 = vunpack.c.l.b16 %v280
    %v1497 = vunpack.c.h.b16 %v280
    %v1498 = vunpack.c.l.b16 %v281
    %v1499 = vunpack.c.h.b16 %v281
    %v1500 = vunpack.c.l.b16 %v282
    %v1501 = vunpack.c.h.b16 %v282
    %v1502 = vunpack.c.l.b16 %v283
    %v1503 = vunpack.c.h.b16 %v283
    %v1504 = vunpack.c.l.b16 %v284
    %v1505 = vunpack.c.h.b16 %v284
    %v1506 = vunpack.c.l.b16 %v285
    %v1507 = vunpack.c.h.b16 %v285
    %v1508 = vunpack.c.l.b16 %v286
    %v1509 = vunpack.c.h.b16 %v286
    %v1510 = vunpack.c.l.b16 %v287
    %v1511 = vunpack.c.h.b16 %v287
    %v1512 = vunpack.c.l.b16 %v288
    %v1513 = vunpack.c.h.b16 %v288
    %v1514 = vunpack.c.l.b16 %v289
    %v1515 = vunpack.c.h.b16 %v289
    %v1516 = vunpack.c.l.b16 %v290
    %v1517 = vunpack.c.h.b16 %v290
    %v1518 = vunpack.c.l.b16 %v291
    %v1519 = vunpack.c.h.b16 %v291
    %v1520 = vunpack.c.l.b16 %v292
    %v1521 = vunpack.c.h.b16 %v292
    %v1522 = vunpack.c.l.b16 %v293
    %v1523 = vunpack.c.h.b16 %v293
    %v1524 = vunpack.c.l.b16 %v294
    %v1525 = vunpack.c.h.b16 %v294
    %v1526 = vunpack.c.l.b16 %v295
    %v1527 = vunpack.c.h.b16 %v295
    %v1528 = vunpack.c.l.b16 %v296
    %v1529 = vunpack.c.h.b16 %v296
    %v1530 = vunpack.c.l.b16 %v297
    %v1531 = vunpack.c.h.b16 %v297
    %v1532 = vunpack.c.l.b16 %v298
    %v1533 = vunpack.c.h.b16 %v298
    %v1534 = vunpack.c.l.b16 %v299
    %v1535 = vunpack.c.h.b16 %v299
    %v1536 = vunpack.c.l.b16 %v300
    %v1537 = vunpack.c.h.b16 %v300
    %v1538 = vunpack.c.l.b16 %v301
    %v1539 = vunpack.c.h.b16 %v301
    %v1540 = vunpack.c.l.b16 %v302
    %v1541 = vunpack.c.h.b16 %v302
    %v1542 = vunpack.c.l.b16 %v303
    %v1543 = vunpack.c.h.b16 %v303
    %v1544 = vunpack.c.l.b16 %v304
    %v1545 = vunpack.c.h.b16 %v304
    %v1546 = vunpack.c.l.b16 %v305
    %v1547 = vunpack.c.h.b16 %v305
    %v1548 = vunpack.c.l.b16 %v306
    %v1549 = vunpack.c.h.b16 %v306
    %v1550 = vunpack.c.l.b16 %v307
    %v1551 = vunpack.c.h.b16 %v307
    %v1552 = vunpack.c.l.b16 %v308
    %v1553 = vunpack.c.h.b16 %v308
    %v1554 = vunpack.c.l.b16 %v309
    %v1555 = vunpack.c.h.b16 %v309
    %v1556 = vunpack.c.l.b16 %v310
    %v1557 = vunpack.c.h.b16 %v310
    %v1558 = vunpack.c.l.b16 %v311
    %v1559 = vunpack.c.h.b16 %v311
    %v1560 = vunpack.c.l.b16 %v312
    %v1561 = vunpack.c.h.b16 %v312
    %v1562 = vunpack.c.l.b16 %v313
    %v1563 = vunpack.c.h.b16 %v313
    %v1564 = vunpack.c.l.b16 %v314
    %v1565 = vunpack.c.h.b16 %v314
    %v1566 = vunpack.c.l.b16 %v315
    %v1567 = vunpack.c.h.b16 %v315
    %v1568 = vunpack.c.l.b16 %v316
    %v1569 = vunpack.c.h.b16 %v316
    %v1570 = vunpack.c.l.b16 %v317
    %v1571 = vunpack.c.h.b16 %v317
    %v1572 = vunpack.c.l.b16 %v318
    %v1573 = vunpack.c.h.b16 %v318
    %v1574 = vunpack.c.l.b16 %v319
    %v1575 = vunpack.c.h.b16 %v319
    %v1576 = vunpack.c.l.b16 %v320
    %v1577 = vunpack.c.h.b16 %v320
    %v1578 = vunpack.c.l.b16 %v321
    %v1579 = vunpack.c.h.b16 %v321
    %v1580 = vunpack.c.l.b16 %v322
    %v1581 = vunpack.c.h.b16 %v322
    %v1582 = vunpack.c.l.b16 %v323
    %v1583 = vunpack.c.h.b16 %v323
    %v1584 = vunpack.c.l.b16 %v324
    %v1585 = vunpack.c.h.b16 %v324
    %v1586 = vunpack.c.l.b16 %v325
    %v1587 = vunpack.c.h.b16 %v325
    %v1588 = vunpack.c.l.b16 %v326
    %v1589 = vunpack.c.h.b16 %v326
    %v1590 = vunpack.c.l.b16 %v327
    %v1591 = vunpack.c.h.b16 %v327
    %v1592 = vunpack.c.l.b16 %v328
    %v1593 = vunpack.c.h.b16 %v328
    %v1594 = vunpack.c.l.b16 %v329
    %v1595 = vunpack.c.h.b16 %v329
    %v1596 = vunpack.c.l.b16 %v330
    %v1597 = vunpack.c.h.b16 %v330
    %v1598 = vunpack.c.l.b16 %v331
    %v1599 = vunpack.c.h.b16 %v331
    %v1600 = vunpack.c.l.b16 %v332
    %v1601 = vunpack.c.h.b16 %v332
    %v1602 = vunpack.c.l.b16 %v333
    %v1603 = vunpack.c.h.b16 %v333
    %v1604 = vunpack.c.l.b16 %v334
    %v1605 = vunpack.c.h.b16 %v334
    %v1606 = vunpack.c.l.b16 %v335
    %v1607 = vunpack.c.h.b16 %v335
    %v1608 = vunpack.c.l.b16 %v336
    %v1609 = vunpack.c.h.b16 %v336
    %v1610 = vunpack.c.l.b16 %v337
    %v1611 = vunpack.c.h.b16 %v337
    %v1612 = vunpack.c.l.b16 %v338
    %v1613 = vunpack.c.h.b16 %v338
    %v1614 = vunpack.c.l.b16 %v339
    %v1615 = vunpack.c.h.b16 %v339
    %v1616 = vunpack.c.l.b16 %v340
    %v1617 = vunpack.c.h.b16 %v340
    %v1618 = vunpack.c.l.b16 %v341
    %v1619 = vunpack.c.h.b16 %v341
    %v1620 = vunpack.c.l.b16 %v342
    %v1621 = vunpack.c.h.b16 %v342
    %v1622 = vunpack.c.l.b16 %v343
    %v1623 = vunpack.c.h.b16 %v343
    %v1624 = vunpack.c.l.b16 %v344
    %v1625 = vunpack.c.h.b16 %v344
    %v1626 = vunpack.c.l.b16 %v345
    %v1627 = vunpack.c.h.b16 %v345
    %v1628 = vunpack.c.l.b16 %v346
    %v1629 = vunpack.c.h.b16 %v346
    %v1630 = vunpack.c.l.b16 %v347
    %v1631 = vunpack.c.h.b16 %v347
    %v1632 = vunpack.c.l.b16 %v348
    %v1633 = vunpack.c.h.b16 %v348
    %v1634 = vunpack.c.l.b16 %v349
    %v1635 = vunpack.c.h.b16 %v349
    %v1636 = vunpack.c.l.b16 %v350
    %v1637 = vunpack.c.h.b16 %v350
    %v1638 = vunpack.c.l.b16 %v351
    %v1639 = vunpack.c.h.b16 %v351
    %v1640 = vunpack.c.l.b16 %v352
    %v1641 = vunpack.c.h.b16 %v352
    %v1642 = vunpack.c.l.b16 %v353
    %v1643 = vunpack.c.h.b16 %v353
    %v1644 = vunpack.c.l.b16 %v354
    %v1645 = vunpack.c.h.b16 %v354
    %v1646 = vunpack.c.l.b16 %v355
    %v1647 = vunpack.c.h.b16 %v355
    %v1648 = vunpack.c.l.b16 %v356
    %v1649 = vunpack.c.h.b16 %v356
    %v1650 = vunpack.c.l.b16 %v357
    %v1651 = vunpack.c.h.b16 %v357
    %v1652 = vunpack.c.l.b16 %v358
    %v1653 = vunpack.c.h.b16 %v358
    %v1654 = vunpack.c.l.b16 %v359
    %v1655 = vunpack.c.h.b16 %v359
    %v1656 = vunpack.c.l.b16 %v360
    %v1657 = vunpack.c.h.b16 %v360
    %v1658 = vunpack.c.l.b16 %v361
    %v1659 = vunpack.c.h.b16 %v361
    %v1660 = vunpack.c.l.b16 %v362
    %v1661 = vunpack.c.h.b16 %v362
    %v1662 = vunpack.c.l.b16 %v363
    %v1663 = vunpack.c.h.b16 %v363
    %v1664 = vunpack.c.l.b16 %v364
    %v1665 = vunpack.c.h.b16 %v364
    %v1666 = vunpack.c.l.b16 %v365
    %v1667 = vunpack.c.h.b16 %v365
    %v1668 = vunpack.c.l.b16 %v366
    %v1669 = vunpack.c.h.b16 %v366
    %v1670 = vunpack.c.l.b16 %v367
    %v1671 = vunpack.c.h.b16 %v367
    %v1672 = vunpack.c.l.b16 %v368
    %v1673 = vunpack.c.h.b16 %v368
    %v1674 = vunpack.c.l.b16 %v369
    %v1675 = vunpack.c.h.b16 %v369
    %v1676 = vunpack.c.l.b16 %v370
    %v1677 = vunpack.c.h.b16 %v370
    %v1678 = vunpack.c.l.b16 %v371
    %v1679 = vunpack.c.h.b16 %v371
    %v1680 = vunpack.c.l.b16 %v372
    %v1681 = vunpack.c.h.b16 %v372
    %v1682 = vunpack.c.l.b16 %v373
    %v1683 = vunpack.c.h.b16 %v373
    %v1684 = vunpack.c.l.b16 %v374
    %v1685 = vunpack.c.h.b16 %v374
    %v1686 = vunpack.c.l.b16 %v375
    %v1687 = vunpack.c.h.b16 %v375
    %v1688 = vunpack.c.l.b16 %v376
    %v1689 = vunpack.c.h.b16 %v376
    %v1690 = vunpack.c.l.b16 %v377
    %v1691 = vunpack.c.h.b16 %v377
    %v1692 = vunpack.c.l.b16 %v378
    %v1693 = vunpack.c.h.b16 %v378
    %v1694 = vunpack.c.l.b16 %v379
    %v1695 = vunpack.c.h.b16 %v379
    %v1696 = vpack.c.b16 %v1132, %v1120
    %v1697 = vpack.c.b16 %v1133, %v1121
    %v1698 = vpack.c.b16 %v1134, %v1122
    %v1699 = vpack.c.b16 %v1135, %v1123
    %v1700 = vpack.c.b16 %v1136, %v1124
    %v1701 = vpack.c.b16 %v1137, %v1125
    %v1702 = vpack.c.b16 %v1138, %v1126
    %v1703 = vpack.c.b16 %v1139, %v1127
    %v1704 = vpack.c.b16 %v1140, %v1128
    %v1705 = vpack.c.b16 %v1141, %v1129
    %v1706 = vpack.c.b16 %v1142, %v1130
    %v1707 = vpack.c.b16 %v1143, %v1131
    %v1708 = vpack.c.b16 %v1156, %v1144
    %v1709 = vpack.c.b16 %v1157, %v1145
    %v1710 = vpack.c.b16 %v1158, %v1146
    %v1711 = vpack.c.b16 %v1159, %v1147
    %v1712 = vpack.c.b16 %v1160, %v1148
    %v1713 = vpack.c.b16 %v1161, %v1149
    %v1714 = vpack.c.b16 %v1162, %v1150
    %v1715 = vpack.c.b16 %v1163, %v1151
    %v1716 = vpack.c.b16 %v1164, %v1152
    %v1717 = vpack.c.b16 %v1165, %v1153
    %v1718 = vpack.c.b16 %v1166, %v1154
    %v1719 = vpack.c.b16 %v1167, %v1155
    %v1720 = vpack.c.b16 %v1180, %v1168
    %v1721 = vpack.c.b16 %v1181, %v1169
    %v1722 = vpack.c.b16 %v1182, %v1170
    %v1723 = vpack.c.b16 %v1183, %v1171
    %v1724 = vpack.c.b16 %v1184, %v1172
    %v1725 = vpack.c.b16 %v1185, %v1173
    %v1726 = vpack.c.b16 %v1186, %v1174
    %v1727 = vpack.c.b16 %v1187, %v1175
    %v1728 = vpack.c.b16 %v1188, %v1176
    %v1729 = vpack.c.b16 %v1189, %v1177
    %v1730 = vpack.c.b16 %v1190, %v1178
    %v1731 = vpack.c.b16 %v1191, %v1179
    %v1732 = vpack.c.b16 %v1204, %v1192
    %v1733 = vpack.c.b16 %v1205, %v1193
    %v1734 = vpack.c.b16 %v1206, %v1194
    %v1735 = vpack.c.b16 %v1207, %v1195
    %v1736 = vpack.c.b16 %v1208, %v1196
    %v1737 = vpack.c.b16 %v1209, %v1197
    %v1738 = vpack.c.b16 %v1210, %v1198
    %v1739 = vpack.c.b16 %v1211, %v1199
    %v1740 = vpack.c.b16 %v1212, %v1200
    %v1741 = vpack.c.b16 %v1213, %v1201
    %v1742 = vpack.c.b16 %v1214, %v1202
    %v1743 = vpack.c.b16 %v1215, %v1203
    %v1744 = vpack.c.b16 %v1228, %v1216
    %v1745 = vpack.c.b16 %v1229, %v1217
    %v1746 = vpack.c.b16 %v1230, %v1218
    %v1747 = vpack.c.b16 %v1231, %v1219
    %v1748 = vpack.c.b16 %v1232, %v1220
    %v1749 = vpack.c.b16 %v1233, %v1221
    %v1750 = vpack.c.b16 %v1234, %v1222
    %v1751 = vpack.c.b16 %v1235, %v1223
    %v1752 = vpack.c.b16 %v1236, %v1224
    %v1753 = vpack.c.b16 %v1237, %v1225
    %v1754 = vpack.c.b16 %v1238, %v1226
    %v1755 = vpack.c.b16 %v1239, %v1227
    %v1756 = vpack.c.b16 %v1252, %v1240
    %v1757 = vpack.c.b16 %v1253, %v1241
    %v1758 = vpack.c.b16 %v1254, %v1242
    %v1759 = vpack.c.b16 %v1255, %v1243
    %v1760 = vpack.c.b16 %v1256, %v1244
    %v1761 = vpack.c.b16 %v1257, %v1245
    %v1762 = vpack.c.b16 %v1258, %v1246
    %v1763 = vpack.c.b16 %v1259, %v1247
    %v1764 = vpack.c.b16 %v1260, %v1248
    %v1765 = vpack.c.b16 %v1261, %v1249
    %v1766 = vpack.c.b16 %v1262, %v1250
    %v1767 = vpack.c.b16 %v1263, %v1251
    %v1768 = vpack.c.b16 %v1276, %v1264
    %v1769 = vpack.c.b16 %v1277, %v1265
    %v1770 = vpack.c.b16 %v1278, %v1266
    %v1771 = vpack.c.b16 %v1279, %v1267
    %v1772 = vpack.c.b16 %v1280, %v1268
    %v1773 = vpack.c.b16 %v1281, %v1269
    %v1774 = vpack.c.b16 %v1282, %v1270
    %v1775 = vpack.c.b16 %v1283, %v1271
    %v1776 = vpack.c.b16 %v1284, %v1272
    %v1777 = vpack.c.b16 %v1285, %v1273
    %v1778 = vpack.c.b16 %v1286, %v1274
    %v1779 = vpack.c.b16 %v1287, %v1275
    %v1780 = vpack.c.b16 %v1300, %v1288
    %v1781 = vpack.c.b16 %v1301, %v1289
    %v1782 = vpack.c.b16 %v1302, %v1290
    %v1783 = vpack.c.b16 %v1303, %v1291
    %v1784 = vpack.c.b16 %v1304, %v1292
    %v1785 = vpack.c.b16 %v1305, %v1293
    %v1786 = vpack.c.b16 %v1306, %v1294
    %v1787 = vpack.c.b16 %v1307, %v1295
    %v1788 = vpack.c.b16 %v1308, %v1296
    %v1789 = vpack.c.b16 %v1309, %v1297
    %v1790 = vpack.c.b16 %v1310, %v1298
    %v1791 = vpack.c.b16 %v1311, %v1299
    %v1792 = vpack.c.b16 %v1324, %v1312
    %v1793 = vpack.c.b16 %v1325, %v1313
    %v1794 = vpack.c.b16 %v1326, %v1314
    %v1795 = vpack.c.b16 %v1327, %v1315
    %v1796 = vpack.c.b16 %v1328, %v1316
    %v1797 = vpack.c.b16 %v1329, %v1317
    %v1798 = vpack.c.b16 %v1330, %v1318
    %v1799 = vpack.c.b16 %v1331, %v1319
    %v1800 = vpack.c.b16 %v1332, %v1320
    %v1801 = vpack.c.b16 %v1333, %v1321
    %v1802 = vpack.c.b16 %v1334, %v1322
    %v1803 = vpack.c.b16 %v1335, %v1323
    %v1804 = vpack.c.b16 %v1348, %v1336
    %v1805 = vpack.c.b16 %v1349, %v1337
    %v1806 = vpack.c.b16 %v1350, %v1338
    %v1807 = vpack.c.b16 %v1351, %v1339
    %v1808 = vpack.c.b16 %v1352, %v1340
    %v1809 = vpack.c.b16 %v1353, %v1341
    %v1810 = vpack.c.b16 %v1354, %v1342
    %v1811 = vpack.c.b16 %v1355, %v1343
    %v1812 = vpack.c.b16 %v1356, %v1344
    %v1813 = vpack.c.b16 %v1357, %v1345
    %v1814 = vpack.c.b16 %v1358, %v1346
    %v1815 = vpack.c.b16 %v1359, %v1347
    %v1816 = vpack.c.b16 %v1372, %v1360
    %v1817 = vpack.c.b16 %v1373, %v1361
    %v1818 = vpack.c.b16 %v1374, %v1362
    %v1819 = vpack.c.b16 %v1375, %v1363
    %v1820 = vpack.c.b16 %v1376, %v1364
    %v1821 = vpack.c.b16 %v1377, %v1365
    %v1822 = vpack.c.b16 %v1378, %v1366
    %v1823 = vpack.c.b16 %v1379, %v1367
    %v1824 = vpack.c.b16 %v1380, %v1368
    %v1825 = vpack.c.b16 %v1381, %v1369
    %v1826 = vpack.c.b16 %v1382, %v1370
    %v1827 = vpack.c.b16 %v1383, %v1371
    %v1828 = vpack.c.b16 %v1396, %v1384
    %v1829 = vpack.c.b16 %v1397, %v1385
    %v1830 = vpack.c.b16 %v1398, %v1386
    %v1831 = vpack.c.b16 %v1399, %v1387
    %v1832 = vpack.c.b16 %v1400, %v1388
    %v1833 = vpack.c.b16 %v1401, %v1389
    %v1834 = vpack.c.b16 %v1402, %v1390
    %v1835 = vpack.c.b16 %v1403, %v1391
    %v1836 = vpack.c.b16 %v1404, %v1392
    %v1837 = vpack.c.b16 %v1405, %v1393
    %v1838 = vpack.c.b16 %v1406, %v1394
    %v1839 = vpack.c.b16 %v1407, %v1395
    %v1840 = vpack.c.b16 %v1420, %v1408
    %v1841 = vpack.c.b16 %v1421, %v1409
    %v1842 = vpack.c.b16 %v1422, %v1410
    %v1843 = vpack.c.b16 %v1423, %v1411
    %v1844 = vpack.c.b16 %v1424, %v1412
    %v1845 = vpack.c.b16 %v1425, %v1413
    %v1846 = vpack.c.b16 %v1426, %v1414
    %v1847 = vpack.c.b16 %v1427, %v1415
    %v1848 = vpack.c.b16 %v1428, %v1416
    %v1849 = vpack.c.b16 %v1429, %v1417
    %v1850 = vpack.c.b16 %v1430, %v1418
    %v1851 = vpack.c.b16 %v1431, %v1419
    %v1852 = vpack.c.b16 %v1444, %v1432
    %v1853 = vpack.c.b16 %v1445, %v1433
    %v1854 = vpack.c.b16 %v1446, %v1434
    %v1855 = vpack.c.b16 %v1447, %v1435
    %v1856 = vpack.c.b16 %v1448, %v1436
    %v1857 = vpack.c.b16 %v1449, %v1437
    %v1858 = vpack.c.b16 %v1450, %v1438
    %v1859 = vpack.c.b16 %v1451, %v1439
    %v1860 = vpack.c.b16 %v1452, %v1440
    %v1861 = vpack.c.b16 %v1453, %v1441
    %v1862 = vpack.c.b16 %v1454, %v1442
    %v1863 = vpack.c.b16 %v1455, %v1443
    %v1864 = vpack.c.b16 %v1468, %v1456
    %v1865 = vpack.c.b16 %v1469, %v1457
    %v1866 = vpack.c.b16 %v1470, %v1458
    %v1867 = vpack.c.b16 %v1471, %v1459
    %v1868 = vpack.c.b16 %v1472, %v1460
    %v1869 = vpack.c.b16 %v1473, %v1461
    %v1870 = vpack.c.b16 %v1474, %v1462
    %v1871 = vpack.c.b16 %v1475, %v1463
    %v1872 = vpack.c.b16 %v1476, %v1464
    %v1873 = vpack.c.b16 %v1477, %v1465
    %v1874 = vpack.c.b16 %v1478, %v1466
    %v1875 = vpack.c.b16 %v1479, %v1467
    %v1876 = vpack.c.b16 %v1492, %v1480
    %v1877 = vpack.c.b16 %v1493, %v1481
    %v1878 = vpack.c.b16 %v1494, %v1482
    %v1879 = vpack.c.b16 %v1495, %v1483
    %v1880 = vpack.c.b16 %v1496, %v1484
    %v1881 = vpack.c.b16 %v1497, %v1485
    %v1882 = vpack.c.b16 %v1498, %v1486
    %v1883 = vpack.c.b16 %v1499, %v1487
    %v1884 = vpack.c.b16 %v1500, %v1488
    %v1885 = vpack.c.b16 %v1501, %v1489
    %v1886 = vpack.c.b16 %v1502, %v1490
    %v1887 = vpack.c.b16 %v1503, %v1491
    %v1888 = vpack.c.b16 %v1516, %v1504
    %v1889 = vpack.c.b16 %v1517, %v1505
    %v1890 = vpack.c.b16 %v1518, %v1506
    %v1891 = vpack.c.b16 %v1519, %v1507
    %v1892 = vpack.c.b16 %v1520, %v1508
    %v1893 = vpack.c.b16 %v1521, %v1509
    %v1894 = vpack.c.b16 %v1522, %v1510
    %v1895 = vpack.c.b16 %v1523, %v1511
    %v1896 = vpack.c.b16 %v1524, %v1512
    %v1897 = vpack.c.b16 %v1525, %v1513
    %v1898 = vpack.c.b16 %v1526, %v1514
    %v1899 = vpack.c.b16 %v1527, %v1515
    %v1900 = vpack.c.b16 %v1540, %v1528
    %v1901 = vpack.c.b16 %v1541, %v1529
    %v1902 = vpack.c.b16 %v1542, %v1530
    %v1903 = vpack.c.b16 %v1543, %v1531
    %v1904 = vpack.c.b16 %v1544, %v1532
    %v1905 = vpack.c.b16 %v1545, %v1533
    %v1906 = vpack.c.b16 %v1546, %v1534
    %v1907 = vpack.c.b16 %v1547, %v1535
    %v1908 = vpack.c.b16 %v1548, %v1536
    %v1909 = vpack.c.b16 %v1549, %v1537
    %v1910 = vpack.c.b16 %v1550, %v1538
    %v1911 = vpack.c.b16 %v1551, %v1539
    %v1912 = vpack.c.b16 %v1564, %v1552
    %v1913 = vpack.c.b16 %v1565, %v1553
    %v1914 = vpack.c.b16 %v1566, %v1554
    %v1915 = vpack.c.b16 %v1567, %v1555
    %v1916 = vpack.c.b16 %v1568, %v1556
    %v1917 = vpack.c.b16 %v1569, %v1557
    %v1918 = vpack.c.b16 %v1570, %v1558
    %v1919 = vpack.c.b16 %v1571, %v1559
    %v1920 = vpack.c.b16 %v1572, %v1560
    %v1921 = vpack.c.b16 %v1573, %v1561
    %v1922 = vpack.c.b16 %v1574, %v1562
    %v1923 = vpack.c.b16 %v1575, %v1563
    %v1924 = vpack.c.b16 %v1588, %v1576
    %v1925 = vpack.c.b16 %v1589, %v1577
    %v1926 = vpack.c.b16 %v1590, %v1578
    %v1927 = vpack.c.b16 %v1591, %v1579
    %v1928 = vpack.c.b16 %v1592, %v1580
    %v1929 = vpack.c.b16 %v1593, %v1581
    %v1930 = vpack.c.b16 %v1594, %v1582
    %v1931 = vpack.c.b16 %v1595, %v1583
    %v1932 = vpack.c.b16 %v1596, %v1584
    %v1933 = vpack.c.b16 %v1597, %v1585
    %v1934 = vpack.c.b16 %v1598, %v1586
    %v1935 = vpack.c.b16 %v1599, %v1587
    %v1936 = vpack.c.b16 %v1612, %v1600
    %v1937 = vpack.c.b16 %v1613, %v1601
    %v1938 = vpack.c.b16 %v1614, %v1602
    %v1939 = vpack.c.b16 %v1615, %v1603
    %v1940 = vpack.c.b16 %v1616, %v1604
    %v1941 = vpack.c.b16 %v1617, %v1605
    %v1942 = vpack.c.b16 %v1618, %v1606
    %v1943 = vpack.c.b16 %v1619, %v1607
    %v1944 = vpack.c.b16 %v1620, %v1608
    %v1945 = vpack.c.b16 %v1621, %v1609
    %v1946 = vpack.c.b16 %v1622, %v1610
    %v1947 = vpack.c.b16 %v1623, %v1611
    %v1948 = vpack.c.b16 %v1636, %v1624
    %v1949 = vpack.c.b16 %v1637, %v1625
    %v1950 = vpack.c.b16 %v1638, %v1626
    %v1951 = vpack.c.b16 %v1639, %v1627
    %v1952 = vpack.c.b16 %v1640, %v1628
    %v1953 = vpack.c.b16 %v1641, %v1629
    %v1954 = vpack.c.b16 %v1642, %v1630
    %v1955 = vpack.c.b16 %v1643, %v1631
    %v1956 = vpack.c.b16 %v1644, %v1632
    %v1957 = vpack.c.b16 %v1645, %v1633
    %v1958 = vpack.c.b16 %v1646, %v1634
    %v1959 = vpack.c.b16 %v1647, %v1635
    %v1960 = vpack.c.b16 %v1660, %v1648
    %v1961 = vpack.c.b16 %v1661, %v1649
    %v1962 = vpack.c.b16 %v1662, %v1650
    %v1963 = vpack.c.b16 %v1663, %v1651
    %v1964 = vpack.c.b16 %v1664, %v1652
    %v1965 = vpack.c.b16 %v1665, %v1653
    %v1966 = vpack.c.b16 %v1666, %v1654
    %v1967 = vpack.c.b16 %v1667, %v1655
    %v1968 = vpack.c.b16 %v1668, %v1656
    %v1969 = vpack.c.b16 %v1669, %v1657
    %v1970 = vpack.c.b16 %v1670, %v1658
    %v1971 = vpack.c.b16 %v1671, %v1659
    %v1972 = vpack.c.b16 %v1684, %v1672
    %v1973 = vpack.c.b16 %v1685, %v1673
    %v1974 = vpack.c.b16 %v1686, %v1674
    %v1975 = vpack.c.b16 %v1687, %v1675
    %v1976 = vpack.c.b16 %v1688, %v1676
    %v1977 = vpack.c.b16 %v1689, %v1677
    %v1978 = vpack.c.b16 %v1690, %v1678
    %v1979 = vpack.c.b16 %v1691, %v1679
    %v1980 = vpack.c.b16 %v1692, %v1680
    %v1981 = vpack.c.b16 %v1693, %v1681
    %v1982 = vpack.c.b16 %v1694, %v1682
    %v1983 = vpack.c.b16 %v1695, %v1683
    %2272 = vmatprep.subr.bf16.mxu0 %v1781
    %2273 = vmatpush1.bf16.msra.mxu0 %v1780
    %2274 = vmatprep.subr.bf16.mxu0 %v1769
    %2275 = vmatpush1.bf16.msra.mxu0 %v1768
    %2276 = vmatprep.subr.bf16.mxu0 %v1757
    %2277 = vmatpush1.bf16.msra.mxu0 %v1756
    %2278 = vmatprep.subr.bf16.mxu0 %v1745
    %2279 = vmatpush1.bf16.msra.mxu0 %v1744
    %2280 = vmatprep.subr.bf16.mxu0 %v1733
    %2281 = vmatpush1.bf16.msra.mxu0 %v1732
    %2282 = vmatprep.subr.bf16.mxu0 %v1721
    %2283 = vmatpush1.bf16.msra.mxu0 %v1720
    %2284 = vmatprep.subr.bf16.mxu0 %v1709
    %2285 = vmatpush1.bf16.msra.mxu0 %v1708
    %2286 = vmatprep.subr.bf16.mxu0 %v1697
    %2287 = vmatpush1.bf16.msra.mxu0 %v1696
    %2288 = vmatprep.subr.bf16.mxu0 %v1877
    %2289 = vmatpush2.bf16.msra.mxu0 %v1876
    %2290 = vmatprep.subr.bf16.mxu0 %v1865
    %2291 = vmatpush2.bf16.msra.mxu0 %v1864
    %2292 = vmatprep.subr.bf16.mxu0 %v1853
    %2293 = vmatpush2.bf16.msra.mxu0 %v1852
    %2294 = vmatprep.subr.bf16.mxu0 %v1841
    %2295 = vmatpush2.bf16.msra.mxu0 %v1840
    %2296 = vmatprep.subr.bf16.mxu0 %v1829
    %2297 = vmatpush2.bf16.msra.mxu0 %v1828
    %2298 = vmatprep.subr.bf16.mxu0 %v1817
    %2299 = vmatpush2.bf16.msra.mxu0 %v1816
    %2300 = vmatprep.subr.bf16.mxu0 %v1805
    %2301 = vmatpush2.bf16.msra.mxu0 %v1804
    %2302 = vmatprep.subr.bf16.mxu0 %v1793
    %2303 = vmatpush2.bf16.msra.mxu0 %v1792
    %2304 = vmatprep.mubr.bf16.mxu0 %v768
    %2305 = vmatmul.mubr.bf16.gmra.mxu0 %v767
    %v2306 = vpop.f32.mrf.mxu0
    %v2307 = vadd.f32 %v775, %v2306
    %v2308 = vpop.f32.mrf.mxu0
    %v2309 = vadd.f32 %v779, %v2308
    %v2310 = vpop.f32.mrf.mxu0
    %v2311 = vadd.f32 %v775, %v2310
    %v2312 = vpop.f32.mrf.mxu0
    %v2313 = vadd.f32 %v779, %v2312
    %2314 = vdwg.mxu0
    %2315 = vmatprep.subr.bf16.mxu0 %v1973
    %2316 = vmatpush1.bf16.msra.mxu0 %v1972
    %2317 = vmatprep.subr.bf16.mxu0 %v1961
    %2318 = vmatpush1.bf16.msra.mxu0 %v1960
    %2319 = vmatprep.subr.bf16.mxu0 %v1949
    %2320 = vmatpush1.bf16.msra.mxu0 %v1948
    %2321 = vmatprep.subr.bf16.mxu0 %v1937
    %2322 = vmatpush1.bf16.msra.mxu0 %v1936
    %2323 = vmatprep.subr.bf16.mxu0 %v1925
    %2324 = vmatpush1.bf16.msra.mxu0 %v1924
    %2325 = vmatprep.subr.bf16.mxu0 %v1913
    %2326 = vmatpush1.bf16.msra.mxu0 %v1912
    %2327 = vmatprep.subr.bf16.mxu0 %v1901
    %2328 = vmatpush1.bf16.msra.mxu0 %v1900
    %2329 = vmatprep.subr.bf16.mxu0 %v1889
    %2330 = vmatpush1.bf16.msra.mxu0 %v1888
    %2331 = vmatprep.subr.bf16.mxu0 0
    %2332 = vmatpush2.bf16.msra.mxu0 0
    %2333 = vmatprep.subr.bf16.mxu0 0
    %2334 = vmatpush2.bf16.msra.mxu0 0
    %2335 = vmatprep.subr.bf16.mxu0 0
    %2336 = vmatpush2.bf16.msra.mxu0 0
    %2337 = vmatprep.subr.bf16.mxu0 0
    %2338 = vmatpush2.bf16.msra.mxu0 0
    %2339 = vmatprep.subr.bf16.mxu0 0
    %2340 = vmatpush2.bf16.msra.mxu0 0
    %2341 = vmatprep.subr.bf16.mxu0 0
    %2342 = vmatpush2.bf16.msra.mxu0 0
    %2343 = vmatprep.subr.bf16.mxu0 0
    %2344 = vmatpush2.bf16.msra.mxu0 0
    %2345 = vmatprep.subr.bf16.mxu0 0
    %2346 = vmatpush2.bf16.msra.mxu0 0
    %2347 = vmatprep.mubr.bf16.mxu0 0
    %2348 = vmatmul.mubr.bf16.gmra.mxu0 %v769
    %v2349 = vpop.f32.mrf.mxu0
    %v2350 = vadd.f32 %v2307, %v2349
    %v2351 = vpop.f32.mrf.mxu0
    %v2352 = vadd.f32 %v2309, %v2351
    %v2353 = vpop.f32.mrf.mxu0
    %v2354 = vadd.f32 %v2311, %v2353
    %v2355 = vpop.f32.mrf.mxu0
    %v2356 = vadd.f32 %v2313, %v2355
    %2357 = vdwg.mxu0
    %2358 = vmatprep.subr.bf16.mxu0 %v1783
    %2359 = vmatpush1.bf16.msra.mxu0 %v1782
    %2360 = vmatprep.subr.bf16.mxu0 %v1771
    %2361 = vmatpush1.bf16.msra.mxu0 %v1770
    %2362 = vmatprep.subr.bf16.mxu0 %v1759
    %2363 = vmatpush1.bf16.msra.mxu0 %v1758
    %2364 = vmatprep.subr.bf16.mxu0 %v1747
    %2365 = vmatpush1.bf16.msra.mxu0 %v1746
    %2366 = vmatprep.subr.bf16.mxu0 %v1735
    %2367 = vmatpush1.bf16.msra.mxu0 %v1734
    %2368 = vmatprep.subr.bf16.mxu0 %v1723
    %2369 = vmatpush1.bf16.msra.mxu0 %v1722
    %2370 = vmatprep.subr.bf16.mxu0 %v1711
    %2371 = vmatpush1.bf16.msra.mxu0 %v1710
    %2372 = vmatprep.subr.bf16.mxu0 %v1699
    %2373 = vmatpush1.bf16.msra.mxu0 %v1698
    %2374 = vmatprep.subr.bf16.mxu0 %v1879
    %2375 = vmatpush2.bf16.msra.mxu0 %v1878
    %2376 = vmatprep.subr.bf16.mxu0 %v1867
    %2377 = vmatpush2.bf16.msra.mxu0 %v1866
    %2378 = vmatprep.subr.bf16.mxu0 %v1855
    %2379 = vmatpush2.bf16.msra.mxu0 %v1854
    %2380 = vmatprep.subr.bf16.mxu0 %v1843
    %2381 = vmatpush2.bf16.msra.mxu0 %v1842
    %2382 = vmatprep.subr.bf16.mxu0 %v1831
    %2383 = vmatpush2.bf16.msra.mxu0 %v1830
    %2384 = vmatprep.subr.bf16.mxu0 %v1819
    %2385 = vmatpush2.bf16.msra.mxu0 %v1818
    %2386 = vmatprep.subr.bf16.mxu0 %v1807
    %2387 = vmatpush2.bf16.msra.mxu0 %v1806
    %2388 = vmatprep.subr.bf16.mxu0 %v1795
    %2389 = vmatpush2.bf16.msra.mxu0 %v1794
    %2390 = vmatprep.mubr.bf16.mxu0 %v768
    %2391 = vmatmul.mubr.bf16.gmra.mxu0 %v767
    %v2392 = vpop.f32.mrf.mxu0
    %v2393 = vadd.f32 %v783, %v2392
    %v2394 = vpop.f32.mrf.mxu0
    %v2395 = vadd.f32 %v787, %v2394
    %v2396 = vpop.f32.mrf.mxu0
    %v2397 = vadd.f32 %v783, %v2396
    %v2398 = vpop.f32.mrf.mxu0
    %v2399 = vadd.f32 %v787, %v2398
    %2400 = vdwg.mxu0
    %2401 = vmatprep.subr.bf16.mxu0 %v1975
    %2402 = vmatpush1.bf16.msra.mxu0 %v1974
    %2403 = vmatprep.subr.bf16.mxu0 %v1963
    %2404 = vmatpush1.bf16.msra.mxu0 %v1962
    %2405 = vmatprep.subr.bf16.mxu0 %v1951
    %2406 = vmatpush1.bf16.msra.mxu0 %v1950
    %2407 = vmatprep.subr.bf16.mxu0 %v1939
    %2408 = vmatpush1.bf16.msra.mxu0 %v1938
    %2409 = vmatprep.subr.bf16.mxu0 %v1927
    %2410 = vmatpush1.bf16.msra.mxu0 %v1926
    %2411 = vmatprep.subr.bf16.mxu0 %v1915
    %2412 = vmatpush1.bf16.msra.mxu0 %v1914
    %2413 = vmatprep.subr.bf16.mxu0 %v1903
    %2414 = vmatpush1.bf16.msra.mxu0 %v1902
    %2415 = vmatprep.subr.bf16.mxu0 %v1891
    %2416 = vmatpush1.bf16.msra.mxu0 %v1890
    %2417 = vmatprep.subr.bf16.mxu0 0
    %2418 = vmatpush2.bf16.msra.mxu0 0
    %2419 = vmatprep.subr.bf16.mxu0 0
    %2420 = vmatpush2.bf16.msra.mxu0 0
    %2421 = vmatprep.subr.bf16.mxu0 0
    %2422 = vmatpush2.bf16.msra.mxu0 0
    %2423 = vmatprep.subr.bf16.mxu0 0
    %2424 = vmatpush2.bf16.msra.mxu0 0
    %2425 = vmatprep.subr.bf16.mxu0 0
    %2426 = vmatpush2.bf16.msra.mxu0 0
    %2427 = vmatprep.subr.bf16.mxu0 0
    %2428 = vmatpush2.bf16.msra.mxu0 0
    %2429 = vmatprep.subr.bf16.mxu0 0
    %2430 = vmatpush2.bf16.msra.mxu0 0
    %2431 = vmatprep.subr.bf16.mxu0 0
    %2432 = vmatpush2.bf16.msra.mxu0 0
    %2433 = vmatprep.mubr.bf16.mxu0 0
    %2434 = vmatmul.mubr.bf16.gmra.mxu0 %v769
    %v2435 = vpop.f32.mrf.mxu0
    %v2436 = vadd.f32 %v2393, %v2435
    %v2437 = vpop.f32.mrf.mxu0
    %v2438 = vadd.f32 %v2395, %v2437
    %v2439 = vpop.f32.mrf.mxu0
    %v2440 = vadd.f32 %v2397, %v2439
    %v2441 = vpop.f32.mrf.mxu0
    %v2442 = vadd.f32 %v2399, %v2441
    %2443 = vdwg.mxu0
    %2444 = vmatprep.subr.bf16.mxu0 %v1785
    %2445 = vmatpush1.bf16.msra.mxu0 %v1784
    %2446 = vmatprep.subr.bf16.mxu0 %v1773
    %2447 = vmatpush1.bf16.msra.mxu0 %v1772
    %2448 = vmatprep.subr.bf16.mxu0 %v1761
    %2449 = vmatpush1.bf16.msra.mxu0 %v1760
    %2450 = vmatprep.subr.bf16.mxu0 %v1749
    %2451 = vmatpush1.bf16.msra.mxu0 %v1748
    %2452 = vmatprep.subr.bf16.mxu0 %v1737
    %2453 = vmatpush1.bf16.msra.mxu0 %v1736
    %2454 = vmatprep.subr.bf16.mxu0 %v1725
    %2455 = vmatpush1.bf16.msra.mxu0 %v1724
    %2456 = vmatprep.subr.bf16.mxu0 %v1713
    %2457 = vmatpush1.bf16.msra.mxu0 %v1712
    %2458 = vmatprep.subr.bf16.mxu0 %v1701
    %2459 = vmatpush1.bf16.msra.mxu0 %v1700
    %2460 = vmatprep.subr.bf16.mxu0 %v1881
    %2461 = vmatpush2.bf16.msra.mxu0 %v1880
    %2462 = vmatprep.subr.bf16.mxu0 %v1869
    %2463 = vmatpush2.bf16.msra.mxu0 %v1868
    %2464 = vmatprep.subr.bf16.mxu0 %v1857
    %2465 = vmatpush2.bf16.msra.mxu0 %v1856
    %2466 = vmatprep.subr.bf16.mxu0 %v1845
    %2467 = vmatpush2.bf16.msra.mxu0 %v1844
    %2468 = vmatprep.subr.bf16.mxu0 %v1833
    %2469 = vmatpush2.bf16.msra.mxu0 %v1832
    %2470 = vmatprep.subr.bf16.mxu0 %v1821
    %2471 = vmatpush2.bf16.msra.mxu0 %v1820
    %2472 = vmatprep.subr.bf16.mxu0 %v1809
    %2473 = vmatpush2.bf16.msra.mxu0 %v1808
    %2474 = vmatprep.subr.bf16.mxu0 %v1797
    %2475 = vmatpush2.bf16.msra.mxu0 %v1796
    %2476 = vmatprep.mubr.bf16.mxu0 %v768
    %2477 = vmatmul.mubr.bf16.gmra.mxu0 %v767
    %v2478 = vpop.f32.mrf.mxu0
    %v2479 = vadd.f32 %v791, %v2478
    %v2480 = vpop.f32.mrf.mxu0
    %v2481 = vadd.f32 %v795, %v2480
    %v2482 = vpop.f32.mrf.mxu0
    %v2483 = vadd.f32 %v791, %v2482
    %v2484 = vpop.f32.mrf.mxu0
    %v2485 = vadd.f32 %v795, %v2484
    %2486 = vdwg.mxu0
    %2487 = vmatprep.subr.bf16.mxu0 %v1977
    %2488 = vmatpush1.bf16.msra.mxu0 %v1976
    %2489 = vmatprep.subr.bf16.mxu0 %v1965
    %2490 = vmatpush1.bf16.msra.mxu0 %v1964
    %2491 = vmatprep.subr.bf16.mxu0 %v1953
    %2492 = vmatpush1.bf16.msra.mxu0 %v1952
    %2493 = vmatprep.subr.bf16.mxu0 %v1941
    %2494 = vmatpush1.bf16.msra.mxu0 %v1940
    %2495 = vmatprep.subr.bf16.mxu0 %v1929
    %2496 = vmatpush1.bf16.msra.mxu0 %v1928
    %2497 = vmatprep.subr.bf16.mxu0 %v1917
    %2498 = vmatpush1.bf16.msra.mxu0 %v1916
    %2499 = vmatprep.subr.bf16.mxu0 %v1905
    %2500 = vmatpush1.bf16.msra.mxu0 %v1904
    %2501 = vmatprep.subr.bf16.mxu0 %v1893
    %2502 = vmatpush1.bf16.msra.mxu0 %v1892
    %2503 = vmatprep.subr.bf16.mxu0 0
    %2504 = vmatpush2.bf16.msra.mxu0 0
    %2505 = vmatprep.subr.bf16.mxu0 0
    %2506 = vmatpush2.bf16.msra.mxu0 0
    %2507 = vmatprep.subr.bf16.mxu0 0
    %2508 = vmatpush2.bf16.msra.mxu0 0
    %2509 = vmatprep.subr.bf16.mxu0 0
    %2510 = vmatpush2.bf16.msra.mxu0 0
    %2511 = vmatprep.subr.bf16.mxu0 0
    %2512 = vmatpush2.bf16.msra.mxu0 0
    %2513 = vmatprep.subr.bf16.mxu0 0
    %2514 = vmatpush2.bf16.msra.mxu0 0
    %2515 = vmatprep.subr.bf16.mxu0 0
    %2516 = vmatpush2.bf16.msra.mxu0 0
    %2517 = vmatprep.subr.bf16.mxu0 0
    %2518 = vmatpush2.bf16.msra.mxu0 0
    %2519 = vmatprep.mubr.bf16.mxu0 0
    %2520 = vmatmul.mubr.bf16.gmra.mxu0 %v769
    %v2521 = vpop.f32.mrf.mxu0
    %v2522 = vadd.f32 %v2479, %v2521
    %v2523 = vpop.f32.mrf.mxu0
    %v2524 = vadd.f32 %v2481, %v2523
    %v2525 = vpop.f32.mrf.mxu0
    %v2526 = vadd.f32 %v2483, %v2525
    %v2527 = vpop.f32.mrf.mxu0
    %v2528 = vadd.f32 %v2485, %v2527
    %2529 = vdwg.mxu0
    %2530 = vmatprep.subr.bf16.mxu0 %v1787
    %2531 = vmatpush1.bf16.msra.mxu0 %v1786
    %2532 = vmatprep.subr.bf16.mxu0 %v1775
    %2533 = vmatpush1.bf16.msra.mxu0 %v1774
    %2534 = vmatprep.subr.bf16.mxu0 %v1763
    %2535 = vmatpush1.bf16.msra.mxu0 %v1762
    %2536 = vmatprep.subr.bf16.mxu0 %v1751
    %2537 = vmatpush1.bf16.msra.mxu0 %v1750
    %2538 = vmatprep.subr.bf16.mxu0 %v1739
    %2539 = vmatpush1.bf16.msra.mxu0 %v1738
    %2540 = vmatprep.subr.bf16.mxu0 %v1727
    %2541 = vmatpush1.bf16.msra.mxu0 %v1726
    %2542 = vmatprep.subr.bf16.mxu0 %v1715
    %2543 = vmatpush1.bf16.msra.mxu0 %v1714
    %2544 = vmatprep.subr.bf16.mxu0 %v1703
    %2545 = vmatpush1.bf16.msra.mxu0 %v1702
    %2546 = vmatprep.subr.bf16.mxu0 %v1883
    %2547 = vmatpush2.bf16.msra.mxu0 %v1882
    %2548 = vmatprep.subr.bf16.mxu0 %v1871
    %2549 = vmatpush2.bf16.msra.mxu0 %v1870
    %2550 = vmatprep.subr.bf16.mxu0 %v1859
    %2551 = vmatpush2.bf16.msra.mxu0 %v1858
    %2552 = vmatprep.subr.bf16.mxu0 %v1847
    %2553 = vmatpush2.bf16.msra.mxu0 %v1846
    %2554 = vmatprep.subr.bf16.mxu0 %v1835
    %2555 = vmatpush2.bf16.msra.mxu0 %v1834
    %2556 = vmatprep.subr.bf16.mxu0 %v1823
    %2557 = vmatpush2.bf16.msra.mxu0 %v1822
    %2558 = vmatprep.subr.bf16.mxu0 %v1811
    %2559 = vmatpush2.bf16.msra.mxu0 %v1810
    %2560 = vmatprep.subr.bf16.mxu0 %v1799
    %2561 = vmatpush2.bf16.msra.mxu0 %v1798
    %2562 = vmatprep.mubr.bf16.mxu0 %v768
    %2563 = vmatmul.mubr.bf16.gmra.mxu0 %v767
    %v2564 = vpop.f32.mrf.mxu0
    %v2565 = vadd.f32 %v799, %v2564
    %v2566 = vpop.f32.mrf.mxu0
    %v2567 = vadd.f32 %v803, %v2566
    %v2568 = vpop.f32.mrf.mxu0
    %v2569 = vadd.f32 %v799, %v2568
    %v2570 = vpop.f32.mrf.mxu0
    %v2571 = vadd.f32 %v803, %v2570
    %2572 = vdwg.mxu0
    %2573 = vmatprep.subr.bf16.mxu0 %v1979
    %2574 = vmatpush1.bf16.msra.mxu0 %v1978
    %2575 = vmatprep.subr.bf16.mxu0 %v1967
    %2576 = vmatpush1.bf16.msra.mxu0 %v1966
    %2577 = vmatprep.subr.bf16.mxu0 %v1955
    %2578 = vmatpush1.bf16.msra.mxu0 %v1954
    %2579 = vmatprep.subr.bf16.mxu0 %v1943
    %2580 = vmatpush1.bf16.msra.mxu0 %v1942
    %2581 = vmatprep.subr.bf16.mxu0 %v1931
    %2582 = vmatpush1.bf16.msra.mxu0 %v1930
    %2583 = vmatprep.subr.bf16.mxu0 %v1919
    %2584 = vmatpush1.bf16.msra.mxu0 %v1918
    %2585 = vmatprep.subr.bf16.mxu0 %v1907
    %2586 = vmatpush1.bf16.msra.mxu0 %v1906
    %2587 = vmatprep.subr.bf16.mxu0 %v1895
    %2588 = vmatpush1.bf16.msra.mxu0 %v1894
    %2589 = vmatprep.subr.bf16.mxu0 0
    %2590 = vmatpush2.bf16.msra.mxu0 0
    %2591 = vmatprep.subr.bf16.mxu0 0
    %2592 = vmatpush2.bf16.msra.mxu0 0
    %2593 = vmatprep.subr.bf16.mxu0 0
    %2594 = vmatpush2.bf16.msra.mxu0 0
    %2595 = vmatprep.subr.bf16.mxu0 0
    %2596 = vmatpush2.bf16.msra.mxu0 0
    %2597 = vmatprep.subr.bf16.mxu0 0
    %2598 = vmatpush2.bf16.msra.mxu0 0
    %2599 = vmatprep.subr.bf16.mxu0 0
    %2600 = vmatpush2.bf16.msra.mxu0 0
    %2601 = vmatprep.subr.bf16.mxu0 0
    %2602 = vmatpush2.bf16.msra.mxu0 0
    %2603 = vmatprep.subr.bf16.mxu0 0
    %2604 = vmatpush2.bf16.msra.mxu0 0
    %2605 = vmatprep.mubr.bf16.mxu0 0
    %2606 = vmatmul.mubr.bf16.gmra.mxu0 %v769
    %v2607 = vpop.f32.mrf.mxu0
    %v2608 = vadd.f32 %v2565, %v2607
    %v2609 = vpop.f32.mrf.mxu0
    %v2610 = vadd.f32 %v2567, %v2609
    %v2611 = vpop.f32.mrf.mxu0
    %v2612 = vadd.f32 %v2569, %v2611
    %v2613 = vpop.f32.mrf.mxu0
    %v2614 = vadd.f32 %v2571, %v2613
    %2615 = vdwg.mxu0
    %2616 = vmatprep.subr.bf16.mxu0 %v1789
    %2617 = vmatpush1.bf16.msra.mxu0 %v1788
    %2618 = vmatprep.subr.bf16.mxu0 %v1777
    %2619 = vmatpush1.bf16.msra.mxu0 %v1776
    %2620 = vmatprep.subr.bf16.mxu0 %v1765
    %2621 = vmatpush1.bf16.msra.mxu0 %v1764
    %2622 = vmatprep.subr.bf16.mxu0 %v1753
    %2623 = vmatpush1.bf16.msra.mxu0 %v1752
    %2624 = vmatprep.subr.bf16.mxu0 %v1741
    %2625 = vmatpush1.bf16.msra.mxu0 %v1740
    %2626 = vmatprep.subr.bf16.mxu0 %v1729
    %2627 = vmatpush1.bf16.msra.mxu0 %v1728
    %2628 = vmatprep.subr.bf16.mxu0 %v1717
    %2629 = vmatpush1.bf16.msra.mxu0 %v1716
    %2630 = vmatprep.subr.bf16.mxu0 %v1705
    %2631 = vmatpush1.bf16.msra.mxu0 %v1704
    %2632 = vmatprep.subr.bf16.mxu0 %v1885
    %2633 = vmatpush2.bf16.msra.mxu0 %v1884
    %2634 = vmatprep.subr.bf16.mxu0 %v1873
    %2635 = vmatpush2.bf16.msra.mxu0 %v1872
    %2636 = vmatprep.subr.bf16.mxu0 %v1861
    %2637 = vmatpush2.bf16.msra.mxu0 %v1860
    %2638 = vmatprep.subr.bf16.mxu0 %v1849
    %2639 = vmatpush2.bf16.msra.mxu0 %v1848
    %2640 = vmatprep.subr.bf16.mxu0 %v1837
    %2641 = vmatpush2.bf16.msra.mxu0 %v1836
    %2642 = vmatprep.subr.bf16.mxu0 %v1825
    %2643 = vmatpush2.bf16.msra.mxu0 %v1824
    %2644 = vmatprep.subr.bf16.mxu0 %v1813
    %2645 = vmatpush2.bf16.msra.mxu0 %v1812
    %2646 = vmatprep.subr.bf16.mxu0 %v1801
    %2647 = vmatpush2.bf16.msra.mxu0 %v1800
    %2648 = vmatprep.mubr.bf16.mxu0 %v768
    %2649 = vmatmul.mubr.bf16.gmra.mxu0 %v767
    %v2650 = vpop.f32.mrf.mxu0
    %v2651 = vadd.f32 %v807, %v2650
    %v2652 = vpop.f32.mrf.mxu0
    %v2653 = vadd.f32 %v811, %v2652
    %v2654 = vpop.f32.mrf.mxu0
    %v2655 = vadd.f32 %v807, %v2654
    %v2656 = vpop.f32.mrf.mxu0
    %v2657 = vadd.f32 %v811, %v2656
    %2658 = vdwg.mxu0
    %2659 = vmatprep.subr.bf16.mxu0 %v1981
    %2660 = vmatpush1.bf16.msra.mxu0 %v1980
    %2661 = vmatprep.subr.bf16.mxu0 %v1969
    %2662 = vmatpush1.bf16.msra.mxu0 %v1968
    %2663 = vmatprep.subr.bf16.mxu0 %v1957
    %2664 = vmatpush1.bf16.msra.mxu0 %v1956
    %2665 = vmatprep.subr.bf16.mxu0 %v1945
    %2666 = vmatpush1.bf16.msra.mxu0 %v1944
    %2667 = vmatprep.subr.bf16.mxu0 %v1933
    %2668 = vmatpush1.bf16.msra.mxu0 %v1932
    %2669 = vmatprep.subr.bf16.mxu0 %v1921
    %2670 = vmatpush1.bf16.msra.mxu0 %v1920
    %2671 = vmatprep.subr.bf16.mxu0 %v1909
    %2672 = vmatpush1.bf16.msra.mxu0 %v1908
    %2673 = vmatprep.subr.bf16.mxu0 %v1897
    %2674 = vmatpush1.bf16.msra.mxu0 %v1896
    %2675 = vmatprep.subr.bf16.mxu0 0
    %2676 = vmatpush2.bf16.msra.mxu0 0
    %2677 = vmatprep.subr.bf16.mxu0 0
    %2678 = vmatpush2.bf16.msra.mxu0 0
    %2679 = vmatprep.subr.bf16.mxu0 0
    %2680 = vmatpush2.bf16.msra.mxu0 0
    %2681 = vmatprep.subr.bf16.mxu0 0
    %2682 = vmatpush2.bf16.msra.mxu0 0
    %2683 = vmatprep.subr.bf16.mxu0 0
    %2684 = vmatpush2.bf16.msra.mxu0 0
    %2685 = vmatprep.subr.bf16.mxu0 0
    %2686 = vmatpush2.bf16.msra.mxu0 0
    %2687 = vmatprep.subr.bf16.mxu0 0
    %2688 = vmatpush2.bf16.msra.mxu0 0
    %2689 = vmatprep.subr.bf16.mxu0 0
    %2690 = vmatpush2.bf16.msra.mxu0 0
    %2691 = vmatprep.mubr.bf16.mxu0 0
    %2692 = vmatmul.mubr.bf16.gmra.mxu0 %v769
    %v2693 = vpop.f32.mrf.mxu0
    %v2694 = vadd.f32 %v2651, %v2693
    %v2695 = vpop.f32.mrf.mxu0
    %v2696 = vadd.f32 %v2653, %v2695
    %v2697 = vpop.f32.mrf.mxu0
    %v2698 = vadd.f32 %v2655, %v2697
    %v2699 = vpop.f32.mrf.mxu0
    %v2700 = vadd.f32 %v2657, %v2699
    %2701 = vdwg.mxu0
    %2702 = vmatprep.subr.bf16.mxu0 %v1791
    %2703 = vmatpush1.bf16.msra.mxu0 %v1790
    %2704 = vmatprep.subr.bf16.mxu0 %v1779
    %2705 = vmatpush1.bf16.msra.mxu0 %v1778
    %2706 = vmatprep.subr.bf16.mxu0 %v1767
    %2707 = vmatpush1.bf16.msra.mxu0 %v1766
    %2708 = vmatprep.subr.bf16.mxu0 %v1755
    %2709 = vmatpush1.bf16.msra.mxu0 %v1754
    %2710 = vmatprep.subr.bf16.mxu0 %v1743
    %2711 = vmatpush1.bf16.msra.mxu0 %v1742
    %2712 = vmatprep.subr.bf16.mxu0 %v1731
    %2713 = vmatpush1.bf16.msra.mxu0 %v1730
    %2714 = vmatprep.subr.bf16.mxu0 %v1719
    %2715 = vmatpush1.bf16.msra.mxu0 %v1718
    %2716 = vmatprep.subr.bf16.mxu0 %v1707
    %2717 = vmatpush1.bf16.msra.mxu0 %v1706
    %2718 = vmatprep.subr.bf16.mxu0 %v1887
    %2719 = vmatpush2.bf16.msra.mxu0 %v1886
    %2720 = vmatprep.subr.bf16.mxu0 %v1875
    %2721 = vmatpush2.bf16.msra.mxu0 %v1874
    %2722 = vmatprep.subr.bf16.mxu0 %v1863
    %2723 = vmatpush2.bf16.msra.mxu0 %v1862
    %2724 = vmatprep.subr.bf16.mxu0 %v1851
    %2725 = vmatpush2.bf16.msra.mxu0 %v1850
    %2726 = vmatprep.subr.bf16.mxu0 %v1839
    %2727 = vmatpush2.bf16.msra.mxu0 %v1838
    %2728 = vmatprep.subr.bf16.mxu0 %v1827
    %2729 = vmatpush2.bf16.msra.mxu0 %v1826
    %2730 = vmatprep.subr.bf16.mxu0 %v1815
    %2731 = vmatpush2.bf16.msra.mxu0 %v1814
    %2732 = vmatprep.subr.bf16.mxu0 %v1803
    %2733 = vmatpush2.bf16.msra.mxu0 %v1802
    %2734 = vmatprep.mubr.bf16.mxu0 %v768
    %2735 = vmatmul.mubr.bf16.gmra.mxu0 %v767
    %v2736 = vpop.f32.mrf.mxu0
    %v2737 = vadd.f32 %v815, %v2736
    %v2738 = vpop.f32.mrf.mxu0
    %v2739 = vadd.f32 %v819, %v2738
    %v2740 = vpop.f32.mrf.mxu0
    %v2741 = vadd.f32 %v815, %v2740
    %v2742 = vpop.f32.mrf.mxu0
    %v2743 = vadd.f32 %v819, %v2742
    %2744 = vdwg.mxu0
    %2745 = vmatprep.subr.bf16.mxu0 %v1983
    %2746 = vmatpush1.bf16.msra.mxu0 %v1982
    %2747 = vmatprep.subr.bf16.mxu0 %v1971
    %2748 = vmatpush1.bf16.msra.mxu0 %v1970
    %2749 = vmatprep.subr.bf16.mxu0 %v1959
    %2750 = vmatpush1.bf16.msra.mxu0 %v1958
    %2751 = vmatprep.subr.bf16.mxu0 %v1947
    %2752 = vmatpush1.bf16.msra.mxu0 %v1946
    %2753 = vmatprep.subr.bf16.mxu0 %v1935
    %2754 = vmatpush1.bf16.msra.mxu0 %v1934
    %2755 = vmatprep.subr.bf16.mxu0 %v1923
    %2756 = vmatpush1.bf16.msra.mxu0 %v1922
    %2757 = vmatprep.subr.bf16.mxu0 %v1911
    %2758 = vmatpush1.bf16.msra.mxu0 %v1910
    %2759 = vmatprep.subr.bf16.mxu0 %v1899
    %2760 = vmatpush1.bf16.msra.mxu0 %v1898
    %2761 = vmatprep.subr.bf16.mxu0 0
    %2762 = vmatpush2.bf16.msra.mxu0 0
    %2763 = vmatprep.subr.bf16.mxu0 0
    %2764 = vmatpush2.bf16.msra.mxu0 0
    %2765 = vmatprep.subr.bf16.mxu0 0
    %2766 = vmatpush2.bf16.msra.mxu0 0
    %2767 = vmatprep.subr.bf16.mxu0 0
    %2768 = vmatpush2.bf16.msra.mxu0 0
    %2769 = vmatprep.subr.bf16.mxu0 0
    %2770 = vmatpush2.bf16.msra.mxu0 0
    %2771 = vmatprep.subr.bf16.mxu0 0
    %2772 = vmatpush2.bf16.msra.mxu0 0
    %2773 = vmatprep.subr.bf16.mxu0 0
    %2774 = vmatpush2.bf16.msra.mxu0 0
    %2775 = vmatprep.subr.bf16.mxu0 0
    %2776 = vmatpush2.bf16.msra.mxu0 0
    %2777 = vmatprep.mubr.bf16.mxu0 0
    %2778 = vmatmul.mubr.bf16.gmra.mxu0 %v769
    %v2779 = vpop.f32.mrf.mxu0
    %v2780 = vadd.f32 %v2737, %v2779
    %v2781 = vpop.f32.mrf.mxu0
    %v2782 = vadd.f32 %v2739, %v2781
    %v2783 = vpop.f32.mrf.mxu0
    %v2784 = vadd.f32 %v2741, %v2783
    %v2785 = vpop.f32.mrf.mxu0
    %v2786 = vadd.f32 %v2743, %v2785
    %2787 = vdwg.mxu0
    %v2788 = vmax.f32 %v2350, 0.0
    %v2789 = vmax.f32 %v2352, 0.0
    %v2790 = vmax.f32 %v2436, 0.0
    %v2791 = vmax.f32 %v2438, 0.0
    %v2792 = vmax.f32 %v2522, 0.0
    %v2793 = vmax.f32 %v2524, 0.0
    %v2794 = vmax.f32 %v2608, 0.0
    %v2795 = vmax.f32 %v2610, 0.0
    %v2796 = vmax.f32 %v2694, 0.0
    %v2797 = vmax.f32 %v2696, 0.0
    %v2798 = vmax.f32 %v2780, 0.0
    %v2799 = vmax.f32 %v2782, 0.0
    %v2800 = vmax.f32 %v2354, 0.0
    %v2801 = vmax.f32 %v2356, 0.0
    %v2802 = vmax.f32 %v2440, 0.0
    %v2803 = vmax.f32 %v2442, 0.0
    %v2804 = vmax.f32 %v2526, 0.0
    %v2805 = vmax.f32 %v2528, 0.0
    %v2806 = vmax.f32 %v2612, 0.0
    %v2807 = vmax.f32 %v2614, 0.0
    %v2808 = vmax.f32 %v2698, 0.0
    %v2809 = vmax.f32 %v2700, 0.0
    %v2810 = vmax.f32 %v2784, 0.0
    %v2811 = vmax.f32 %v2786, 0.0
    %v2812 = vpack.c.bf16 %v2800, %v2788
    %v2813 = vpack.c.bf16 %v2801, %v2789
    %v2814 = vpack.c.bf16 %v2802, %v2790
    %v2815 = vpack.c.bf16 %v2803, %v2791
    %v2816 = vpack.c.bf16 %v2804, %v2792
    %v2817 = vpack.c.bf16 %v2805, %v2793
    %v2818 = vpack.c.bf16 %v2806, %v2794
    %v2819 = vpack.c.bf16 %v2807, %v2795
    %v2820 = vpack.c.bf16 %v2808, %v2796
    %v2821 = vpack.c.bf16 %v2809, %v2797
    %v2822 = vpack.c.bf16 %v2810, %v2798
    %v2823 = vpack.c.bf16 %v2811, %v2799
    %v2825 = vlaneseq
    %v2826 = vshrl.u32 %v2825, 7
    %v2827 = vsub.s32 0, %v2826
    %v2828 = vrot.slane %v766, %v2827
    %v2829 = vlaneseq
    %v2830 = vshrl.u32 %v2829, 7
    %v2831 = vsub.s32 1, %v2830
    %v2832 = vrot.slane %v766, %v2831
    %v2833 = vlaneseq
    %v2834 = vshrl.u32 %v2833, 7
    %v2835 = vsub.s32 2, %v2834
    %v2836 = vrot.slane %v766, %v2835
    %v3224 = vunpack.c.l.b16 %v382
    %v3225 = vunpack.c.h.b16 %v382
    %v3226 = vunpack.c.l.b16 %v383
    %v3227 = vunpack.c.l.b16 %v384
    %v3228 = vunpack.c.h.b16 %v384
    %v3229 = vunpack.c.l.b16 %v385
    %v3230 = vunpack.c.l.b16 %v386
    %v3231 = vunpack.c.h.b16 %v386
    %v3232 = vunpack.c.l.b16 %v387
    %v3233 = vunpack.c.l.b16 %v388
    %v3234 = vunpack.c.h.b16 %v388
    %v3235 = vunpack.c.l.b16 %v389
    %v3236 = vunpack.c.l.b16 %v390
    %v3237 = vunpack.c.h.b16 %v390
    %v3238 = vunpack.c.l.b16 %v391
    %v3239 = vunpack.c.l.b16 %v392
    %v3240 = vunpack.c.h.b16 %v392
    %v3241 = vunpack.c.l.b16 %v393
    %v3242 = vunpack.c.l.b16 %v394
    %v3243 = vunpack.c.h.b16 %v394
    %v3244 = vunpack.c.l.b16 %v395
    %v3245 = vunpack.c.l.b16 %v396
    %v3246 = vunpack.c.h.b16 %v396
    %v3247 = vunpack.c.l.b16 %v397
    %v3248 = vunpack.c.l.b16 %v398
    %v3249 = vunpack.c.h.b16 %v398
    %v3250 = vunpack.c.l.b16 %v399
    %v3251 = vunpack.c.l.b16 %v400
    %v3252 = vunpack.c.h.b16 %v400
    %v3253 = vunpack.c.l.b16 %v401
    %v3254 = vunpack.c.l.b16 %v402
    %v3255 = vunpack.c.h.b16 %v402
    %v3256 = vunpack.c.l.b16 %v403
    %v3257 = vunpack.c.l.b16 %v404
    %v3258 = vunpack.c.h.b16 %v404
    %v3259 = vunpack.c.l.b16 %v405
    %v3260 = vunpack.c.l.b16 %v406
    %v3261 = vunpack.c.h.b16 %v406
    %v3262 = vunpack.c.l.b16 %v407
    %v3263 = vunpack.c.l.b16 %v408
    %v3264 = vunpack.c.h.b16 %v408
    %v3265 = vunpack.c.l.b16 %v409
    %v3266 = vunpack.c.l.b16 %v410
    %v3267 = vunpack.c.h.b16 %v410
    %v3268 = vunpack.c.l.b16 %v411
    %v3269 = vunpack.c.l.b16 %v412
    %v3270 = vunpack.c.h.b16 %v412
    %v3271 = vunpack.c.l.b16 %v413
    %v3272 = vunpack.c.l.b16 %v414
    %v3273 = vunpack.c.h.b16 %v414
    %v3274 = vunpack.c.l.b16 %v415
    %v3275 = vunpack.c.l.b16 %v416
    %v3276 = vunpack.c.h.b16 %v416
    %v3277 = vunpack.c.l.b16 %v417
    %v3278 = vunpack.c.l.b16 %v418
    %v3279 = vunpack.c.h.b16 %v418
    %v3280 = vunpack.c.l.b16 %v419
    %v3281 = vunpack.c.l.b16 %v420
    %v3282 = vunpack.c.h.b16 %v420
    %v3283 = vunpack.c.l.b16 %v421
    %v3284 = vunpack.c.l.b16 %v422
    %v3285 = vunpack.c.h.b16 %v422
    %v3286 = vunpack.c.l.b16 %v423
    %v3287 = vunpack.c.l.b16 %v424
    %v3288 = vunpack.c.h.b16 %v424
    %v3289 = vunpack.c.l.b16 %v425
    %v3290 = vunpack.c.l.b16 %v426
    %v3291 = vunpack.c.h.b16 %v426
    %v3292 = vunpack.c.l.b16 %v427
    %v3293 = vunpack.c.l.b16 %v428
    %v3294 = vunpack.c.h.b16 %v428
    %v3295 = vunpack.c.l.b16 %v429
    %v3296 = vunpack.c.l.b16 %v430
    %v3297 = vunpack.c.h.b16 %v430
    %v3298 = vunpack.c.l.b16 %v431
    %v3299 = vunpack.c.l.b16 %v432
    %v3300 = vunpack.c.h.b16 %v432
    %v3301 = vunpack.c.l.b16 %v433
    %v3302 = vunpack.c.l.b16 %v434
    %v3303 = vunpack.c.h.b16 %v434
    %v3304 = vunpack.c.l.b16 %v435
    %v3305 = vunpack.c.l.b16 %v436
    %v3306 = vunpack.c.h.b16 %v436
    %v3307 = vunpack.c.l.b16 %v437
    %v3308 = vunpack.c.l.b16 %v438
    %v3309 = vunpack.c.h.b16 %v438
    %v3310 = vunpack.c.l.b16 %v439
    %v3311 = vunpack.c.l.b16 %v440
    %v3312 = vunpack.c.h.b16 %v440
    %v3313 = vunpack.c.l.b16 %v441
    %v3314 = vunpack.c.l.b16 %v442
    %v3315 = vunpack.c.h.b16 %v442
    %v3316 = vunpack.c.l.b16 %v443
    %v3317 = vunpack.c.l.b16 %v444
    %v3318 = vunpack.c.h.b16 %v444
    %v3319 = vunpack.c.l.b16 %v445
    %v3320 = vunpack.c.l.b16 %v446
    %v3321 = vunpack.c.h.b16 %v446
    %v3322 = vunpack.c.l.b16 %v447
    %v3323 = vunpack.c.l.b16 %v448
    %v3324 = vunpack.c.h.b16 %v448
    %v3325 = vunpack.c.l.b16 %v449
    %v3326 = vunpack.c.l.b16 %v450
    %v3327 = vunpack.c.h.b16 %v450
    %v3328 = vunpack.c.l.b16 %v451
    %v3329 = vunpack.c.l.b16 %v452
    %v3330 = vunpack.c.h.b16 %v452
    %v3331 = vunpack.c.l.b16 %v453
    %v3332 = vunpack.c.l.b16 %v454
    %v3333 = vunpack.c.h.b16 %v454
    %v3334 = vunpack.c.l.b16 %v455
    %v3335 = vunpack.c.l.b16 %v456
    %v3336 = vunpack.c.h.b16 %v456
    %v3337 = vunpack.c.l.b16 %v457
    %v3338 = vunpack.c.l.b16 %v458
    %v3339 = vunpack.c.h.b16 %v458
    %v3340 = vunpack.c.l.b16 %v459
    %v3341 = vunpack.c.l.b16 %v460
    %v3342 = vunpack.c.h.b16 %v460
    %v3343 = vunpack.c.l.b16 %v461
    %v3344 = vunpack.c.l.b16 %v462
    %v3345 = vunpack.c.h.b16 %v462
    %v3346 = vunpack.c.l.b16 %v463
    %v3347 = vunpack.c.l.b16 %v464
    %v3348 = vunpack.c.h.b16 %v464
    %v3349 = vunpack.c.l.b16 %v465
    %v3350 = vunpack.c.l.b16 %v466
    %v3351 = vunpack.c.h.b16 %v466
    %v3352 = vunpack.c.l.b16 %v467
    %v3353 = vunpack.c.l.b16 %v468
    %v3354 = vunpack.c.h.b16 %v468
    %v3355 = vunpack.c.l.b16 %v469
    %v3356 = vunpack.c.l.b16 %v470
    %v3357 = vunpack.c.h.b16 %v470
    %v3358 = vunpack.c.l.b16 %v471
    %v3359 = vunpack.c.l.b16 %v472
    %v3360 = vunpack.c.h.b16 %v472
    %v3361 = vunpack.c.l.b16 %v473
    %v3362 = vunpack.c.l.b16 %v474
    %v3363 = vunpack.c.h.b16 %v474
    %v3364 = vunpack.c.l.b16 %v475
    %v3365 = vunpack.c.l.b16 %v476
    %v3366 = vunpack.c.h.b16 %v476
    %v3367 = vunpack.c.l.b16 %v477
    %v3368 = vunpack.c.l.b16 %v478
    %v3369 = vunpack.c.h.b16 %v478
    %v3370 = vunpack.c.l.b16 %v479
    %v3371 = vunpack.c.l.b16 %v480
    %v3372 = vunpack.c.h.b16 %v480
    %v3373 = vunpack.c.l.b16 %v481
    %v3374 = vunpack.c.l.b16 %v482
    %v3375 = vunpack.c.h.b16 %v482
    %v3376 = vunpack.c.l.b16 %v483
    %v3377 = vunpack.c.l.b16 %v484
    %v3378 = vunpack.c.h.b16 %v484
    %v3379 = vunpack.c.l.b16 %v485
    %v3380 = vunpack.c.l.b16 %v486
    %v3381 = vunpack.c.h.b16 %v486
    %v3382 = vunpack.c.l.b16 %v487
    %v3383 = vunpack.c.l.b16 %v488
    %v3384 = vunpack.c.h.b16 %v488
    %v3385 = vunpack.c.l.b16 %v489
    %v3386 = vunpack.c.l.b16 %v490
    %v3387 = vunpack.c.h.b16 %v490
    %v3388 = vunpack.c.l.b16 %v491
    %v3389 = vunpack.c.l.b16 %v492
    %v3390 = vunpack.c.h.b16 %v492
    %v3391 = vunpack.c.l.b16 %v493
    %v3392 = vunpack.c.l.b16 %v494
    %v3393 = vunpack.c.h.b16 %v494
    %v3394 = vunpack.c.l.b16 %v495
    %v3395 = vunpack.c.l.b16 %v496
    %v3396 = vunpack.c.h.b16 %v496
    %v3397 = vunpack.c.l.b16 %v497
    %v3398 = vunpack.c.l.b16 %v498
    %v3399 = vunpack.c.h.b16 %v498
    %v3400 = vunpack.c.l.b16 %v499
    %v3401 = vunpack.c.l.b16 %v500
    %v3402 = vunpack.c.h.b16 %v500
    %v3403 = vunpack.c.l.b16 %v501
    %v3404 = vunpack.c.l.b16 %v502
    %v3405 = vunpack.c.h.b16 %v502
    %v3406 = vunpack.c.l.b16 %v503
    %v3407 = vunpack.c.l.b16 %v504
    %v3408 = vunpack.c.h.b16 %v504
    %v3409 = vunpack.c.l.b16 %v505
    %v3410 = vunpack.c.l.b16 %v506
    %v3411 = vunpack.c.h.b16 %v506
    %v3412 = vunpack.c.l.b16 %v507
    %v3413 = vunpack.c.l.b16 %v508
    %v3414 = vunpack.c.h.b16 %v508
    %v3415 = vunpack.c.l.b16 %v509
    %v3416 = vunpack.c.l.b16 %v510
    %v3417 = vunpack.c.h.b16 %v510
    %v3418 = vunpack.c.l.b16 %v511
    %v3419 = vunpack.c.l.b16 %v512
    %v3420 = vunpack.c.h.b16 %v512
    %v3421 = vunpack.c.l.b16 %v513
    %v3422 = vunpack.c.l.b16 %v514
    %v3423 = vunpack.c.h.b16 %v514
    %v3424 = vunpack.c.l.b16 %v515
    %v3425 = vunpack.c.l.b16 %v516
    %v3426 = vunpack.c.h.b16 %v516
    %v3427 = vunpack.c.l.b16 %v517
    %v3428 = vunpack.c.l.b16 %v518
    %v3429 = vunpack.c.h.b16 %v518
    %v3430 = vunpack.c.l.b16 %v519
    %v3431 = vunpack.c.l.b16 %v520
    %v3432 = vunpack.c.h.b16 %v520
    %v3433 = vunpack.c.l.b16 %v521
    %v3434 = vunpack.c.l.b16 %v522
    %v3435 = vunpack.c.h.b16 %v522
    %v3436 = vunpack.c.l.b16 %v523
    %v3437 = vunpack.c.l.b16 %v524
    %v3438 = vunpack.c.h.b16 %v524
    %v3439 = vunpack.c.l.b16 %v525
    %v3440 = vunpack.c.l.b16 %v526
    %v3441 = vunpack.c.h.b16 %v526
    %v3442 = vunpack.c.l.b16 %v527
    %v3443 = vunpack.c.l.b16 %v528
    %v3444 = vunpack.c.h.b16 %v528
    %v3445 = vunpack.c.l.b16 %v529
    %v3446 = vunpack.c.l.b16 %v530
    %v3447 = vunpack.c.h.b16 %v530
    %v3448 = vunpack.c.l.b16 %v531
    %v3449 = vunpack.c.l.b16 %v532
    %v3450 = vunpack.c.h.b16 %v532
    %v3451 = vunpack.c.l.b16 %v533
    %v3452 = vunpack.c.l.b16 %v534
    %v3453 = vunpack.c.h.b16 %v534
    %v3454 = vunpack.c.l.b16 %v535
    %v3455 = vunpack.c.l.b16 %v536
    %v3456 = vunpack.c.h.b16 %v536
    %v3457 = vunpack.c.l.b16 %v537
    %v3458 = vunpack.c.l.b16 %v538
    %v3459 = vunpack.c.h.b16 %v538
    %v3460 = vunpack.c.l.b16 %v539
    %v3461 = vunpack.c.l.b16 %v540
    %v3462 = vunpack.c.h.b16 %v540
    %v3463 = vunpack.c.l.b16 %v541
    %v3464 = vunpack.c.l.b16 %v542
    %v3465 = vunpack.c.h.b16 %v542
    %v3466 = vunpack.c.l.b16 %v543
    %v3467 = vunpack.c.l.b16 %v544
    %v3468 = vunpack.c.h.b16 %v544
    %v3469 = vunpack.c.l.b16 %v545
    %v3470 = vunpack.c.l.b16 %v546
    %v3471 = vunpack.c.h.b16 %v546
    %v3472 = vunpack.c.l.b16 %v547
    %v3473 = vunpack.c.l.b16 %v548
    %v3474 = vunpack.c.h.b16 %v548
    %v3475 = vunpack.c.l.b16 %v549
    %v3476 = vunpack.c.l.b16 %v550
    %v3477 = vunpack.c.h.b16 %v550
    %v3478 = vunpack.c.l.b16 %v551
    %v3479 = vunpack.c.l.b16 %v552
    %v3480 = vunpack.c.h.b16 %v552
    %v3481 = vunpack.c.l.b16 %v553
    %v3482 = vunpack.c.l.b16 %v554
    %v3483 = vunpack.c.h.b16 %v554
    %v3484 = vunpack.c.l.b16 %v555
    %v3485 = vunpack.c.l.b16 %v556
    %v3486 = vunpack.c.h.b16 %v556
    %v3487 = vunpack.c.l.b16 %v557
    %v3488 = vunpack.c.l.b16 %v558
    %v3489 = vunpack.c.h.b16 %v558
    %v3490 = vunpack.c.l.b16 %v559
    %v3491 = vunpack.c.l.b16 %v560
    %v3492 = vunpack.c.h.b16 %v560
    %v3493 = vunpack.c.l.b16 %v561
    %v3494 = vunpack.c.l.b16 %v562
    %v3495 = vunpack.c.h.b16 %v562
    %v3496 = vunpack.c.l.b16 %v563
    %v3497 = vunpack.c.l.b16 %v564
    %v3498 = vunpack.c.h.b16 %v564
    %v3499 = vunpack.c.l.b16 %v565
    %v3500 = vunpack.c.l.b16 %v566
    %v3501 = vunpack.c.h.b16 %v566
    %v3502 = vunpack.c.l.b16 %v567
    %v3503 = vunpack.c.l.b16 %v568
    %v3504 = vunpack.c.h.b16 %v568
    %v3505 = vunpack.c.l.b16 %v569
    %v3506 = vunpack.c.l.b16 %v570
    %v3507 = vunpack.c.h.b16 %v570
    %v3508 = vunpack.c.l.b16 %v571
    %v3509 = vunpack.c.l.b16 %v572
    %v3510 = vunpack.c.h.b16 %v572
    %v3511 = vunpack.c.l.b16 %v573
    %v3512 = vunpack.c.l.b16 %v574
    %v3513 = vunpack.c.h.b16 %v574
    %v3514 = vunpack.c.l.b16 %v575
    %v3515 = vunpack.c.l.b16 %v576
    %v3516 = vunpack.c.h.b16 %v576
    %v3517 = vunpack.c.l.b16 %v577
    %v3518 = vunpack.c.l.b16 %v578
    %v3519 = vunpack.c.h.b16 %v578
    %v3520 = vunpack.c.l.b16 %v579
    %v3521 = vunpack.c.l.b16 %v580
    %v3522 = vunpack.c.h.b16 %v580
    %v3523 = vunpack.c.l.b16 %v581
    %v3524 = vunpack.c.l.b16 %v582
    %v3525 = vunpack.c.h.b16 %v582
    %v3526 = vunpack.c.l.b16 %v583
    %v3527 = vunpack.c.l.b16 %v584
    %v3528 = vunpack.c.h.b16 %v584
    %v3529 = vunpack.c.l.b16 %v585
    %v3530 = vunpack.c.l.b16 %v586
    %v3531 = vunpack.c.h.b16 %v586
    %v3532 = vunpack.c.l.b16 %v587
    %v3533 = vunpack.c.l.b16 %v588
    %v3534 = vunpack.c.h.b16 %v588
    %v3535 = vunpack.c.l.b16 %v589
    %v3536 = vunpack.c.l.b16 %v590
    %v3537 = vunpack.c.h.b16 %v590
    %v3538 = vunpack.c.l.b16 %v591
    %v3539 = vunpack.c.l.b16 %v592
    %v3540 = vunpack.c.h.b16 %v592
    %v3541 = vunpack.c.l.b16 %v593
    %v3542 = vunpack.c.l.b16 %v594
    %v3543 = vunpack.c.h.b16 %v594
    %v3544 = vunpack.c.l.b16 %v595
    %v3545 = vunpack.c.l.b16 %v596
    %v3546 = vunpack.c.h.b16 %v596
    %v3547 = vunpack.c.l.b16 %v597
    %v3548 = vunpack.c.l.b16 %v598
    %v3549 = vunpack.c.h.b16 %v598
    %v3550 = vunpack.c.l.b16 %v599
    %v3551 = vunpack.c.l.b16 %v600
    %v3552 = vunpack.c.h.b16 %v600
    %v3553 = vunpack.c.l.b16 %v601
    %v3554 = vunpack.c.l.b16 %v602
    %v3555 = vunpack.c.h.b16 %v602
    %v3556 = vunpack.c.l.b16 %v603
    %v3557 = vunpack.c.l.b16 %v604
    %v3558 = vunpack.c.h.b16 %v604
    %v3559 = vunpack.c.l.b16 %v605
    %v3560 = vunpack.c.l.b16 %v606
    %v3561 = vunpack.c.h.b16 %v606
    %v3562 = vunpack.c.l.b16 %v607
    %v3563 = vunpack.c.l.b16 %v608
    %v3564 = vunpack.c.h.b16 %v608
    %v3565 = vunpack.c.l.b16 %v609
    %v3566 = vunpack.c.l.b16 %v610
    %v3567 = vunpack.c.h.b16 %v610
    %v3568 = vunpack.c.l.b16 %v611
    %v3569 = vunpack.c.l.b16 %v612
    %v3570 = vunpack.c.h.b16 %v612
    %v3571 = vunpack.c.l.b16 %v613
    %v3572 = vunpack.c.l.b16 %v614
    %v3573 = vunpack.c.h.b16 %v614
    %v3574 = vunpack.c.l.b16 %v615
    %v3575 = vunpack.c.l.b16 %v616
    %v3576 = vunpack.c.h.b16 %v616
    %v3577 = vunpack.c.l.b16 %v617
    %v3578 = vunpack.c.l.b16 %v618
    %v3579 = vunpack.c.h.b16 %v618
    %v3580 = vunpack.c.l.b16 %v619
    %v3581 = vunpack.c.l.b16 %v620
    %v3582 = vunpack.c.h.b16 %v620
    %v3583 = vunpack.c.l.b16 %v621
    %v3584 = vunpack.c.l.b16 %v622
    %v3585 = vunpack.c.h.b16 %v622
    %v3586 = vunpack.c.l.b16 %v623
    %v3587 = vunpack.c.l.b16 %v624
    %v3588 = vunpack.c.h.b16 %v624
    %v3589 = vunpack.c.l.b16 %v625
    %v3590 = vunpack.c.l.b16 %v626
    %v3591 = vunpack.c.h.b16 %v626
    %v3592 = vunpack.c.l.b16 %v627
    %v3593 = vunpack.c.l.b16 %v628
    %v3594 = vunpack.c.h.b16 %v628
    %v3595 = vunpack.c.l.b16 %v629
    %v3596 = vunpack.c.l.b16 %v630
    %v3597 = vunpack.c.h.b16 %v630
    %v3598 = vunpack.c.l.b16 %v631
    %v3599 = vunpack.c.l.b16 %v632
    %v3600 = vunpack.c.h.b16 %v632
    %v3601 = vunpack.c.l.b16 %v633
    %v3602 = vunpack.c.l.b16 %v634
    %v3603 = vunpack.c.h.b16 %v634
    %v3604 = vunpack.c.l.b16 %v635
    %v3605 = vunpack.c.l.b16 %v636
    %v3606 = vunpack.c.h.b16 %v636
    %v3607 = vunpack.c.l.b16 %v637
    %v3608 = vunpack.c.l.b16 %v638
    %v3609 = vunpack.c.h.b16 %v638
    %v3610 = vunpack.c.l.b16 %v639
    %v3611 = vunpack.c.l.b16 %v640
    %v3612 = vunpack.c.h.b16 %v640
    %v3613 = vunpack.c.l.b16 %v641
    %v3614 = vunpack.c.l.b16 %v642
    %v3615 = vunpack.c.h.b16 %v642
    %v3616 = vunpack.c.l.b16 %v643
    %v3617 = vunpack.c.l.b16 %v644
    %v3618 = vunpack.c.h.b16 %v644
    %v3619 = vunpack.c.l.b16 %v645
    %v3620 = vunpack.c.l.b16 %v646
    %v3621 = vunpack.c.h.b16 %v646
    %v3622 = vunpack.c.l.b16 %v647
    %v3623 = vunpack.c.l.b16 %v648
    %v3624 = vunpack.c.h.b16 %v648
    %v3625 = vunpack.c.l.b16 %v649
    %v3626 = vunpack.c.l.b16 %v650
    %v3627 = vunpack.c.h.b16 %v650
    %v3628 = vunpack.c.l.b16 %v651
    %v3629 = vunpack.c.l.b16 %v652
    %v3630 = vunpack.c.h.b16 %v652
    %v3631 = vunpack.c.l.b16 %v653
    %v3632 = vunpack.c.l.b16 %v654
    %v3633 = vunpack.c.h.b16 %v654
    %v3634 = vunpack.c.l.b16 %v655
    %v3635 = vunpack.c.l.b16 %v656
    %v3636 = vunpack.c.h.b16 %v656
    %v3637 = vunpack.c.l.b16 %v657
    %v3638 = vunpack.c.l.b16 %v658
    %v3639 = vunpack.c.h.b16 %v658
    %v3640 = vunpack.c.l.b16 %v659
    %v3641 = vunpack.c.l.b16 %v660
    %v3642 = vunpack.c.h.b16 %v660
    %v3643 = vunpack.c.l.b16 %v661
    %v3644 = vunpack.c.l.b16 %v662
    %v3645 = vunpack.c.h.b16 %v662
    %v3646 = vunpack.c.l.b16 %v663
    %v3647 = vunpack.c.l.b16 %v664
    %v3648 = vunpack.c.h.b16 %v664
    %v3649 = vunpack.c.l.b16 %v665
    %v3650 = vunpack.c.l.b16 %v666
    %v3651 = vunpack.c.h.b16 %v666
    %v3652 = vunpack.c.l.b16 %v667
    %v3653 = vunpack.c.l.b16 %v668
    %v3654 = vunpack.c.h.b16 %v668
    %v3655 = vunpack.c.l.b16 %v669
    %v3656 = vunpack.c.l.b16 %v670
    %v3657 = vunpack.c.h.b16 %v670
    %v3658 = vunpack.c.l.b16 %v671
    %v3659 = vunpack.c.l.b16 %v672
    %v3660 = vunpack.c.h.b16 %v672
    %v3661 = vunpack.c.l.b16 %v673
    %v3662 = vunpack.c.l.b16 %v674
    %v3663 = vunpack.c.h.b16 %v674
    %v3664 = vunpack.c.l.b16 %v675
    %v3665 = vunpack.c.l.b16 %v676
    %v3666 = vunpack.c.h.b16 %v676
    %v3667 = vunpack.c.l.b16 %v677
    %v3668 = vunpack.c.l.b16 %v678
    %v3669 = vunpack.c.h.b16 %v678
    %v3670 = vunpack.c.l.b16 %v679
    %v3671 = vunpack.c.l.b16 %v680
    %v3672 = vunpack.c.h.b16 %v680
    %v3673 = vunpack.c.l.b16 %v681
    %v3674 = vunpack.c.l.b16 %v682
    %v3675 = vunpack.c.h.b16 %v682
    %v3676 = vunpack.c.l.b16 %v683
    %v3677 = vunpack.c.l.b16 %v684
    %v3678 = vunpack.c.h.b16 %v684
    %v3679 = vunpack.c.l.b16 %v685
    %v3680 = vunpack.c.l.b16 %v686
    %v3681 = vunpack.c.h.b16 %v686
    %v3682 = vunpack.c.l.b16 %v687
    %v3683 = vunpack.c.l.b16 %v688
    %v3684 = vunpack.c.h.b16 %v688
    %v3685 = vunpack.c.l.b16 %v689
    %v3686 = vunpack.c.l.b16 %v690
    %v3687 = vunpack.c.h.b16 %v690
    %v3688 = vunpack.c.l.b16 %v691
    %v3689 = vunpack.c.l.b16 %v692
    %v3690 = vunpack.c.h.b16 %v692
    %v3691 = vunpack.c.l.b16 %v693
    %v3692 = vunpack.c.l.b16 %v694
    %v3693 = vunpack.c.h.b16 %v694
    %v3694 = vunpack.c.l.b16 %v695
    %v3695 = vunpack.c.l.b16 %v696
    %v3696 = vunpack.c.h.b16 %v696
    %v3697 = vunpack.c.l.b16 %v697
    %v3698 = vunpack.c.l.b16 %v698
    %v3699 = vunpack.c.h.b16 %v698
    %v3700 = vunpack.c.l.b16 %v699
    %v3701 = vunpack.c.l.b16 %v700
    %v3702 = vunpack.c.h.b16 %v700
    %v3703 = vunpack.c.l.b16 %v701
    %v3704 = vunpack.c.l.b16 %v702
    %v3705 = vunpack.c.h.b16 %v702
    %v3706 = vunpack.c.l.b16 %v703
    %v3707 = vunpack.c.l.b16 %v704
    %v3708 = vunpack.c.h.b16 %v704
    %v3709 = vunpack.c.l.b16 %v705
    %v3710 = vunpack.c.l.b16 %v706
    %v3711 = vunpack.c.h.b16 %v706
    %v3712 = vunpack.c.l.b16 %v707
    %v3713 = vunpack.c.l.b16 %v708
    %v3714 = vunpack.c.h.b16 %v708
    %v3715 = vunpack.c.l.b16 %v709
    %v3716 = vunpack.c.l.b16 %v710
    %v3717 = vunpack.c.h.b16 %v710
    %v3718 = vunpack.c.l.b16 %v711
    %v3719 = vunpack.c.l.b16 %v712
    %v3720 = vunpack.c.h.b16 %v712
    %v3721 = vunpack.c.l.b16 %v713
    %v3722 = vunpack.c.l.b16 %v714
    %v3723 = vunpack.c.h.b16 %v714
    %v3724 = vunpack.c.l.b16 %v715
    %v3725 = vunpack.c.l.b16 %v716
    %v3726 = vunpack.c.h.b16 %v716
    %v3727 = vunpack.c.l.b16 %v717
    %v3728 = vunpack.c.l.b16 %v718
    %v3729 = vunpack.c.h.b16 %v718
    %v3730 = vunpack.c.l.b16 %v719
    %v3731 = vunpack.c.l.b16 %v720
    %v3732 = vunpack.c.h.b16 %v720
    %v3733 = vunpack.c.l.b16 %v721
    %v3734 = vunpack.c.l.b16 %v722
    %v3735 = vunpack.c.h.b16 %v722
    %v3736 = vunpack.c.l.b16 %v723
    %v3737 = vunpack.c.l.b16 %v724
    %v3738 = vunpack.c.h.b16 %v724
    %v3739 = vunpack.c.l.b16 %v725
    %v3740 = vunpack.c.l.b16 %v726
    %v3741 = vunpack.c.h.b16 %v726
    %v3742 = vunpack.c.l.b16 %v727
    %v3743 = vunpack.c.l.b16 %v728
    %v3744 = vunpack.c.h.b16 %v728
    %v3745 = vunpack.c.l.b16 %v729
    %v3746 = vunpack.c.l.b16 %v730
    %v3747 = vunpack.c.h.b16 %v730
    %v3748 = vunpack.c.l.b16 %v731
    %v3749 = vunpack.c.l.b16 %v732
    %v3750 = vunpack.c.h.b16 %v732
    %v3751 = vunpack.c.l.b16 %v733
    %v3752 = vunpack.c.l.b16 %v734
    %v3753 = vunpack.c.h.b16 %v734
    %v3754 = vunpack.c.l.b16 %v735
    %v3755 = vunpack.c.l.b16 %v736
    %v3756 = vunpack.c.h.b16 %v736
    %v3757 = vunpack.c.l.b16 %v737
    %v3758 = vunpack.c.l.b16 %v738
    %v3759 = vunpack.c.h.b16 %v738
    %v3760 = vunpack.c.l.b16 %v739
    %v3761 = vunpack.c.l.b16 %v740
    %v3762 = vunpack.c.h.b16 %v740
    %v3763 = vunpack.c.l.b16 %v741
    %v3764 = vunpack.c.l.b16 %v742
    %v3765 = vunpack.c.h.b16 %v742
    %v3766 = vunpack.c.l.b16 %v743
    %v3767 = vunpack.c.l.b16 %v744
    %v3768 = vunpack.c.h.b16 %v744
    %v3769 = vunpack.c.l.b16 %v745
    %v3770 = vunpack.c.l.b16 %v746
    %v3771 = vunpack.c.h.b16 %v746
    %v3772 = vunpack.c.l.b16 %v747
    %v3773 = vunpack.c.l.b16 %v748
    %v3774 = vunpack.c.h.b16 %v748
    %v3775 = vunpack.c.l.b16 %v749
    %v3776 = vunpack.c.l.b16 %v750
    %v3777 = vunpack.c.h.b16 %v750
    %v3778 = vunpack.c.l.b16 %v751
    %v3779 = vunpack.c.l.b16 %v752
    %v3780 = vunpack.c.h.b16 %v752
    %v3781 = vunpack.c.l.b16 %v753
    %v3782 = vunpack.c.l.b16 %v754
    %v3783 = vunpack.c.h.b16 %v754
    %v3784 = vunpack.c.l.b16 %v755
    %v3785 = vunpack.c.l.b16 %v756
    %v3786 = vunpack.c.h.b16 %v756
    %v3787 = vunpack.c.l.b16 %v757
    %v3788 = vunpack.c.l.b16 %v758
    %v3789 = vunpack.c.h.b16 %v758
    %v3790 = vunpack.c.l.b16 %v759
    %v3791 = vunpack.c.l.b16 %v760
    %v3792 = vunpack.c.h.b16 %v760
    %v3793 = vunpack.c.l.b16 %v761
    %v3794 = vunpack.c.l.b16 %v762
    %v3795 = vunpack.c.h.b16 %v762
    %v3796 = vunpack.c.l.b16 %v763
    %v3797 = vunpack.c.l.b16 %v764
    %v3798 = vunpack.c.h.b16 %v764
    %v3799 = vunpack.c.l.b16 %v765
    %v3800 = vpack.c.b16 %v3227, %v3224
    %v3801 = vpack.c.b16 %v3228, %v3225
    %v3802 = vpack.c.b16 %v3229, %v3226
    %v3803 = vpack.c.b16 %v3233, %v3230
    %v3804 = vpack.c.b16 %v3234, %v3231
    %v3805 = vpack.c.b16 %v3235, %v3232
    %v3806 = vpack.c.b16 %v3239, %v3236
    %v3807 = vpack.c.b16 %v3240, %v3237
    %v3808 = vpack.c.b16 %v3241, %v3238
    %v3809 = vpack.c.b16 %v3245, %v3242
    %v3810 = vpack.c.b16 %v3246, %v3243
    %v3811 = vpack.c.b16 %v3247, %v3244
    %v3812 = vpack.c.b16 %v3251, %v3248
    %v3813 = vpack.c.b16 %v3252, %v3249
    %v3814 = vpack.c.b16 %v3253, %v3250
    %v3815 = vpack.c.b16 %v3257, %v3254
    %v3816 = vpack.c.b16 %v3258, %v3255
    %v3817 = vpack.c.b16 %v3259, %v3256
    %v3818 = vpack.c.b16 %v3263, %v3260
    %v3819 = vpack.c.b16 %v3264, %v3261
    %v3820 = vpack.c.b16 %v3265, %v3262
    %v3821 = vpack.c.b16 %v3269, %v3266
    %v3822 = vpack.c.b16 %v3270, %v3267
    %v3823 = vpack.c.b16 %v3271, %v3268
    %v3824 = vpack.c.b16 %v3275, %v3272
    %v3825 = vpack.c.b16 %v3276, %v3273
    %v3826 = vpack.c.b16 %v3277, %v3274
    %v3827 = vpack.c.b16 %v3281, %v3278
    %v3828 = vpack.c.b16 %v3282, %v3279
    %v3829 = vpack.c.b16 %v3283, %v3280
    %v3830 = vpack.c.b16 %v3287, %v3284
    %v3831 = vpack.c.b16 %v3288, %v3285
    %v3832 = vpack.c.b16 %v3289, %v3286
    %v3833 = vpack.c.b16 %v3293, %v3290
    %v3834 = vpack.c.b16 %v3294, %v3291
    %v3835 = vpack.c.b16 %v3295, %v3292
    %v3836 = vpack.c.b16 %v3299, %v3296
    %v3837 = vpack.c.b16 %v3300, %v3297
    %v3838 = vpack.c.b16 %v3301, %v3298
    %v3839 = vpack.c.b16 %v3305, %v3302
    %v3840 = vpack.c.b16 %v3306, %v3303
    %v3841 = vpack.c.b16 %v3307, %v3304
    %v3842 = vpack.c.b16 %v3311, %v3308
    %v3843 = vpack.c.b16 %v3312, %v3309
    %v3844 = vpack.c.b16 %v3313, %v3310
    %v3845 = vpack.c.b16 %v3317, %v3314
    %v3846 = vpack.c.b16 %v3318, %v3315
    %v3847 = vpack.c.b16 %v3319, %v3316
    %v3848 = vpack.c.b16 %v3323, %v3320
    %v3849 = vpack.c.b16 %v3324, %v3321
    %v3850 = vpack.c.b16 %v3325, %v3322
    %v3851 = vpack.c.b16 %v3329, %v3326
    %v3852 = vpack.c.b16 %v3330, %v3327
    %v3853 = vpack.c.b16 %v3331, %v3328
    %v3854 = vpack.c.b16 %v3335, %v3332
    %v3855 = vpack.c.b16 %v3336, %v3333
    %v3856 = vpack.c.b16 %v3337, %v3334
    %v3857 = vpack.c.b16 %v3341, %v3338
    %v3858 = vpack.c.b16 %v3342, %v3339
    %v3859 = vpack.c.b16 %v3343, %v3340
    %v3860 = vpack.c.b16 %v3347, %v3344
    %v3861 = vpack.c.b16 %v3348, %v3345
    %v3862 = vpack.c.b16 %v3349, %v3346
    %v3863 = vpack.c.b16 %v3353, %v3350
    %v3864 = vpack.c.b16 %v3354, %v3351
    %v3865 = vpack.c.b16 %v3355, %v3352
    %v3866 = vpack.c.b16 %v3359, %v3356
    %v3867 = vpack.c.b16 %v3360, %v3357
    %v3868 = vpack.c.b16 %v3361, %v3358
    %v3869 = vpack.c.b16 %v3365, %v3362
    %v3870 = vpack.c.b16 %v3366, %v3363
    %v3871 = vpack.c.b16 %v3367, %v3364
    %v3872 = vpack.c.b16 %v3371, %v3368
    %v3873 = vpack.c.b16 %v3372, %v3369
    %v3874 = vpack.c.b16 %v3373, %v3370
    %v3875 = vpack.c.b16 %v3377, %v3374
    %v3876 = vpack.c.b16 %v3378, %v3375
    %v3877 = vpack.c.b16 %v3379, %v3376
    %v3878 = vpack.c.b16 %v3383, %v3380
    %v3879 = vpack.c.b16 %v3384, %v3381
    %v3880 = vpack.c.b16 %v3385, %v3382
    %v3881 = vpack.c.b16 %v3389, %v3386
    %v3882 = vpack.c.b16 %v3390, %v3387
    %v3883 = vpack.c.b16 %v3391, %v3388
    %v3884 = vpack.c.b16 %v3395, %v3392
    %v3885 = vpack.c.b16 %v3396, %v3393
    %v3886 = vpack.c.b16 %v3397, %v3394
    %v3887 = vpack.c.b16 %v3401, %v3398
    %v3888 = vpack.c.b16 %v3402, %v3399
    %v3889 = vpack.c.b16 %v3403, %v3400
    %v3890 = vpack.c.b16 %v3407, %v3404
    %v3891 = vpack.c.b16 %v3408, %v3405
    %v3892 = vpack.c.b16 %v3409, %v3406
    %v3893 = vpack.c.b16 %v3413, %v3410
    %v3894 = vpack.c.b16 %v3414, %v3411
    %v3895 = vpack.c.b16 %v3415, %v3412
    %v3896 = vpack.c.b16 %v3419, %v3416
    %v3897 = vpack.c.b16 %v3420, %v3417
    %v3898 = vpack.c.b16 %v3421, %v3418
    %v3899 = vpack.c.b16 %v3425, %v3422
    %v3900 = vpack.c.b16 %v3426, %v3423
    %v3901 = vpack.c.b16 %v3427, %v3424
    %v3902 = vpack.c.b16 %v3431, %v3428
    %v3903 = vpack.c.b16 %v3432, %v3429
    %v3904 = vpack.c.b16 %v3433, %v3430
    %v3905 = vpack.c.b16 %v3437, %v3434
    %v3906 = vpack.c.b16 %v3438, %v3435
    %v3907 = vpack.c.b16 %v3439, %v3436
    %v3908 = vpack.c.b16 %v3443, %v3440
    %v3909 = vpack.c.b16 %v3444, %v3441
    %v3910 = vpack.c.b16 %v3445, %v3442
    %v3911 = vpack.c.b16 %v3449, %v3446
    %v3912 = vpack.c.b16 %v3450, %v3447
    %v3913 = vpack.c.b16 %v3451, %v3448
    %v3914 = vpack.c.b16 %v3455, %v3452
    %v3915 = vpack.c.b16 %v3456, %v3453
    %v3916 = vpack.c.b16 %v3457, %v3454
    %v3917 = vpack.c.b16 %v3461, %v3458
    %v3918 = vpack.c.b16 %v3462, %v3459
    %v3919 = vpack.c.b16 %v3463, %v3460
    %v3920 = vpack.c.b16 %v3467, %v3464
    %v3921 = vpack.c.b16 %v3468, %v3465
    %v3922 = vpack.c.b16 %v3469, %v3466
    %v3923 = vpack.c.b16 %v3473, %v3470
    %v3924 = vpack.c.b16 %v3474, %v3471
    %v3925 = vpack.c.b16 %v3475, %v3472
    %v3926 = vpack.c.b16 %v3479, %v3476
    %v3927 = vpack.c.b16 %v3480, %v3477
    %v3928 = vpack.c.b16 %v3481, %v3478
    %v3929 = vpack.c.b16 %v3485, %v3482
    %v3930 = vpack.c.b16 %v3486, %v3483
    %v3931 = vpack.c.b16 %v3487, %v3484
    %v3932 = vpack.c.b16 %v3491, %v3488
    %v3933 = vpack.c.b16 %v3492, %v3489
    %v3934 = vpack.c.b16 %v3493, %v3490
    %v3935 = vpack.c.b16 %v3497, %v3494
    %v3936 = vpack.c.b16 %v3498, %v3495
    %v3937 = vpack.c.b16 %v3499, %v3496
    %v3938 = vpack.c.b16 %v3503, %v3500
    %v3939 = vpack.c.b16 %v3504, %v3501
    %v3940 = vpack.c.b16 %v3505, %v3502
    %v3941 = vpack.c.b16 %v3509, %v3506
    %v3942 = vpack.c.b16 %v3510, %v3507
    %v3943 = vpack.c.b16 %v3511, %v3508
    %v3944 = vpack.c.b16 %v3515, %v3512
    %v3945 = vpack.c.b16 %v3516, %v3513
    %v3946 = vpack.c.b16 %v3517, %v3514
    %v3947 = vpack.c.b16 %v3521, %v3518
    %v3948 = vpack.c.b16 %v3522, %v3519
    %v3949 = vpack.c.b16 %v3523, %v3520
    %v3950 = vpack.c.b16 %v3527, %v3524
    %v3951 = vpack.c.b16 %v3528, %v3525
    %v3952 = vpack.c.b16 %v3529, %v3526
    %v3953 = vpack.c.b16 %v3533, %v3530
    %v3954 = vpack.c.b16 %v3534, %v3531
    %v3955 = vpack.c.b16 %v3535, %v3532
    %v3956 = vpack.c.b16 %v3539, %v3536
    %v3957 = vpack.c.b16 %v3540, %v3537
    %v3958 = vpack.c.b16 %v3541, %v3538
    %v3959 = vpack.c.b16 %v3545, %v3542
    %v3960 = vpack.c.b16 %v3546, %v3543
    %v3961 = vpack.c.b16 %v3547, %v3544
    %v3962 = vpack.c.b16 %v3551, %v3548
    %v3963 = vpack.c.b16 %v3552, %v3549
    %v3964 = vpack.c.b16 %v3553, %v3550
    %v3965 = vpack.c.b16 %v3557, %v3554
    %v3966 = vpack.c.b16 %v3558, %v3555
    %v3967 = vpack.c.b16 %v3559, %v3556
    %v3968 = vpack.c.b16 %v3563, %v3560
    %v3969 = vpack.c.b16 %v3564, %v3561
    %v3970 = vpack.c.b16 %v3565, %v3562
    %v3971 = vpack.c.b16 %v3569, %v3566
    %v3972 = vpack.c.b16 %v3570, %v3567
    %v3973 = vpack.c.b16 %v3571, %v3568
    %v3974 = vpack.c.b16 %v3575, %v3572
    %v3975 = vpack.c.b16 %v3576, %v3573
    %v3976 = vpack.c.b16 %v3577, %v3574
    %v3977 = vpack.c.b16 %v3581, %v3578
    %v3978 = vpack.c.b16 %v3582, %v3579
    %v3979 = vpack.c.b16 %v3583, %v3580
    %v3980 = vpack.c.b16 %v3587, %v3584
    %v3981 = vpack.c.b16 %v3588, %v3585
    %v3982 = vpack.c.b16 %v3589, %v3586
    %v3983 = vpack.c.b16 %v3593, %v3590
    %v3984 = vpack.c.b16 %v3594, %v3591
    %v3985 = vpack.c.b16 %v3595, %v3592
    %v3986 = vpack.c.b16 %v3599, %v3596
    %v3987 = vpack.c.b16 %v3600, %v3597
    %v3988 = vpack.c.b16 %v3601, %v3598
    %v3989 = vpack.c.b16 %v3605, %v3602
    %v3990 = vpack.c.b16 %v3606, %v3603
    %v3991 = vpack.c.b16 %v3607, %v3604
    %v3992 = vpack.c.b16 %v3611, %v3608
    %v3993 = vpack.c.b16 %v3612, %v3609
    %v3994 = vpack.c.b16 %v3613, %v3610
    %v3995 = vpack.c.b16 %v3617, %v3614
    %v3996 = vpack.c.b16 %v3618, %v3615
    %v3997 = vpack.c.b16 %v3619, %v3616
    %v3998 = vpack.c.b16 %v3623, %v3620
    %v3999 = vpack.c.b16 %v3624, %v3621
    %v4000 = vpack.c.b16 %v3625, %v3622
    %v4001 = vpack.c.b16 %v3629, %v3626
    %v4002 = vpack.c.b16 %v3630, %v3627
    %v4003 = vpack.c.b16 %v3631, %v3628
    %v4004 = vpack.c.b16 %v3635, %v3632
    %v4005 = vpack.c.b16 %v3636, %v3633
    %v4006 = vpack.c.b16 %v3637, %v3634
    %v4007 = vpack.c.b16 %v3641, %v3638
    %v4008 = vpack.c.b16 %v3642, %v3639
    %v4009 = vpack.c.b16 %v3643, %v3640
    %v4010 = vpack.c.b16 %v3647, %v3644
    %v4011 = vpack.c.b16 %v3648, %v3645
    %v4012 = vpack.c.b16 %v3649, %v3646
    %v4013 = vpack.c.b16 %v3653, %v3650
    %v4014 = vpack.c.b16 %v3654, %v3651
    %v4015 = vpack.c.b16 %v3655, %v3652
    %v4016 = vpack.c.b16 %v3659, %v3656
    %v4017 = vpack.c.b16 %v3660, %v3657
    %v4018 = vpack.c.b16 %v3661, %v3658
    %v4019 = vpack.c.b16 %v3665, %v3662
    %v4020 = vpack.c.b16 %v3666, %v3663
    %v4021 = vpack.c.b16 %v3667, %v3664
    %v4022 = vpack.c.b16 %v3671, %v3668
    %v4023 = vpack.c.b16 %v3672, %v3669
    %v4024 = vpack.c.b16 %v3673, %v3670
    %v4025 = vpack.c.b16 %v3677, %v3674
    %v4026 = vpack.c.b16 %v3678, %v3675
    %v4027 = vpack.c.b16 %v3679, %v3676
    %v4028 = vpack.c.b16 %v3683, %v3680
    %v4029 = vpack.c.b16 %v3684, %v3681
    %v4030 = vpack.c.b16 %v3685, %v3682
    %v4031 = vpack.c.b16 %v3689, %v3686
    %v4032 = vpack.c.b16 %v3690, %v3687
    %v4033 = vpack.c.b16 %v3691, %v3688
    %v4034 = vpack.c.b16 %v3695, %v3692
    %v4035 = vpack.c.b16 %v3696, %v3693
    %v4036 = vpack.c.b16 %v3697, %v3694
    %v4037 = vpack.c.b16 %v3701, %v3698
    %v4038 = vpack.c.b16 %v3702, %v3699
    %v4039 = vpack.c.b16 %v3703, %v3700
    %v4040 = vpack.c.b16 %v3707, %v3704
    %v4041 = vpack.c.b16 %v3708, %v3705
    %v4042 = vpack.c.b16 %v3709, %v3706
    %v4043 = vpack.c.b16 %v3713, %v3710
    %v4044 = vpack.c.b16 %v3714, %v3711
    %v4045 = vpack.c.b16 %v3715, %v3712
    %v4046 = vpack.c.b16 %v3719, %v3716
    %v4047 = vpack.c.b16 %v3720, %v3717
    %v4048 = vpack.c.b16 %v3721, %v3718
    %v4049 = vpack.c.b16 %v3725, %v3722
    %v4050 = vpack.c.b16 %v3726, %v3723
    %v4051 = vpack.c.b16 %v3727, %v3724
    %v4052 = vpack.c.b16 %v3731, %v3728
    %v4053 = vpack.c.b16 %v3732, %v3729
    %v4054 = vpack.c.b16 %v3733, %v3730
    %v4055 = vpack.c.b16 %v3737, %v3734
    %v4056 = vpack.c.b16 %v3738, %v3735
    %v4057 = vpack.c.b16 %v3739, %v3736
    %v4058 = vpack.c.b16 %v3743, %v3740
    %v4059 = vpack.c.b16 %v3744, %v3741
    %v4060 = vpack.c.b16 %v3745, %v3742
    %v4061 = vpack.c.b16 %v3749, %v3746
    %v4062 = vpack.c.b16 %v3750, %v3747
    %v4063 = vpack.c.b16 %v3751, %v3748
    %v4064 = vpack.c.b16 %v3755, %v3752
    %v4065 = vpack.c.b16 %v3756, %v3753
    %v4066 = vpack.c.b16 %v3757, %v3754
    %v4067 = vpack.c.b16 %v3761, %v3758
    %v4068 = vpack.c.b16 %v3762, %v3759
    %v4069 = vpack.c.b16 %v3763, %v3760
    %v4070 = vpack.c.b16 %v3767, %v3764
    %v4071 = vpack.c.b16 %v3768, %v3765
    %v4072 = vpack.c.b16 %v3769, %v3766
    %v4073 = vpack.c.b16 %v3773, %v3770
    %v4074 = vpack.c.b16 %v3774, %v3771
    %v4075 = vpack.c.b16 %v3775, %v3772
    %v4076 = vpack.c.b16 %v3779, %v3776
    %v4077 = vpack.c.b16 %v3780, %v3777
    %v4078 = vpack.c.b16 %v3781, %v3778
    %v4079 = vpack.c.b16 %v3785, %v3782
    %v4080 = vpack.c.b16 %v3786, %v3783
    %v4081 = vpack.c.b16 %v3787, %v3784
    %v4082 = vpack.c.b16 %v3791, %v3788
    %v4083 = vpack.c.b16 %v3792, %v3789
    %v4084 = vpack.c.b16 %v3793, %v3790
    %v4085 = vpack.c.b16 %v3797, %v3794
    %v4086 = vpack.c.b16 %v3798, %v3795
    %v4087 = vpack.c.b16 %v3799, %v3796
    %4376 = vmatprep.subr.bf16.mxu0 %v3822
    %4377 = vmatpush1.bf16.msra.mxu0 %v3821
    %4378 = vmatprep.subr.bf16.mxu0 %v3819
    %4379 = vmatpush1.bf16.msra.mxu0 %v3818
    %4380 = vmatprep.subr.bf16.mxu0 %v3816
    %4381 = vmatpush1.bf16.msra.mxu0 %v3815
    %4382 = vmatprep.subr.bf16.mxu0 %v3813
    %4383 = vmatpush1.bf16.msra.mxu0 %v3812
    %4384 = vmatprep.subr.bf16.mxu0 %v3810
    %4385 = vmatpush1.bf16.msra.mxu0 %v3809
    %4386 = vmatprep.subr.bf16.mxu0 %v3807
    %4387 = vmatpush1.bf16.msra.mxu0 %v3806
    %4388 = vmatprep.subr.bf16.mxu0 %v3804
    %4389 = vmatpush1.bf16.msra.mxu0 %v3803
    %4390 = vmatprep.subr.bf16.mxu0 %v3801
    %4391 = vmatpush1.bf16.msra.mxu0 %v3800
    %4392 = vmatprep.subr.bf16.mxu0 %v3846
    %4393 = vmatpush2.bf16.msra.mxu0 %v3845
    %4394 = vmatprep.subr.bf16.mxu0 %v3843
    %4395 = vmatpush2.bf16.msra.mxu0 %v3842
    %4396 = vmatprep.subr.bf16.mxu0 %v3840
    %4397 = vmatpush2.bf16.msra.mxu0 %v3839
    %4398 = vmatprep.subr.bf16.mxu0 %v3837
    %4399 = vmatpush2.bf16.msra.mxu0 %v3836
    %4400 = vmatprep.subr.bf16.mxu0 %v3834
    %4401 = vmatpush2.bf16.msra.mxu0 %v3833
    %4402 = vmatprep.subr.bf16.mxu0 %v3831
    %4403 = vmatpush2.bf16.msra.mxu0 %v3830
    %4404 = vmatprep.subr.bf16.mxu0 %v3828
    %4405 = vmatpush2.bf16.msra.mxu0 %v3827
    %4406 = vmatprep.subr.bf16.mxu0 %v3825
    %4407 = vmatpush2.bf16.msra.mxu0 %v3824
    %4408 = vmatprep.mubr.bf16.mxu0 %v2813
    %4409 = vmatmul.mubr.bf16.gmra.mxu0 %v2812
    %v4410 = vpop.f32.mrf.mxu0
    %v4411 = vadd.f32 %v2828, %v4410
    %v4412 = vpop.f32.mrf.mxu0
    %v4413 = vadd.f32 %v2832, %v4412
    %v4414 = vpop.f32.mrf.mxu0
    %v4415 = vadd.f32 %v2828, %v4414
    %v4416 = vpop.f32.mrf.mxu0
    %v4417 = vadd.f32 %v2832, %v4416
    %4418 = vdwg.mxu0
    %4419 = vmatprep.subr.bf16.mxu0 %v3870
    %4420 = vmatpush1.bf16.msra.mxu0 %v3869
    %4421 = vmatprep.subr.bf16.mxu0 %v3867
    %4422 = vmatpush1.bf16.msra.mxu0 %v3866
    %4423 = vmatprep.subr.bf16.mxu0 %v3864
    %4424 = vmatpush1.bf16.msra.mxu0 %v3863
    %4425 = vmatprep.subr.bf16.mxu0 %v3861
    %4426 = vmatpush1.bf16.msra.mxu0 %v3860
    %4427 = vmatprep.subr.bf16.mxu0 %v3858
    %4428 = vmatpush1.bf16.msra.mxu0 %v3857
    %4429 = vmatprep.subr.bf16.mxu0 %v3855
    %4430 = vmatpush1.bf16.msra.mxu0 %v3854
    %4431 = vmatprep.subr.bf16.mxu0 %v3852
    %4432 = vmatpush1.bf16.msra.mxu0 %v3851
    %4433 = vmatprep.subr.bf16.mxu0 %v3849
    %4434 = vmatpush1.bf16.msra.mxu0 %v3848
    %4435 = vmatprep.subr.bf16.mxu0 %v3894
    %4436 = vmatpush2.bf16.msra.mxu0 %v3893
    %4437 = vmatprep.subr.bf16.mxu0 %v3891
    %4438 = vmatpush2.bf16.msra.mxu0 %v3890
    %4439 = vmatprep.subr.bf16.mxu0 %v3888
    %4440 = vmatpush2.bf16.msra.mxu0 %v3887
    %4441 = vmatprep.subr.bf16.mxu0 %v3885
    %4442 = vmatpush2.bf16.msra.mxu0 %v3884
    %4443 = vmatprep.subr.bf16.mxu0 %v3882
    %4444 = vmatpush2.bf16.msra.mxu0 %v3881
    %4445 = vmatprep.subr.bf16.mxu0 %v3879
    %4446 = vmatpush2.bf16.msra.mxu0 %v3878
    %4447 = vmatprep.subr.bf16.mxu0 %v3876
    %4448 = vmatpush2.bf16.msra.mxu0 %v3875
    %4449 = vmatprep.subr.bf16.mxu0 %v3873
    %4450 = vmatpush2.bf16.msra.mxu0 %v3872
    %4451 = vmatprep.mubr.bf16.mxu0 %v2815
    %4452 = vmatmul.mubr.bf16.gmra.mxu0 %v2814
    %v4453 = vpop.f32.mrf.mxu0
    %v4454 = vadd.f32 %v4411, %v4453
    %v4455 = vpop.f32.mrf.mxu0
    %v4456 = vadd.f32 %v4413, %v4455
    %v4457 = vpop.f32.mrf.mxu0
    %v4458 = vadd.f32 %v4415, %v4457
    %v4459 = vpop.f32.mrf.mxu0
    %v4460 = vadd.f32 %v4417, %v4459
    %4461 = vdwg.mxu0
    %4462 = vmatprep.subr.bf16.mxu0 %v3918
    %4463 = vmatpush1.bf16.msra.mxu0 %v3917
    %4464 = vmatprep.subr.bf16.mxu0 %v3915
    %4465 = vmatpush1.bf16.msra.mxu0 %v3914
    %4466 = vmatprep.subr.bf16.mxu0 %v3912
    %4467 = vmatpush1.bf16.msra.mxu0 %v3911
    %4468 = vmatprep.subr.bf16.mxu0 %v3909
    %4469 = vmatpush1.bf16.msra.mxu0 %v3908
    %4470 = vmatprep.subr.bf16.mxu0 %v3906
    %4471 = vmatpush1.bf16.msra.mxu0 %v3905
    %4472 = vmatprep.subr.bf16.mxu0 %v3903
    %4473 = vmatpush1.bf16.msra.mxu0 %v3902
    %4474 = vmatprep.subr.bf16.mxu0 %v3900
    %4475 = vmatpush1.bf16.msra.mxu0 %v3899
    %4476 = vmatprep.subr.bf16.mxu0 %v3897
    %4477 = vmatpush1.bf16.msra.mxu0 %v3896
    %4478 = vmatprep.subr.bf16.mxu0 %v3942
    %4479 = vmatpush2.bf16.msra.mxu0 %v3941
    %4480 = vmatprep.subr.bf16.mxu0 %v3939
    %4481 = vmatpush2.bf16.msra.mxu0 %v3938
    %4482 = vmatprep.subr.bf16.mxu0 %v3936
    %4483 = vmatpush2.bf16.msra.mxu0 %v3935
    %4484 = vmatprep.subr.bf16.mxu0 %v3933
    %4485 = vmatpush2.bf16.msra.mxu0 %v3932
    %4486 = vmatprep.subr.bf16.mxu0 %v3930
    %4487 = vmatpush2.bf16.msra.mxu0 %v3929
    %4488 = vmatprep.subr.bf16.mxu0 %v3927
    %4489 = vmatpush2.bf16.msra.mxu0 %v3926
    %4490 = vmatprep.subr.bf16.mxu0 %v3924
    %4491 = vmatpush2.bf16.msra.mxu0 %v3923
    %4492 = vmatprep.subr.bf16.mxu0 %v3921
    %4493 = vmatpush2.bf16.msra.mxu0 %v3920
    %4494 = vmatprep.mubr.bf16.mxu0 %v2817
    %4495 = vmatmul.mubr.bf16.gmra.mxu0 %v2816
    %v4496 = vpop.f32.mrf.mxu0
    %v4497 = vadd.f32 %v4454, %v4496
    %v4498 = vpop.f32.mrf.mxu0
    %v4499 = vadd.f32 %v4456, %v4498
    %v4500 = vpop.f32.mrf.mxu0
    %v4501 = vadd.f32 %v4458, %v4500
    %v4502 = vpop.f32.mrf.mxu0
    %v4503 = vadd.f32 %v4460, %v4502
    %4504 = vdwg.mxu0
    %4505 = vmatprep.subr.bf16.mxu0 %v3966
    %4506 = vmatpush1.bf16.msra.mxu0 %v3965
    %4507 = vmatprep.subr.bf16.mxu0 %v3963
    %4508 = vmatpush1.bf16.msra.mxu0 %v3962
    %4509 = vmatprep.subr.bf16.mxu0 %v3960
    %4510 = vmatpush1.bf16.msra.mxu0 %v3959
    %4511 = vmatprep.subr.bf16.mxu0 %v3957
    %4512 = vmatpush1.bf16.msra.mxu0 %v3956
    %4513 = vmatprep.subr.bf16.mxu0 %v3954
    %4514 = vmatpush1.bf16.msra.mxu0 %v3953
    %4515 = vmatprep.subr.bf16.mxu0 %v3951
    %4516 = vmatpush1.bf16.msra.mxu0 %v3950
    %4517 = vmatprep.subr.bf16.mxu0 %v3948
    %4518 = vmatpush1.bf16.msra.mxu0 %v3947
    %4519 = vmatprep.subr.bf16.mxu0 %v3945
    %4520 = vmatpush1.bf16.msra.mxu0 %v3944
    %4521 = vmatprep.subr.bf16.mxu0 %v3990
    %4522 = vmatpush2.bf16.msra.mxu0 %v3989
    %4523 = vmatprep.subr.bf16.mxu0 %v3987
    %4524 = vmatpush2.bf16.msra.mxu0 %v3986
    %4525 = vmatprep.subr.bf16.mxu0 %v3984
    %4526 = vmatpush2.bf16.msra.mxu0 %v3983
    %4527 = vmatprep.subr.bf16.mxu0 %v3981
    %4528 = vmatpush2.bf16.msra.mxu0 %v3980
    %4529 = vmatprep.subr.bf16.mxu0 %v3978
    %4530 = vmatpush2.bf16.msra.mxu0 %v3977
    %4531 = vmatprep.subr.bf16.mxu0 %v3975
    %4532 = vmatpush2.bf16.msra.mxu0 %v3974
    %4533 = vmatprep.subr.bf16.mxu0 %v3972
    %4534 = vmatpush2.bf16.msra.mxu0 %v3971
    %4535 = vmatprep.subr.bf16.mxu0 %v3969
    %4536 = vmatpush2.bf16.msra.mxu0 %v3968
    %4537 = vmatprep.mubr.bf16.mxu0 %v2819
    %4538 = vmatmul.mubr.bf16.gmra.mxu0 %v2818
    %v4539 = vpop.f32.mrf.mxu0
    %v4540 = vadd.f32 %v4497, %v4539
    %v4541 = vpop.f32.mrf.mxu0
    %v4542 = vadd.f32 %v4499, %v4541
    %v4543 = vpop.f32.mrf.mxu0
    %v4544 = vadd.f32 %v4501, %v4543
    %v4545 = vpop.f32.mrf.mxu0
    %v4546 = vadd.f32 %v4503, %v4545
    %4547 = vdwg.mxu0
    %4548 = vmatprep.subr.bf16.mxu0 %v4014
    %4549 = vmatpush1.bf16.msra.mxu0 %v4013
    %4550 = vmatprep.subr.bf16.mxu0 %v4011
    %4551 = vmatpush1.bf16.msra.mxu0 %v4010
    %4552 = vmatprep.subr.bf16.mxu0 %v4008
    %4553 = vmatpush1.bf16.msra.mxu0 %v4007
    %4554 = vmatprep.subr.bf16.mxu0 %v4005
    %4555 = vmatpush1.bf16.msra.mxu0 %v4004
    %4556 = vmatprep.subr.bf16.mxu0 %v4002
    %4557 = vmatpush1.bf16.msra.mxu0 %v4001
    %4558 = vmatprep.subr.bf16.mxu0 %v3999
    %4559 = vmatpush1.bf16.msra.mxu0 %v3998
    %4560 = vmatprep.subr.bf16.mxu0 %v3996
    %4561 = vmatpush1.bf16.msra.mxu0 %v3995
    %4562 = vmatprep.subr.bf16.mxu0 %v3993
    %4563 = vmatpush1.bf16.msra.mxu0 %v3992
    %4564 = vmatprep.subr.bf16.mxu0 %v4038
    %4565 = vmatpush2.bf16.msra.mxu0 %v4037
    %4566 = vmatprep.subr.bf16.mxu0 %v4035
    %4567 = vmatpush2.bf16.msra.mxu0 %v4034
    %4568 = vmatprep.subr.bf16.mxu0 %v4032
    %4569 = vmatpush2.bf16.msra.mxu0 %v4031
    %4570 = vmatprep.subr.bf16.mxu0 %v4029
    %4571 = vmatpush2.bf16.msra.mxu0 %v4028
    %4572 = vmatprep.subr.bf16.mxu0 %v4026
    %4573 = vmatpush2.bf16.msra.mxu0 %v4025
    %4574 = vmatprep.subr.bf16.mxu0 %v4023
    %4575 = vmatpush2.bf16.msra.mxu0 %v4022
    %4576 = vmatprep.subr.bf16.mxu0 %v4020
    %4577 = vmatpush2.bf16.msra.mxu0 %v4019
    %4578 = vmatprep.subr.bf16.mxu0 %v4017
    %4579 = vmatpush2.bf16.msra.mxu0 %v4016
    %4580 = vmatprep.mubr.bf16.mxu0 %v2821
    %4581 = vmatmul.mubr.bf16.gmra.mxu0 %v2820
    %v4582 = vpop.f32.mrf.mxu0
    %v4583 = vadd.f32 %v4540, %v4582
    %v4584 = vpop.f32.mrf.mxu0
    %v4585 = vadd.f32 %v4542, %v4584
    %v4586 = vpop.f32.mrf.mxu0
    %v4587 = vadd.f32 %v4544, %v4586
    %v4588 = vpop.f32.mrf.mxu0
    %v4589 = vadd.f32 %v4546, %v4588
    %4590 = vdwg.mxu0
    %4591 = vmatprep.subr.bf16.mxu0 %v4062
    %4592 = vmatpush1.bf16.msra.mxu0 %v4061
    %4593 = vmatprep.subr.bf16.mxu0 %v4059
    %4594 = vmatpush1.bf16.msra.mxu0 %v4058
    %4595 = vmatprep.subr.bf16.mxu0 %v4056
    %4596 = vmatpush1.bf16.msra.mxu0 %v4055
    %4597 = vmatprep.subr.bf16.mxu0 %v4053
    %4598 = vmatpush1.bf16.msra.mxu0 %v4052
    %4599 = vmatprep.subr.bf16.mxu0 %v4050
    %4600 = vmatpush1.bf16.msra.mxu0 %v4049
    %4601 = vmatprep.subr.bf16.mxu0 %v4047
    %4602 = vmatpush1.bf16.msra.mxu0 %v4046
    %4603 = vmatprep.subr.bf16.mxu0 %v4044
    %4604 = vmatpush1.bf16.msra.mxu0 %v4043
    %4605 = vmatprep.subr.bf16.mxu0 %v4041
    %4606 = vmatpush1.bf16.msra.mxu0 %v4040
    %4607 = vmatprep.subr.bf16.mxu0 %v4086
    %4608 = vmatpush2.bf16.msra.mxu0 %v4085
    %4609 = vmatprep.subr.bf16.mxu0 %v4083
    %4610 = vmatpush2.bf16.msra.mxu0 %v4082
    %4611 = vmatprep.subr.bf16.mxu0 %v4080
    %4612 = vmatpush2.bf16.msra.mxu0 %v4079
    %4613 = vmatprep.subr.bf16.mxu0 %v4077
    %4614 = vmatpush2.bf16.msra.mxu0 %v4076
    %4615 = vmatprep.subr.bf16.mxu0 %v4074
    %4616 = vmatpush2.bf16.msra.mxu0 %v4073
    %4617 = vmatprep.subr.bf16.mxu0 %v4071
    %4618 = vmatpush2.bf16.msra.mxu0 %v4070
    %4619 = vmatprep.subr.bf16.mxu0 %v4068
    %4620 = vmatpush2.bf16.msra.mxu0 %v4067
    %4621 = vmatprep.subr.bf16.mxu0 %v4065
    %4622 = vmatpush2.bf16.msra.mxu0 %v4064
    %4623 = vmatprep.mubr.bf16.mxu0 %v2823
    %4624 = vmatmul.mubr.bf16.gmra.mxu0 %v2822
    %v4625 = vpop.f32.mrf.mxu0
    %v4626 = vadd.f32 %v4583, %v4625
    %v4627 = vpop.f32.mrf.mxu0
    %v4628 = vadd.f32 %v4585, %v4627
    %v4629 = vpop.f32.mrf.mxu0
    %v4630 = vadd.f32 %v4587, %v4629
    %v4631 = vpop.f32.mrf.mxu0
    %v4632 = vadd.f32 %v4589, %v4631
    %4633 = vdwg.mxu0
    %4634 = vmatprep.subr.bf16.mxu0 0
    %4635 = vmatpush1.bf16.msra.mxu0 %v3823
    %4636 = vmatprep.subr.bf16.mxu0 0
    %4637 = vmatpush1.bf16.msra.mxu0 %v3820
    %4638 = vmatprep.subr.bf16.mxu0 0
    %4639 = vmatpush1.bf16.msra.mxu0 %v3817
    %4640 = vmatprep.subr.bf16.mxu0 0
    %4641 = vmatpush1.bf16.msra.mxu0 %v3814
    %4642 = vmatprep.subr.bf16.mxu0 0
    %4643 = vmatpush1.bf16.msra.mxu0 %v3811
    %4644 = vmatprep.subr.bf16.mxu0 0
    %4645 = vmatpush1.bf16.msra.mxu0 %v3808
    %4646 = vmatprep.subr.bf16.mxu0 0
    %4647 = vmatpush1.bf16.msra.mxu0 %v3805
    %4648 = vmatprep.subr.bf16.mxu0 0
    %4649 = vmatpush1.bf16.msra.mxu0 %v3802
    %4650 = vmatprep.subr.bf16.mxu0 0
    %4651 = vmatpush2.bf16.msra.mxu0 %v3847
    %4652 = vmatprep.subr.bf16.mxu0 0
    %4653 = vmatpush2.bf16.msra.mxu0 %v3844
    %4654 = vmatprep.subr.bf16.mxu0 0
    %4655 = vmatpush2.bf16.msra.mxu0 %v3841
    %4656 = vmatprep.subr.bf16.mxu0 0
    %4657 = vmatpush2.bf16.msra.mxu0 %v3838
    %4658 = vmatprep.subr.bf16.mxu0 0
    %4659 = vmatpush2.bf16.msra.mxu0 %v3835
    %4660 = vmatprep.subr.bf16.mxu0 0
    %4661 = vmatpush2.bf16.msra.mxu0 %v3832
    %4662 = vmatprep.subr.bf16.mxu0 0
    %4663 = vmatpush2.bf16.msra.mxu0 %v3829
    %4664 = vmatprep.subr.bf16.mxu0 0
    %4665 = vmatpush2.bf16.msra.mxu0 %v3826
    %4666 = vmatprep.mubr.bf16.mxu0 %v2813
    %4667 = vmatmul.mubr.bf16.gmra.mxu0 %v2812
    %v4668 = vpop.f32.mrf.mxu0
    %v4669 = vadd.f32 %v2836, %v4668
    %v4670 = vpop.f32.mrf.mxu0
    %v4671 = vpop.f32.mrf.mxu0
    %v4672 = vadd.f32 %v2836, %v4671
    %v4673 = vpop.f32.mrf.mxu0
    %4674 = vdwg.mxu0
    %4675 = vmatprep.subr.bf16.mxu0 0
    %4676 = vmatpush1.bf16.msra.mxu0 %v3871
    %4677 = vmatprep.subr.bf16.mxu0 0
    %4678 = vmatpush1.bf16.msra.mxu0 %v3868
    %4679 = vmatprep.subr.bf16.mxu0 0
    %4680 = vmatpush1.bf16.msra.mxu0 %v3865
    %4681 = vmatprep.subr.bf16.mxu0 0
    %4682 = vmatpush1.bf16.msra.mxu0 %v3862
    %4683 = vmatprep.subr.bf16.mxu0 0
    %4684 = vmatpush1.bf16.msra.mxu0 %v3859
    %4685 = vmatprep.subr.bf16.mxu0 0
    %4686 = vmatpush1.bf16.msra.mxu0 %v3856
    %4687 = vmatprep.subr.bf16.mxu0 0
    %4688 = vmatpush1.bf16.msra.mxu0 %v3853
    %4689 = vmatprep.subr.bf16.mxu0 0
    %4690 = vmatpush1.bf16.msra.mxu0 %v3850
    %4691 = vmatprep.subr.bf16.mxu0 0
    %4692 = vmatpush2.bf16.msra.mxu0 %v3895
    %4693 = vmatprep.subr.bf16.mxu0 0
    %4694 = vmatpush2.bf16.msra.mxu0 %v3892
    %4695 = vmatprep.subr.bf16.mxu0 0
    %4696 = vmatpush2.bf16.msra.mxu0 %v3889
    %4697 = vmatprep.subr.bf16.mxu0 0
    %4698 = vmatpush2.bf16.msra.mxu0 %v3886
    %4699 = vmatprep.subr.bf16.mxu0 0
    %4700 = vmatpush2.bf16.msra.mxu0 %v3883
    %4701 = vmatprep.subr.bf16.mxu0 0
    %4702 = vmatpush2.bf16.msra.mxu0 %v3880
    %4703 = vmatprep.subr.bf16.mxu0 0
    %4704 = vmatpush2.bf16.msra.mxu0 %v3877
    %4705 = vmatprep.subr.bf16.mxu0 0
    %4706 = vmatpush2.bf16.msra.mxu0 %v3874
    %4707 = vmatprep.mubr.bf16.mxu0 %v2815
    %4708 = vmatmul.mubr.bf16.gmra.mxu0 %v2814
    %v4709 = vpop.f32.mrf.mxu0
    %v4710 = vadd.f32 %v4669, %v4709
    %v4711 = vpop.f32.mrf.mxu0
    %v4712 = vpop.f32.mrf.mxu0
    %v4713 = vadd.f32 %v4672, %v4712
    %v4714 = vpop.f32.mrf.mxu0
    %4715 = vdwg.mxu0
    %4716 = vmatprep.subr.bf16.mxu0 0
    %4717 = vmatpush1.bf16.msra.mxu0 %v3919
    %4718 = vmatprep.subr.bf16.mxu0 0
    %4719 = vmatpush1.bf16.msra.mxu0 %v3916
    %4720 = vmatprep.subr.bf16.mxu0 0
    %4721 = vmatpush1.bf16.msra.mxu0 %v3913
    %4722 = vmatprep.subr.bf16.mxu0 0
    %4723 = vmatpush1.bf16.msra.mxu0 %v3910
    %4724 = vmatprep.subr.bf16.mxu0 0
    %4725 = vmatpush1.bf16.msra.mxu0 %v3907
    %4726 = vmatprep.subr.bf16.mxu0 0
    %4727 = vmatpush1.bf16.msra.mxu0 %v3904
    %4728 = vmatprep.subr.bf16.mxu0 0
    %4729 = vmatpush1.bf16.msra.mxu0 %v3901
    %4730 = vmatprep.subr.bf16.mxu0 0
    %4731 = vmatpush1.bf16.msra.mxu0 %v3898
    %4732 = vmatprep.subr.bf16.mxu0 0
    %4733 = vmatpush2.bf16.msra.mxu0 %v3943
    %4734 = vmatprep.subr.bf16.mxu0 0
    %4735 = vmatpush2.bf16.msra.mxu0 %v3940
    %4736 = vmatprep.subr.bf16.mxu0 0
    %4737 = vmatpush2.bf16.msra.mxu0 %v3937
    %4738 = vmatprep.subr.bf16.mxu0 0
    %4739 = vmatpush2.bf16.msra.mxu0 %v3934
    %4740 = vmatprep.subr.bf16.mxu0 0
    %4741 = vmatpush2.bf16.msra.mxu0 %v3931
    %4742 = vmatprep.subr.bf16.mxu0 0
    %4743 = vmatpush2.bf16.msra.mxu0 %v3928
    %4744 = vmatprep.subr.bf16.mxu0 0
    %4745 = vmatpush2.bf16.msra.mxu0 %v3925
    %4746 = vmatprep.subr.bf16.mxu0 0
    %4747 = vmatpush2.bf16.msra.mxu0 %v3922
    %4748 = vmatprep.mubr.bf16.mxu0 %v2817
    %4749 = vmatmul.mubr.bf16.gmra.mxu0 %v2816
    %v4750 = vpop.f32.mrf.mxu0
    %v4751 = vadd.f32 %v4710, %v4750
    %v4752 = vpop.f32.mrf.mxu0
    %v4753 = vpop.f32.mrf.mxu0
    %v4754 = vadd.f32 %v4713, %v4753
    %v4755 = vpop.f32.mrf.mxu0
    %4756 = vdwg.mxu0
    %4757 = vmatprep.subr.bf16.mxu0 0
    %4758 = vmatpush1.bf16.msra.mxu0 %v3967
    %4759 = vmatprep.subr.bf16.mxu0 0
    %4760 = vmatpush1.bf16.msra.mxu0 %v3964
    %4761 = vmatprep.subr.bf16.mxu0 0
    %4762 = vmatpush1.bf16.msra.mxu0 %v3961
    %4763 = vmatprep.subr.bf16.mxu0 0
    %4764 = vmatpush1.bf16.msra.mxu0 %v3958
    %4765 = vmatprep.subr.bf16.mxu0 0
    %4766 = vmatpush1.bf16.msra.mxu0 %v3955
    %4767 = vmatprep.subr.bf16.mxu0 0
    %4768 = vmatpush1.bf16.msra.mxu0 %v3952
    %4769 = vmatprep.subr.bf16.mxu0 0
    %4770 = vmatpush1.bf16.msra.mxu0 %v3949
    %4771 = vmatprep.subr.bf16.mxu0 0
    %4772 = vmatpush1.bf16.msra.mxu0 %v3946
    %4773 = vmatprep.subr.bf16.mxu0 0
    %4774 = vmatpush2.bf16.msra.mxu0 %v3991
    %4775 = vmatprep.subr.bf16.mxu0 0
    %4776 = vmatpush2.bf16.msra.mxu0 %v3988
    %4777 = vmatprep.subr.bf16.mxu0 0
    %4778 = vmatpush2.bf16.msra.mxu0 %v3985
    %4779 = vmatprep.subr.bf16.mxu0 0
    %4780 = vmatpush2.bf16.msra.mxu0 %v3982
    %4781 = vmatprep.subr.bf16.mxu0 0
    %4782 = vmatpush2.bf16.msra.mxu0 %v3979
    %4783 = vmatprep.subr.bf16.mxu0 0
    %4784 = vmatpush2.bf16.msra.mxu0 %v3976
    %4785 = vmatprep.subr.bf16.mxu0 0
    %4786 = vmatpush2.bf16.msra.mxu0 %v3973
    %4787 = vmatprep.subr.bf16.mxu0 0
    %4788 = vmatpush2.bf16.msra.mxu0 %v3970
    %4789 = vmatprep.mubr.bf16.mxu0 %v2819
    %4790 = vmatmul.mubr.bf16.gmra.mxu0 %v2818
    %v4791 = vpop.f32.mrf.mxu0
    %v4792 = vadd.f32 %v4751, %v4791
    %v4793 = vpop.f32.mrf.mxu0
    %v4794 = vpop.f32.mrf.mxu0
    %v4795 = vadd.f32 %v4754, %v4794
    %v4796 = vpop.f32.mrf.mxu0
    %4797 = vdwg.mxu0
    %4798 = vmatprep.subr.bf16.mxu0 0
    %4799 = vmatpush1.bf16.msra.mxu0 %v4015
    %4800 = vmatprep.subr.bf16.mxu0 0
    %4801 = vmatpush1.bf16.msra.mxu0 %v4012
    %4802 = vmatprep.subr.bf16.mxu0 0
    %4803 = vmatpush1.bf16.msra.mxu0 %v4009
    %4804 = vmatprep.subr.bf16.mxu0 0
    %4805 = vmatpush1.bf16.msra.mxu0 %v4006
    %4806 = vmatprep.subr.bf16.mxu0 0
    %4807 = vmatpush1.bf16.msra.mxu0 %v4003
    %4808 = vmatprep.subr.bf16.mxu0 0
    %4809 = vmatpush1.bf16.msra.mxu0 %v4000
    %4810 = vmatprep.subr.bf16.mxu0 0
    %4811 = vmatpush1.bf16.msra.mxu0 %v3997
    %4812 = vmatprep.subr.bf16.mxu0 0
    %4813 = vmatpush1.bf16.msra.mxu0 %v3994
    %4814 = vmatprep.subr.bf16.mxu0 0
    %4815 = vmatpush2.bf16.msra.mxu0 %v4039
    %4816 = vmatprep.subr.bf16.mxu0 0
    %4817 = vmatpush2.bf16.msra.mxu0 %v4036
    %4818 = vmatprep.subr.bf16.mxu0 0
    %4819 = vmatpush2.bf16.msra.mxu0 %v4033
    %4820 = vmatprep.subr.bf16.mxu0 0
    %4821 = vmatpush2.bf16.msra.mxu0 %v4030
    %4822 = vmatprep.subr.bf16.mxu0 0
    %4823 = vmatpush2.bf16.msra.mxu0 %v4027
    %4824 = vmatprep.subr.bf16.mxu0 0
    %4825 = vmatpush2.bf16.msra.mxu0 %v4024
    %4826 = vmatprep.subr.bf16.mxu0 0
    %4827 = vmatpush2.bf16.msra.mxu0 %v4021
    %4828 = vmatprep.subr.bf16.mxu0 0
    %4829 = vmatpush2.bf16.msra.mxu0 %v4018
    %4830 = vmatprep.mubr.bf16.mxu0 %v2821
    %4831 = vmatmul.mubr.bf16.gmra.mxu0 %v2820
    %v4832 = vpop.f32.mrf.mxu0
    %v4833 = vadd.f32 %v4792, %v4832
    %v4834 = vpop.f32.mrf.mxu0
    %v4835 = vpop.f32.mrf.mxu0
    %v4836 = vadd.f32 %v4795, %v4835
    %v4837 = vpop.f32.mrf.mxu0
    %4838 = vdwg.mxu0
    %4839 = vmatprep.subr.bf16.mxu0 0
    %4840 = vmatpush1.bf16.msra.mxu0 %v4063
    %4841 = vmatprep.subr.bf16.mxu0 0
    %4842 = vmatpush1.bf16.msra.mxu0 %v4060
    %4843 = vmatprep.subr.bf16.mxu0 0
    %4844 = vmatpush1.bf16.msra.mxu0 %v4057
    %4845 = vmatprep.subr.bf16.mxu0 0
    %4846 = vmatpush1.bf16.msra.mxu0 %v4054
    %4847 = vmatprep.subr.bf16.mxu0 0
    %4848 = vmatpush1.bf16.msra.mxu0 %v4051
    %4849 = vmatprep.subr.bf16.mxu0 0
    %4850 = vmatpush1.bf16.msra.mxu0 %v4048
    %4851 = vmatprep.subr.bf16.mxu0 0
    %4852 = vmatpush1.bf16.msra.mxu0 %v4045
    %4853 = vmatprep.subr.bf16.mxu0 0
    %4854 = vmatpush1.bf16.msra.mxu0 %v4042
    %4855 = vmatprep.subr.bf16.mxu0 0
    %4856 = vmatpush2.bf16.msra.mxu0 %v4087
    %4857 = vmatprep.subr.bf16.mxu0 0
    %4858 = vmatpush2.bf16.msra.mxu0 %v4084
    %4859 = vmatprep.subr.bf16.mxu0 0
    %4860 = vmatpush2.bf16.msra.mxu0 %v4081
    %4861 = vmatprep.subr.bf16.mxu0 0
    %4862 = vmatpush2.bf16.msra.mxu0 %v4078
    %4863 = vmatprep.subr.bf16.mxu0 0
    %4864 = vmatpush2.bf16.msra.mxu0 %v4075
    %4865 = vmatprep.subr.bf16.mxu0 0
    %4866 = vmatpush2.bf16.msra.mxu0 %v4072
    %4867 = vmatprep.subr.bf16.mxu0 0
    %4868 = vmatpush2.bf16.msra.mxu0 %v4069
    %4869 = vmatprep.subr.bf16.mxu0 0
    %4870 = vmatpush2.bf16.msra.mxu0 %v4066
    %4871 = vmatprep.mubr.bf16.mxu0 %v2823
    %4872 = vmatmul.mubr.bf16.gmra.mxu0 %v2822
    %v4873 = vpop.f32.mrf.mxu0
    %v4874 = vadd.f32 %v4833, %v4873
    %v4875 = vpop.f32.mrf.mxu0
    %v4876 = vpop.f32.mrf.mxu0
    %v4877 = vadd.f32 %v4836, %v4876
    %v4878 = vpop.f32.mrf.mxu0
    %4879 = vdwg.mxu0
    %4880 = vst [vmem:[#allocation11] sm:$0xff] %v4626
    %4881 = vst [vmem:[#allocation11 + $0x8] sm:$0xff] %v4628
    %4882 = vst [vmem:[#allocation11 + $0x10] sm:$0xff] %v4874
    %4883 = vst [vmem:[#allocation11 + $0x18] sm:$0xff] %v4630
    %4884 = vst [vmem:[#allocation11 + $0x20] sm:$0xff] %v4632
    %4885 = vst [vmem:[#allocation11 + $0x28] sm:$0xff] %v4877
    // Predicated region
    $region42: #{tpu_custom_call.1} parent=1 // pred_check
      _
    $region43: #{tpu_custom_call.1} parent=1 // pred_check_branch
      %4887 = sbr.rel (0) target = $region45
    $region44: #{tpu_custom_call.1} parent=1 // pred_region
      %s4889 = ssub.s32 768, 768
      %4890 = vsyncadd [#allocation4], %s4889
      %s4891 = sshll.u32 [#allocation11], 4
      %s4892 = int_to_ptr.vmem [resolvable:$true] %s4891
      %4897 = dma.vmem_to_hbm [thread:$0]  %s4892, 768, %s5, [#allocation4], 384, 384, 24
    $region45: #{tpu_custom_call.1} parent=1 // pred_fallthru
      _
    // Predicated region
    $region46: #{tpu_custom_call.1} parent=1 // pred_check
      _
    $region47: #{tpu_custom_call.1} parent=1 // pred_check_branch
      %4899 = sbr.rel (0) target = $region49
    $region48: #{tpu_custom_call.1} parent=1 // pred_region
      %4900 = dma.done [#allocation4], 768
    $region49: #{tpu_custom_call.1} parent=1 // pred_fallthru
      _
    %4901 = vsyncpa [#allocation3], 1
    %4902 = vsyncpa [#allocation6], 1
    %4903 = vsyncpa [#allocation9], 1
    %4904 = vsyncpa [#allocation4], 1

</llo_original>
